<compile_context>
chip_gen: v5e
topology: v5e:2x2
jax: 0.10.0
libtpu: 0.0.40
codegen_flags: <defaults>
</compile_context>

<pallas_src>
import functools

import jax
import jax.numpy as jnp
from jax.experimental import pallas as pl
from jax.experimental.pallas import tpu as pltpu

HIDDEN = 10          # hidden_dim
PATHS = 3            # paths_len
KS = 3               # kernel_size
PAD = 1              # dilation * (KS - 1) // 2
DIL = 1
LANE = 128
TM = 256             # row tile for the fused matmul kernel
BN_EPS = 1e-5


def _round_up(x, m):
    return ((x + m - 1) // m) * m


# ----------------------------------------------------------------------------
# Pallas kernels
# ----------------------------------------------------------------------------
def _matmul_bias_act_kernel(p_ref, w_ref, shift_ref, o_ref, *, relu, sigmoid_from):
    # bf16 operands, f32 accumulation on the MXU.
    acc = jnp.dot(p_ref[...], w_ref[...], preferred_element_type=jnp.float32)
    acc = acc + shift_ref[...]
    if relu:
        acc = jnp.maximum(acc, 0.0)
    if sigmoid_from is not None:
        # Fused sigmoid on the DCN mask columns (EUP slot, free under the MXU).
        col = jax.lax.broadcasted_iota(jnp.int32, acc.shape, 1)
        acc = jnp.where(col >= sigmoid_from, jax.nn.sigmoid(acc), acc)
    o_ref[...] = acc.astype(o_ref.dtype)


def matmul_bias_act(patches, weight, shift, *, relu, sigmoid_from=None):
    """out = act(P @ W + shift), lane-dense, bf16 operands, f32 epilogue."""
    M, K = patches.shape
    Kw, Cout = weight.shape
    assert K == Kw
    K_pad = _round_up(K, LANE)
    C_pad = _round_up(Cout, LANE)
    tm = TM if M > TM else _round_up(M, 8)
    M_pad = _round_up(M, tm)

    patches = jnp.pad(patches, ((0, M_pad - M), (0, K_pad - K))).astype(jnp.bfloat16)
    weight = jnp.pad(weight, ((0, K_pad - K), (0, C_pad - Cout))).astype(jnp.bfloat16)
    shift = jnp.pad(shift.astype(jnp.float32), (0, C_pad - Cout)).reshape(1, C_pad)

    out = pl.pallas_call(
        functools.partial(_matmul_bias_act_kernel, relu=relu,
                          sigmoid_from=sigmoid_from),
        out_shape=jax.ShapeDtypeStruct((M_pad, C_pad), jnp.float32),
        grid=(M_pad // tm,),
        in_specs=[
            pl.BlockSpec((tm, K_pad), lambda i: (i, 0)),
            pl.BlockSpec((K_pad, C_pad), lambda i: (0, 0)),
            pl.BlockSpec((1, C_pad), lambda i: (0, 0)),
        ],
        out_specs=pl.BlockSpec((tm, C_pad), lambda i: (i, 0)),
        compiler_params=pltpu.CompilerParams(dimension_semantics=("parallel",)),
    )(patches, weight, shift)
    return out[:M, :Cout]


def _fuse_kernel(gamma_ref, x_ref, u_ref, o_ref):
    # relu(gamma * x + conv_update_out); gamma is a scalar read from SMEM.
    g = gamma_ref[0]
    o_ref[...] = jnp.maximum(g * x_ref[...] + u_ref[...], 0.0)


def fuse_residual_relu(x_flat, upd_flat, gamma):
    """Lane-dense elementwise fuse: flatten, view as (rows, 128)."""
    orig_shape = x_flat.shape
    total = x_flat.size
    x1 = x_flat.reshape(-1)
    u1 = upd_flat.reshape(-1)
    # Pick a row-block size: small data -> several small steps, big data -> 512.
    br = 8
    while br < 512 and total > 4 * (2 * br) * LANE:
        br *= 2
    chunk = br * LANE
    total_pad = _round_up(total, chunk)
    if total_pad != total:
        x1 = jnp.pad(x1, (0, total_pad - total))
        u1 = jnp.pad(u1, (0, total_pad - total))
    rows = total_pad // LANE
    out = pl.pallas_call(
        _fuse_kernel,
        out_shape=jax.ShapeDtypeStruct((rows, LANE), jnp.float32),
        grid=(rows // br,),
        in_specs=[
            pl.BlockSpec(memory_space=pltpu.MemorySpace.SMEM),
            pl.BlockSpec((br, LANE), lambda i: (i, 0)),
            pl.BlockSpec((br, LANE), lambda i: (i, 0)),
        ],
        out_specs=pl.BlockSpec((br, LANE), lambda i: (i, 0)),
        compiler_params=pltpu.CompilerParams(dimension_semantics=("parallel",)),
    )(gamma.reshape(1).astype(jnp.float32), x1.reshape(rows, LANE),
      u1.reshape(rows, LANE))
    return out.reshape(-1)[:total].reshape(orig_shape)


# ----------------------------------------------------------------------------
# Glue (layout / patch extraction / deformable bilinear sampling)
# ----------------------------------------------------------------------------
def im2col_std(x):
    """Standard 3x3, pad=1, stride=1 patches. x: [N,H,W,C] -> [N,H,W,9,C]."""
    # TODO(synk): at large H,W this 9x blowup could be removed with a tap-axis
    # grid + VMEM accumulator (P3); kept as XLA glue here for simplicity.
    N, H, W, C = x.shape
    xp = jnp.pad(x, ((0, 0), (PAD, PAD), (PAD, PAD), (0, 0)))
    taps = []
    for kh in range(KS):
        for kw in range(KS):
            taps.append(xp[:, kh:kh + H, kw:kw + W, :])
    return jnp.stack(taps, axis=3)


def deform_modulated_patches(x, offset, mask):
    """Modulated-DCN im2col. x:[N,H,W,C], offset:[N,H,W,18], mask:[N,H,W,9].

    One fused gather for all 9 taps x 4 bilinear corners; the DCN mask and the
    zero-padding validity are folded into the per-corner bilinear weights.
    """
    # TODO(synk): data-dependent bilinear gather has no clean Pallas TPU
    # equivalent; done in plain JAX glue, matmul hot path stays in Pallas.
    N, H, W, C = x.shape
    K2 = KS * KS
    base_y = jnp.array([(k // KS - PAD) * DIL for k in range(K2)], jnp.float32)
    base_x = jnp.array([(k % KS - PAD) * DIL for k in range(K2)], jnp.float32)

    off = offset.reshape(N, H, W, K2, 2)
    dy = off[..., 0]
    dx = off[..., 1]
    ii = jnp.arange(H, dtype=jnp.float32)[None, :, None, None]
    jj = jnp.arange(W, dtype=jnp.float32)[None, None, :, None]
    py = ii + base_y[None, None, None, :] + dy                  # (N,H,W,9)
    px = jj + base_x[None, None, None, :] + dx

    y0 = jnp.floor(py)
    x0 = jnp.floor(px)
    wy1 = py - y0
    wx1 = px - x0
    wy0 = 1.0 - wy1
    wx0 = 1.0 - wx1

    ys = jnp.stack([y0, y0, y0 + 1.0, y0 + 1.0], axis=-1)       # (N,H,W,9,4)
    xs = jnp.stack([x0, x0 + 1.0, x0, x0 + 1.0], axis=-1)
    wts = jnp.stack([wy0 * wx0, wy0 * wx1, wy1 * wx0, wy1 * wx1], axis=-1)
    valid = (ys >= 0) & (ys < H) & (xs >= 0) & (xs < W)
    wts = wts * valid.astype(x.dtype) * mask[..., None]         # fold mask + zero-pad

    yc = jnp.clip(ys, 0, H - 1).astype(jnp.int32)
    xc = jnp.clip(xs, 0, W - 1).astype(jnp.int32)
    idx = (yc * W + xc).reshape(N, H * W * K2 * 4, 1)
    flat = x.reshape(N, H * W, C)
    g = jnp.take_along_axis(flat, idx, axis=1)                  # single gather
    g = g.reshape(N, H, W, K2, 4, C)
    return jnp.sum(g * wts[..., None], axis=4)                  # (N,H,W,9,C)


def df_conv_bn_relu(x, p):
    """DFConv2d(with_modulated_dcn) -> InPlaceABN(activation='none') -> ReLU."""
    N, H, W, Cin = x.shape
    Cout = p["conv_w"].shape[-1]
    K2 = KS * KS
    M = N * H * W

    # 1) offset/mask conv (standard 3x3 conv + bias) with the mask sigmoid
    #    fused into the matmul epilogue.
    p_std = im2col_std(x).reshape(M, K2 * Cin)
    om = matmul_bias_act(p_std, p["off_w"].reshape(K2 * Cin, 3 * K2),
                         p["off_b"], relu=False, sigmoid_from=2 * K2)
    om = om.reshape(N, H, W, 3 * K2)
    offset = om[..., :2 * K2]
    mask = om[..., 2 * K2:]            # already sigmoided in-kernel

    # 2) modulated deformable sampling (glue) + fused conv/BN/ReLU (Pallas).
    p_def = deform_modulated_patches(x, offset, mask).reshape(M, K2 * Cin)
    w_fold = p["conv_w"].reshape(K2 * Cin, Cout) * p["bn_scale"][None, :]
    out = matmul_bias_act(p_def, w_fold, p["bn_shift"], relu=True)
    return out.reshape(N, H, W, Cout)


def conv_update_forward(x_nchw, message_list_nchw, params):
    """Matches conv_Update.forward: relu(gamma * x + conv_update(cat([x]+msgs)))."""
    x = jnp.transpose(x_nchw, (0, 2, 3, 1)).astype(jnp.float32)           # NHWC
    msgs = [jnp.transpose(m, (0, 2, 3, 1)).astype(jnp.float32)
            for m in message_list_nchw]
    cat = jnp.concatenate([x] + msgs, axis=-1)                            # channel cat
    h = df_conv_bn_relu(cat, params["layer1"])
    upd = df_conv_bn_relu(h, params["layer2"])
    N, H, W, C = x.shape
    y = fuse_residual_relu(x.reshape(N * H * W, C), upd.reshape(N * H * W, C),
                           params["gamma"]).reshape(N, H, W, C)
    return jnp.transpose(y, (0, 3, 1, 2))                                 # back to NCHW


# ----------------------------------------------------------------------------
# Deterministic parameter construction (synthetic weights, module shapes)
# ----------------------------------------------------------------------------
def make_layer_params(key, cin, cout):
    k1, k2, k3, k4, k5, k6 = jax.random.split(key, 6)
    off_w = 0.05 * jax.random.normal(k1, (KS, KS, cin, 3 * KS * KS), jnp.float32)
    off_b = jnp.zeros((3 * KS * KS,), jnp.float32)              # init constant 0
    conv_w = 0.1 * jax.random.normal(k2, (KS, KS, cin, cout), jnp.float32)
    bn_w = 1.0 + 0.1 * jax.random.normal(k3, (cout,), jnp.float32)
    bn_b = 0.1 * jax.random.normal(k4, (cout,), jnp.float32)
    bn_mean = 0.1 * jax.random.normal(k5, (cout,), jnp.float32)
    bn_var = 1.0 + 0.1 * jnp.abs(jax.random.normal(k6, (cout,), jnp.float32))
    scale = bn_w / jnp.sqrt(bn_var + BN_EPS)                    # inference-mode BN fold
    shift = bn_b - bn_mean * scale
    return {"off_w": off_w, "off_b": off_b, "conv_w": conv_w,
            "bn_scale": scale, "bn_shift": shift}


def make_params(key):
    k1, k2 = jax.random.split(key, 2)
    cin1 = (PATHS + 1) * HIDDEN
    return {
        "layer1": make_layer_params(k1, cin1, 2 * HIDDEN),
        "layer2": make_layer_params(k2, 2 * HIDDEN, HIDDEN),
        "gamma": jnp.zeros((1,), jnp.float32),                  # nn.Parameter(zeros(1))
    }


if __name__ == "__main__":
    key = jax.random.PRNGKey(0)
    kx, km, kp = jax.random.split(key, 3)
    B, H, W = 2, 16, 16
    x = jax.random.normal(kx, (B, HIDDEN, H, W), jnp.float32)             # NCHW
    msg_keys = jax.random.split(km, PATHS)
    message_list = [jax.random.normal(k, (B, HIDDEN, H, W), jnp.float32)
                    for k in msg_keys]
    params = make_params(kp)

    out = jax.jit(conv_update_forward)(x, message_list, params)
    out = jax.block_until_ready(out)

    assert out.shape == (B, HIDDEN, H, W), out.shape
    assert bool(jnp.all(jnp.isfinite(out)))
    assert bool(jnp.all(out >= 0.0))  # final ReLU
    print("KERNEL_OK")
</pallas_src>

<mosaic_0001>
module attributes {stable_mosaic.version = 11 : i64} {
  func.func @_matmul_bias_act_kernel(%arg0: i32, %arg1: memref<256x384xbf16, #tpu.memory_space<vmem>>, %arg2: memref<384x128xbf16, #tpu.memory_space<vmem>>, %arg3: memref<1x128xf32, #tpu.memory_space<vmem>>, %arg4: memref<256x128xf32, #tpu.memory_space<vmem>>) attributes {dimension_semantics = [#tpu.dimension_semantics<parallel>], iteration_bounds = array<i64: 2>, scalar_prefetch = 0 : i64, scratch_operands = 0 : i64, tpu.core_type = #tpu.core_type<tc>, window_params = [{transform_indices = @transform_0, window_bounds = array<i64: 256, 384>}, {pipeline_mode = #tpu.pipeline_mode<synchronous>, transform_indices = @transform_1, window_bounds = array<i64: 384, 128>}, {pipeline_mode = #tpu.pipeline_mode<synchronous>, transform_indices = @transform_2, window_bounds = array<i64: 1, 128>}, {transform_indices = @transform_3, window_bounds = array<i64: 256, 128>}]} {
    %c0 = arith.constant 0 : index
    %c0_0 = arith.constant 0 : index
    %0 = vector.load %arg1[%c0, %c0_0] : memref<256x384xbf16, #tpu.memory_space<vmem>>, vector<256x384xbf16>
    %c0_1 = arith.constant 0 : index
    %c0_2 = arith.constant 0 : index
    %1 = vector.load %arg2[%c0_1, %c0_2] : memref<384x128xbf16, #tpu.memory_space<vmem>>, vector<384x128xbf16>
    %cst = arith.constant dense<0.000000e+00> : vector<256x128xf32>
    %2 = tpu.matmul %0, %1, %cst {dimension_numbers = #tpu.dot_dimension_numbers<[1], [0], [0], [1], [0, 0, 1, 1], [], []>} : vector<256x384xbf16>, vector<384x128xbf16>, vector<256x128xf32> -> vector<256x128xf32>
    %c0_3 = arith.constant 0 : index
    %c0_4 = arith.constant 0 : index
    %3 = vector.load %arg3[%c0_3, %c0_4] : memref<1x128xf32, #tpu.memory_space<vmem>>, vector<1x128xf32>
    %4 = vector.broadcast %3 : vector<1x128xf32> to vector<256x128xf32>
    %5 = arith.addf %2, %4 : vector<256x128xf32>
    %6 = tpu.iota {dimensions = array<i32: 1>} : vector<256x128xi32>
    %c18_i32 = arith.constant 18 : i32
    %7 = vector.broadcast %c18_i32 : i32 to vector<256x128xi32>
    %8 = arith.cmpi sge, %6, %7 : vector<256x128xi32>
    %9 = arith.negf %5 : vector<256x128xf32>
    %10 = math.exp %9 : vector<256x128xf32>
    %cst_5 = arith.constant 1.000000e+00 : f32
    %11 = vector.broadcast %cst_5 : f32 to vector<256x128xf32>
    %12 = arith.addf %11, %10 : vector<256x128xf32>
    %13 = arith.divf %11, %12 : vector<256x128xf32>
    %14 = arith.select %8, %13, %5 : vector<256x128xi1>, vector<256x128xf32>
    %c0_6 = arith.constant 0 : index
    %c0_7 = arith.constant 0 : index
    %15 = vector.load %arg4[%c0_6, %c0_7] : memref<256x128xf32, #tpu.memory_space<vmem>>, vector<256x128xf32>
    tpu.vector_store %arg4[%c0_6, %c0_7], %14 {strides = array<i32>} : memref<256x128xf32, #tpu.memory_space<vmem>>, vector<256x128xf32>,
    return
  }
  func.func @transform_0(%arg0: i32) -> (i32, i32) {
    %c0_i32 = arith.constant 0 : i32
    %c0_i32_0 = arith.constant 0 : i32
    return %arg0, %c0_i32 : i32, i32
  }
  func.func @transform_1(%arg0: i32) -> (i32, i32) {
    %c0_i32 = arith.constant 0 : i32
    %c0_i32_0 = arith.constant 0 : i32
    %c0_i32_1 = arith.constant 0 : i32
    return %c0_i32, %c0_i32_0 : i32, i32
  }
  func.func @transform_2(%arg0: i32) -> (i32, i32) {
    %c0_i32 = arith.constant 0 : i32
    %c0_i32_0 = arith.constant 0 : i32
    %c0_i32_1 = arith.constant 0 : i32
    return %c0_i32, %c0_i32_0 : i32, i32
  }
  func.func @transform_3(%arg0: i32) -> (i32, i32) {
    %c0_i32 = arith.constant 0 : i32
    %c0_i32_0 = arith.constant 0 : i32
    return %arg0, %c0_i32 : i32, i32
  }
}

module attributes {stable_mosaic.version = 11 : i64} {
  func.func @_matmul_bias_act_kernel(%arg0: i32, %arg1: memref<256x384xbf16, #tpu.memory_space<vmem>>, %arg2: memref<384x128xbf16, #tpu.memory_space<vmem>>, %arg3: memref<1x128xf32, #tpu.memory_space<vmem>>, %arg4: memref<256x128xf32, #tpu.memory_space<vmem>>) attributes {dimension_semantics = [#tpu.dimension_semantics<parallel>], iteration_bounds = array<i64: 2>, scalar_prefetch = 0 : i64, scratch_operands = 0 : i64, tpu.core_type = #tpu.core_type<tc>, window_params = [{transform_indices = @transform_0, window_bounds = array<i64: 256, 384>}, {pipeline_mode = #tpu.pipeline_mode<synchronous>, transform_indices = @transform_1, window_bounds = array<i64: 384, 128>}, {pipeline_mode = #tpu.pipeline_mode<synchronous>, transform_indices = @transform_2, window_bounds = array<i64: 1, 128>}, {transform_indices = @transform_3, window_bounds = array<i64: 256, 128>}]} {
    %c0 = arith.constant 0 : index
    %c0_0 = arith.constant 0 : index
    %0 = vector.load %arg1[%c0, %c0_0] : memref<256x384xbf16, #tpu.memory_space<vmem>>, vector<256x384xbf16>
    %c0_1 = arith.constant 0 : index
    %c0_2 = arith.constant 0 : index
    %1 = vector.load %arg2[%c0_1, %c0_2] : memref<384x128xbf16, #tpu.memory_space<vmem>>, vector<384x128xbf16>
    %cst = arith.constant dense<0.000000e+00> : vector<256x128xf32>
    %2 = tpu.matmul %0, %1, %cst {dimension_numbers = #tpu.dot_dimension_numbers<[1], [0], [0], [1], [0, 0, 1, 1], [], []>} : vector<256x384xbf16>, vector<384x128xbf16>, vector<256x128xf32> -> vector<256x128xf32>
    %c0_3 = arith.constant 0 : index
    %c0_4 = arith.constant 0 : index
    %3 = vector.load %arg3[%c0_3, %c0_4] : memref<1x128xf32, #tpu.memory_space<vmem>>, vector<1x128xf32>
    %4 = vector.broadcast %3 : vector<1x128xf32> to vector<256x128xf32>
    %5 = arith.addf %2, %4 : vector<256x128xf32>
    %cst_5 = arith.constant 0.000000e+00 : f32
    %6 = vector.broadcast %cst_5 : f32 to vector<256x128xf32>
    %7 = arith.maximumf %5, %6 : vector<256x128xf32>
    %c0_6 = arith.constant 0 : index
    %c0_7 = arith.constant 0 : index
    %8 = vector.load %arg4[%c0_6, %c0_7] : memref<256x128xf32, #tpu.memory_space<vmem>>, vector<256x128xf32>
    tpu.vector_store %arg4[%c0_6, %c0_7], %7 {strides = array<i32>} : memref<256x128xf32, #tpu.memory_space<vmem>>, vector<256x128xf32>,
    return
  }
  func.func @transform_0(%arg0: i32) -> (i32, i32) {
    %c0_i32 = arith.constant 0 : i32
    %c0_i32_0 = arith.constant 0 : i32
    return %arg0, %c0_i32 : i32, i32
  }
  func.func @transform_1(%arg0: i32) -> (i32, i32) {
    %c0_i32 = arith.constant 0 : i32
    %c0_i32_0 = arith.constant 0 : i32
    %c0_i32_1 = arith.constant 0 : i32
    return %c0_i32, %c0_i32_0 : i32, i32
  }
  func.func @transform_2(%arg0: i32) -> (i32, i32) {
    %c0_i32 = arith.constant 0 : i32
    %c0_i32_0 = arith.constant 0 : i32
    %c0_i32_1 = arith.constant 0 : i32
    return %c0_i32, %c0_i32_0 : i32, i32
  }
  func.func @transform_3(%arg0: i32) -> (i32, i32) {
    %c0_i32 = arith.constant 0 : i32
    %c0_i32_0 = arith.constant 0 : i32
    return %arg0, %c0_i32 : i32, i32
  }
}

module attributes {stable_mosaic.version = 11 : i64} {
  func.func @_matmul_bias_act_kernel(%arg0: i32, %arg1: memref<256x256xbf16, #tpu.memory_space<vmem>>, %arg2: memref<256x128xbf16, #tpu.memory_space<vmem>>, %arg3: memref<1x128xf32, #tpu.memory_space<vmem>>, %arg4: memref<256x128xf32, #tpu.memory_space<vmem>>) attributes {dimension_semantics = [#tpu.dimension_semantics<parallel>], iteration_bounds = array<i64: 2>, scalar_prefetch = 0 : i64, scratch_operands = 0 : i64, tpu.core_type = #tpu.core_type<tc>, window_params = [{transform_indices = @transform_0, window_bounds = array<i64: 256, 256>}, {pipeline_mode = #tpu.pipeline_mode<synchronous>, transform_indices = @transform_1, window_bounds = array<i64: 256, 128>}, {pipeline_mode = #tpu.pipeline_mode<synchronous>, transform_indices = @transform_2, window_bounds = array<i64: 1, 128>}, {transform_indices = @transform_3, window_bounds = array<i64: 256, 128>}]} {
    %c0 = arith.constant 0 : index
    %c0_0 = arith.constant 0 : index
    %0 = vector.load %arg1[%c0, %c0_0] : memref<256x256xbf16, #tpu.memory_space<vmem>>, vector<256x256xbf16>
    %c0_1 = arith.constant 0 : index
    %c0_2 = arith.constant 0 : index
    %1 = vector.load %arg2[%c0_1, %c0_2] : memref<256x128xbf16, #tpu.memory_space<vmem>>, vector<256x128xbf16>
    %cst = arith.constant dense<0.000000e+00> : vector<256x128xf32>
    %2 = tpu.matmul %0, %1, %cst {dimension_numbers = #tpu.dot_dimension_numbers<[1], [0], [0], [1], [0, 0, 1, 1], [], []>} : vector<256x256xbf16>, vector<256x128xbf16>, vector<256x128xf32> -> vector<256x128xf32>
    %c0_3 = arith.constant 0 : index
    %c0_4 = arith.constant 0 : index
    %3 = vector.load %arg3[%c0_3, %c0_4] : memref<1x128xf32, #tpu.memory_space<vmem>>, vector<1x128xf32>
    %4 = vector.broadcast %3 : vector<1x128xf32> to vector<256x128xf32>
    %5 = arith.addf %2, %4 : vector<256x128xf32>
    %6 = tpu.iota {dimensions = array<i32: 1>} : vector<256x128xi32>
    %c18_i32 = arith.constant 18 : i32
    %7 = vector.broadcast %c18_i32 : i32 to vector<256x128xi32>
    %8 = arith.cmpi sge, %6, %7 : vector<256x128xi32>
    %9 = arith.negf %5 : vector<256x128xf32>
    %10 = math.exp %9 : vector<256x128xf32>
    %cst_5 = arith.constant 1.000000e+00 : f32
    %11 = vector.broadcast %cst_5 : f32 to vector<256x128xf32>
    %12 = arith.addf %11, %10 : vector<256x128xf32>
    %13 = arith.divf %11, %12 : vector<256x128xf32>
    %14 = arith.select %8, %13, %5 : vector<256x128xi1>, vector<256x128xf32>
    %c0_6 = arith.constant 0 : index
    %c0_7 = arith.constant 0 : index
    %15 = vector.load %arg4[%c0_6, %c0_7] : memref<256x128xf32, #tpu.memory_space<vmem>>, vector<256x128xf32>
    tpu.vector_store %arg4[%c0_6, %c0_7], %14 {strides = array<i32>} : memref<256x128xf32, #tpu.memory_space<vmem>>, vector<256x128xf32>,
    return
  }
  func.func @transform_0(%arg0: i32) -> (i32, i32) {
    %c0_i32 = arith.constant 0 : i32
    %c0_i32_0 = arith.constant 0 : i32
    return %arg0, %c0_i32 : i32, i32
  }
  func.func @transform_1(%arg0: i32) -> (i32, i32) {
    %c0_i32 = arith.constant 0 : i32
    %c0_i32_0 = arith.constant 0 : i32
    %c0_i32_1 = arith.constant 0 : i32
    return %c0_i32, %c0_i32_0 : i32, i32
  }
  func.func @transform_2(%arg0: i32) -> (i32, i32) {
    %c0_i32 = arith.constant 0 : i32
    %c0_i32_0 = arith.constant 0 : i32
    %c0_i32_1 = arith.constant 0 : i32
    return %c0_i32, %c0_i32_0 : i32, i32
  }
  func.func @transform_3(%arg0: i32) -> (i32, i32) {
    %c0_i32 = arith.constant 0 : i32
    %c0_i32_0 = arith.constant 0 : i32
    return %arg0, %c0_i32 : i32, i32
  }
}

module attributes {stable_mosaic.version = 11 : i64} {
  func.func @_matmul_bias_act_kernel(%arg0: i32, %arg1: memref<256x256xbf16, #tpu.memory_space<vmem>>, %arg2: memref<256x128xbf16, #tpu.memory_space<vmem>>, %arg3: memref<1x128xf32, #tpu.memory_space<vmem>>, %arg4: memref<256x128xf32, #tpu.memory_space<vmem>>) attributes {dimension_semantics = [#tpu.dimension_semantics<parallel>], iteration_bounds = array<i64: 2>, scalar_prefetch = 0 : i64, scratch_operands = 0 : i64, tpu.core_type = #tpu.core_type<tc>, window_params = [{transform_indices = @transform_0, window_bounds = array<i64: 256, 256>}, {pipeline_mode = #tpu.pipeline_mode<synchronous>, transform_indices = @transform_1, window_bounds = array<i64: 256, 128>}, {pipeline_mode = #tpu.pipeline_mode<synchronous>, transform_indices = @transform_2, window_bounds = array<i64: 1, 128>}, {transform_indices = @transform_3, window_bounds = array<i64: 256, 128>}]} {
    %c0 = arith.constant 0 : index
    %c0_0 = arith.constant 0 : index
    %0 = vector.load %arg1[%c0, %c0_0] : memref<256x256xbf16, #tpu.memory_space<vmem>>, vector<256x256xbf16>
    %c0_1 = arith.constant 0 : index
    %c0_2 = arith.constant 0 : index
    %1 = vector.load %arg2[%c0_1, %c0_2] : memref<256x128xbf16, #tpu.memory_space<vmem>>, vector<256x128xbf16>
    %cst = arith.constant dense<0.000000e+00> : vector<256x128xf32>
    %2 = tpu.matmul %0, %1, %cst {dimension_numbers = #tpu.dot_dimension_numbers<[1], [0], [0], [1], [0, 0, 1, 1], [], []>} : vector<256x256xbf16>, vector<256x128xbf16>, vector<256x128xf32> -> vector<256x128xf32>
    %c0_3 = arith.constant 0 : index
    %c0_4 = arith.constant 0 : index
    %3 = vector.load %arg3[%c0_3, %c0_4] : memref<1x128xf32, #tpu.memory_space<vmem>>, vector<1x128xf32>
    %4 = vector.broadcast %3 : vector<1x128xf32> to vector<256x128xf32>
    %5 = arith.addf %2, %4 : vector<256x128xf32>
    %cst_5 = arith.constant 0.000000e+00 : f32
    %6 = vector.broadcast %cst_5 : f32 to vector<256x128xf32>
    %7 = arith.maximumf %5, %6 : vector<256x128xf32>
    %c0_6 = arith.constant 0 : index
    %c0_7 = arith.constant 0 : index
    %8 = vector.load %arg4[%c0_6, %c0_7] : memref<256x128xf32, #tpu.memory_space<vmem>>, vector<256x128xf32>
    tpu.vector_store %arg4[%c0_6, %c0_7], %7 {strides = array<i32>} : memref<256x128xf32, #tpu.memory_space<vmem>>, vector<256x128xf32>,
    return
  }
  func.func @transform_0(%arg0: i32) -> (i32, i32) {
    %c0_i32 = arith.constant 0 : i32
    %c0_i32_0 = arith.constant 0 : i32
    return %arg0, %c0_i32 : i32, i32
  }
  func.func @transform_1(%arg0: i32) -> (i32, i32) {
    %c0_i32 = arith.constant 0 : i32
    %c0_i32_0 = arith.constant 0 : i32
    %c0_i32_1 = arith.constant 0 : i32
    return %c0_i32, %c0_i32_0 : i32, i32
  }
  func.func @transform_2(%arg0: i32) -> (i32, i32) {
    %c0_i32 = arith.constant 0 : i32
    %c0_i32_0 = arith.constant 0 : i32
    %c0_i32_1 = arith.constant 0 : i32
    return %c0_i32, %c0_i32_0 : i32, i32
  }
  func.func @transform_3(%arg0: i32) -> (i32, i32) {
    %c0_i32 = arith.constant 0 : i32
    %c0_i32_0 = arith.constant 0 : i32
    return %arg0, %c0_i32 : i32, i32
  }
}

module attributes {stable_mosaic.version = 11 : i64} {
  func.func @_fuse_kernel(%arg0: i32, %arg1: memref<1xf32, #tpu.memory_space<smem>>, %arg2: memref<8x128xf32, #tpu.memory_space<vmem>>, %arg3: memref<8x128xf32, #tpu.memory_space<vmem>>, %arg4: memref<8x128xf32, #tpu.memory_space<vmem>>) attributes {dimension_semantics = [#tpu.dimension_semantics<parallel>], iteration_bounds = array<i64: 5>, scalar_prefetch = 0 : i64, scratch_operands = 0 : i64, tpu.core_type = #tpu.core_type<tc>, window_params = [{transform_indices = @transform_0, window_bounds = array<i64: 1>}, {transform_indices = @transform_1, window_bounds = array<i64: 8, 128>}, {transform_indices = @transform_2, window_bounds = array<i64: 8, 128>}, {transform_indices = @transform_3, window_bounds = array<i64: 8, 128>}]} {
    %c0 = arith.constant 0 : index
    %0 = memref.load %arg1[%c0] : memref<1xf32, #tpu.memory_space<smem>>
    %c0_0 = arith.constant 0 : index
    %c0_1 = arith.constant 0 : index
    %1 = vector.load %arg2[%c0_0, %c0_1] : memref<8x128xf32, #tpu.memory_space<vmem>>, vector<8x128xf32>
    %2 = vector.broadcast %0 : f32 to vector<8x128xf32>
    %3 = arith.mulf %2, %1 : vector<8x128xf32>
    %c0_2 = arith.constant 0 : index
    %c0_3 = arith.constant 0 : index
    %4 = vector.load %arg3[%c0_2, %c0_3] : memref<8x128xf32, #tpu.memory_space<vmem>>, vector<8x128xf32>
    %5 = arith.addf %3, %4 : vector<8x128xf32>
    %cst = arith.constant 0.000000e+00 : f32
    %6 = vector.broadcast %cst : f32 to vector<8x128xf32>
    %7 = arith.maximumf %5, %6 : vector<8x128xf32>
    %c0_4 = arith.constant 0 : index
    %c0_5 = arith.constant 0 : index
    %8 = vector.load %arg4[%c0_4, %c0_5] : memref<8x128xf32, #tpu.memory_space<vmem>>, vector<8x128xf32>
    tpu.vector_store %arg4[%c0_4, %c0_5], %7 {strides = array<i32>} : memref<8x128xf32, #tpu.memory_space<vmem>>, vector<8x128xf32>,
    return
  }
  func.func @transform_0(%arg0: i32) -> i32 {
    %c0_i32 = arith.constant 0 : i32
    %c0_i32_0 = arith.constant 0 : i32
    return %c0_i32 : i32
  }
  func.func @transform_1(%arg0: i32) -> (i32, i32) {
    %c0_i32 = arith.constant 0 : i32
    %c0_i32_0 = arith.constant 0 : i32
    return %arg0, %c0_i32 : i32, i32
  }
  func.func @transform_2(%arg0: i32) -> (i32, i32) {
    %c0_i32 = arith.constant 0 : i32
    %c0_i32_0 = arith.constant 0 : i32
    return %arg0, %c0_i32 : i32, i32
  }
  func.func @transform_3(%arg0: i32) -> (i32, i32) {
    %c0_i32 = arith.constant 0 : i32
    %c0_i32_0 = arith.constant 0 : i32
    return %arg0, %c0_i32 : i32, i32
  }
}

</mosaic_0001>

<llo_original>
// kernel: conv_update_forward.5
$region0: #{conv_update_forward.5}
  #allocation0 [shape = 'u32[]', space=smem, size = 0x4, offset = 0x4, fixed_abs, tag = 'smem constant byte address 0x4 - core index']
  #allocation1 [shape = 'u32[72,128]{1,0:T(1,128)}', space=vmem, size = 0x9000, scoped, tag = 'internal scratch']
  %s0 = inlined_call_operand.vmem [shape: bf16[512,384], index: 0, kind: input, shape index: {}]
  %s1 = inlined_call_operand.vmem [shape: bf16[384,128], index: 1, kind: input, shape index: {}]
  %s2 = inlined_call_operand.vmem [shape: f32[1,128], index: 2, kind: input, shape index: {}]
  %s3 = inlined_call_operand.vmem [shape: f32[512,128], index: 3, kind: output, shape index: {}]
  %s4 = sld [smem:[#allocation0]]
  $region45: #{conv_update_forward.5} parent=0
    _
  %s6 = ssub.s32 1, %s4
  %s7 = scalar_select 0, %s6, %s4
  loop: start=0, step=1, limit=4
  $region2: #{conv_update_forward.5} parent=0 // loop_pre_header
    _
  $region3: #{conv_update_forward.5} parent=0 // loop_header
    %s9 = sphi 0, %s13
    %p10 = scmp.ge.s32.totalorder %s9, 4
    %s19 = sphi 0, %s21
    %s22 = sphi 0, %s19
    %s23 = sphi 0, %s22
    %s39 = sphi 0, %s23
    %s43 = sphi 0, %s43
    %s45 = sphi 0, %s43
    %s46 = sphi 0, %s45
    %s60 = sphi 0, %s46
    %s64 = sphi 0, %s64
    %s66 = sphi 0, %s64
    %s67 = sphi 0, %s66
    %s81 = sphi 0, %s67
    %s87 = sphi 0, %s89
    %s90 = sphi 0, %s87
    %s91 = sphi 0, %s90
    %s107 = sphi 0, %s91
  $region4: #{conv_update_forward.5} parent=0 // loop_header_branch
    %12 = sbr.rel (%p10) target = $region8
  $region5: #{conv_update_forward.5} parent=0 // loop_body
    %s14 = ssub.s32 %s9, 1
    %s15 = ssub.s32 %s9, 2
    %s16 = sadd.s32 %s9, 1
    %s17 = ssub.s32 %s9, %s16
    %p18 = scmp.eq.s32.totalorder %s17, 0
    %s20 = sadd.s32 %s19, 1
    %s21 = scalar_select %p18, %s19, %s20
    %p24 = pneg %p18
    %p25 = scmp.eq.s32.totalorder %s9, 1
    %p26 = por %p24, %p25
    %p27 = scmp.ne.s32.totalorder %s19, %s22
    %p28 = scmp.eq.s32.totalorder %s9, 0
    %p29 = por %p27, %p28
    %p30 = scmp.ne.s32.totalorder %s19, %s22
    %p31 = scmp.eq.s32.totalorder %s14, 1
    %p32 = por %p30, %p31
    %p33 = scmp.ne.s32.totalorder %s22, %s23
    %p34 = scmp.eq.s32.totalorder %s14, 0
    %p35 = por %p33, %p34
    %p36 = scmp.ne.s32.totalorder %s22, %s23
    %p37 = scmp.eq.s32.totalorder %s15, 1
    %p38 = por %p36, %p37
    %p40 = scmp.ne.s32.totalorder %s23, %s39
    %p41 = scmp.eq.s32.totalorder %s15, 0
    %p42 = por %p40, %p41
    %s44 = sadd.s32 %s43, 1
    %p47 = scmp.eq.s32.totalorder %s9, 1
    %p48 = scmp.ne.s32.totalorder %s43, %s45
    %p49 = scmp.eq.s32.totalorder %s9, 0
    %p50 = por %p48, %p49
    %p51 = scmp.ne.s32.totalorder %s43, %s45
    %p52 = scmp.eq.s32.totalorder %s14, 1
    %p53 = por %p51, %p52
    %p54 = scmp.ne.s32.totalorder %s45, %s46
    %p55 = scmp.eq.s32.totalorder %s14, 0
    %p56 = por %p54, %p55
    %p57 = scmp.ne.s32.totalorder %s45, %s46
    %p58 = scmp.eq.s32.totalorder %s15, 1
    %p59 = por %p57, %p58
    %p61 = scmp.ne.s32.totalorder %s46, %s60
    %p62 = scmp.eq.s32.totalorder %s15, 0
    %p63 = por %p61, %p62
    %s65 = sadd.s32 %s64, 1
    %p68 = scmp.eq.s32.totalorder %s9, 1
    %p69 = scmp.ne.s32.totalorder %s64, %s66
    %p70 = scmp.eq.s32.totalorder %s9, 0
    %p71 = por %p69, %p70
    %p72 = scmp.ne.s32.totalorder %s64, %s66
    %p73 = scmp.eq.s32.totalorder %s14, 1
    %p74 = por %p72, %p73
    %p75 = scmp.ne.s32.totalorder %s66, %s67
    %p76 = scmp.eq.s32.totalorder %s14, 0
    %p77 = por %p75, %p76
    %p78 = scmp.ne.s32.totalorder %s66, %s67
    %p79 = scmp.eq.s32.totalorder %s15, 1
    %p80 = por %p78, %p79
    %p82 = scmp.ne.s32.totalorder %s67, %s81
    %p83 = scmp.eq.s32.totalorder %s15, 0
    %p84 = por %p82, %p83
    %s85 = ssub.s32 %s9, %s16
    %p86 = scmp.eq.s32.totalorder %s85, 0
    %s88 = sadd.s32 %s87, 1
    %s89 = scalar_select %p86, %s87, %s88
    %p92 = pneg %p86
    %p93 = scmp.eq.s32.totalorder %s9, 1
    %p94 = por %p92, %p93
    %p95 = scmp.ne.s32.totalorder %s87, %s90
    %p96 = scmp.eq.s32.totalorder %s9, 0
    %p97 = por %p95, %p96
    %p98 = scmp.ne.s32.totalorder %s87, %s90
    %p99 = scmp.eq.s32.totalorder %s14, 1
    %p100 = por %p98, %p99
    %p101 = scmp.ne.s32.totalorder %s90, %s91
    %p102 = scmp.eq.s32.totalorder %s14, 0
    %p103 = por %p101, %p102
    %p104 = scmp.ne.s32.totalorder %s90, %s91
    %p105 = scmp.eq.s32.totalorder %s15, 1
    %p106 = por %p104, %p105
    %p108 = scmp.ne.s32.totalorder %s91, %s107
    %p109 = scmp.eq.s32.totalorder %s15, 0
    %p110 = por %p108, %p109
    %p111 = scmp.le.s32.totalorder 1, %s9
    %p112 = scmp.lt.s32.totalorder %s9, 3
    %p113 = pnand %p111, %p112
    %p114 = pneg %p113
    // Predicated region
    $region9: #{conv_update_forward.5} parent=5 // pred_check
      _
    $region10: #{conv_update_forward.5} parent=5 // pred_check_branch
      %116 = sbr.rel (%p113) target = $region12
    $region11: #{conv_update_forward.5} parent=5 // pred_region
      %s117 = ssub.s32 %s9, 1
      // Predicated region
      $region13: #{conv_update_forward.5} parent=11 // pred_check
        %p118 = pneg %p56
      $region14: #{conv_update_forward.5} parent=11 // pred_check_branch
        %120 = sbr.rel (%p118) target = $region16
      $region15: #{conv_update_forward.5} parent=11 // pred_region
        _
      $region16: #{conv_update_forward.5} parent=11 // pred_fallthru
        _
      // Predicated region
      $region17: #{conv_update_forward.5} parent=11 // pred_check
        %p121 = pneg %p77
      $region18: #{conv_update_forward.5} parent=11 // pred_check_branch
        %123 = sbr.rel (%p121) target = $region20
      $region19: #{conv_update_forward.5} parent=11 // pred_region
        _
      $region20: #{conv_update_forward.5} parent=11 // pred_fallthru
        _
    $region12: #{conv_update_forward.5} parent=5 // pred_fallthru
      _
    %p124 = scmp.lt.s32.totalorder %s9, 2
    // Predicated region
    $region21: #{conv_update_forward.5} parent=5 // pred_check
      %p125 = pneg %p124
    $region22: #{conv_update_forward.5} parent=5 // pred_check_branch
      %127 = sbr.rel (%p125) target = $region24
    $region23: #{conv_update_forward.5} parent=5 // pred_region
      // Predicated region
      $region25: #{conv_update_forward.5} parent=23 // pred_check
        %p128 = pneg %p29
      $region26: #{conv_update_forward.5} parent=23 // pred_check_branch
        %130 = sbr.rel (%p128) target = $region28
      $region27: #{conv_update_forward.5} parent=23 // pred_region
        %s131 = smul.u32 32, %s9
        %p132 = scmp.lt.s32.totalorder %s131, 63
        %s133 = scalar_select %p132, %s131, 63
        %s134 = smul.addr %s133, 3
        %s135 = smul.addr %s134, 4
        %s136 = scalar_lea.vmem %s0, %s135
        %s137 = smul.u32 32, %s9
      $region28: #{conv_update_forward.5} parent=23 // pred_fallthru
        _
    $region24: #{conv_update_forward.5} parent=5 // pred_fallthru
      _
    %p138 = scmp.le.s32.totalorder 1, %s9
    %p139 = scmp.lt.s32.totalorder %s9, 3
    %p140 = pnand %p138, %p139
    %p141 = pneg %p140
    // Predicated region
    $region29: #{conv_update_forward.5} parent=5 // pred_check
      _
    $region30: #{conv_update_forward.5} parent=5 // pred_check_branch
      %143 = sbr.rel (%p140) target = $region32
    $region31: #{conv_update_forward.5} parent=5 // pred_region
      %s144 = ssub.s32 %s9, 1
      %s145 = smul.u32 32, %s14
      %p146 = scmp.lt.s32.totalorder %s145, 63
      %s147 = scalar_select %p146, %s145, 63
      %s148 = smul.addr %s147, 3
      %s149 = smul.addr %s148, 4
      %s150 = scalar_lea.vmem %s0, %s149
      %p151 = pneg %p35
      %p152 = pneg %p32
      %p153 = pneg %p56
      %p154 = pneg %p53
      %p155 = pneg %p77
      %p156 = pneg %p74
      %p157 = pneg %p103
      %p158 = pneg %p100
      %s159 = smul.u32 32, %s14
      %p160 = scmp.lt.s32.totalorder %s159, 63
      %s161 = scalar_select %p160, %s159, 63
      %s162 = smul.addr %s161, 8
      %s163 = scalar_lea.vmem %s3, %s162
      %s164 = smul.u32 32, %s14
      %p165 = scmp.lt.s32.totalorder %s164, 63
      %s166 = scalar_select %p165, %s164, 63
      %s167 = smul.addr %s166, 3
      %s168 = smul.addr %s167, 4
      %s169 = scalar_lea.vmem %s0, %s168
      %s170 = smul.u32 32, %s14
      %s171 = smul.u32 32, %s14
      %p172 = scmp.lt.s32.totalorder %s171, 63
      %s173 = scalar_select %p172, %s171, 63
      %s174 = smul.addr %s173, 8
      %s175 = scalar_lea.vmem %s3, %s174
      %s176 = smul.u32 32, %s14
      %v177 = vld [vmem:[%s169] sm:$0xff]
      %v178 = vld [vmem:[%s169 + $0x8] sm:$0xf]
      %v179 = vld [vmem:[%s169 + $0xc] sm:$0xff]
      %v180 = vld [vmem:[%s169 + $0x14] sm:$0xf]
      %v181 = vld [vmem:[%s169 + $0x18] sm:$0xff]
      %v182 = vld [vmem:[%s169 + $0x20] sm:$0xf]
      %v183 = vld [vmem:[%s169 + $0x24] sm:$0xff]
      %v184 = vld [vmem:[%s169 + $0x2c] sm:$0xf]
      %v185 = vld [vmem:[%s169 + $0x30] sm:$0xff]
      %v186 = vld [vmem:[%s169 + $0x38] sm:$0xf]
      %v187 = vld [vmem:[%s169 + $0x3c] sm:$0xff]
      %v188 = vld [vmem:[%s169 + $0x44] sm:$0xf]
      %v189 = vld [vmem:[%s169 + $0x48] sm:$0xff]
      %v190 = vld [vmem:[%s169 + $0x50] sm:$0xf]
      %v191 = vld [vmem:[%s169 + $0x54] sm:$0xff]
      %v192 = vld [vmem:[%s169 + $0x5c] sm:$0xf]
      %v193 = vld [vmem:[%s169 + $0x60] sm:$0xff]
      %v194 = vld [vmem:[%s169 + $0x68] sm:$0xf]
      %v195 = vld [vmem:[%s169 + $0x6c] sm:$0xff]
      %v196 = vld [vmem:[%s169 + $0x74] sm:$0xf]
      %v197 = vld [vmem:[%s169 + $0x78] sm:$0xff]
      %v198 = vld [vmem:[%s169 + $0x80] sm:$0xf]
      %v199 = vld [vmem:[%s169 + $0x84] sm:$0xff]
      %v200 = vld [vmem:[%s169 + $0x8c] sm:$0xf]
      %v201 = vld [vmem:[%s169 + $0x90] sm:$0xff]
      %v202 = vld [vmem:[%s169 + $0x98] sm:$0xf]
      %v203 = vld [vmem:[%s169 + $0x9c] sm:$0xff]
      %v204 = vld [vmem:[%s169 + $0xa4] sm:$0xf]
      %v205 = vld [vmem:[%s169 + $0xa8] sm:$0xff]
      %v206 = vld [vmem:[%s169 + $0xb0] sm:$0xf]
      %v207 = vld [vmem:[%s169 + $0xb4] sm:$0xff]
      %v208 = vld [vmem:[%s169 + $0xbc] sm:$0xf]
      %v209 = vld [vmem:[%s169 + $0xc0] sm:$0xff]
      %v210 = vld [vmem:[%s169 + $0xc8] sm:$0xf]
      %v211 = vld [vmem:[%s169 + $0xcc] sm:$0xff]
      %v212 = vld [vmem:[%s169 + $0xd4] sm:$0xf]
      %v213 = vld [vmem:[%s169 + $0xd8] sm:$0xff]
      %v214 = vld [vmem:[%s169 + $0xe0] sm:$0xf]
      %v215 = vld [vmem:[%s169 + $0xe4] sm:$0xff]
      %v216 = vld [vmem:[%s169 + $0xec] sm:$0xf]
      %v217 = vld [vmem:[%s169 + $0xf0] sm:$0xff]
      %v218 = vld [vmem:[%s169 + $0xf8] sm:$0xf]
      %v219 = vld [vmem:[%s169 + $0xfc] sm:$0xff]
      %v220 = vld [vmem:[%s169 + $0x104] sm:$0xf]
      %v221 = vld [vmem:[%s169 + $0x108] sm:$0xff]
      %v222 = vld [vmem:[%s169 + $0x110] sm:$0xf]
      %v223 = vld [vmem:[%s169 + $0x114] sm:$0xff]
      %v224 = vld [vmem:[%s169 + $0x11c] sm:$0xf]
      %v225 = vld [vmem:[%s169 + $0x120] sm:$0xff]
      %v226 = vld [vmem:[%s169 + $0x128] sm:$0xf]
      %v227 = vld [vmem:[%s169 + $0x12c] sm:$0xff]
      %v228 = vld [vmem:[%s169 + $0x134] sm:$0xf]
      %v229 = vld [vmem:[%s169 + $0x138] sm:$0xff]
      %v230 = vld [vmem:[%s169 + $0x140] sm:$0xf]
      %v231 = vld [vmem:[%s169 + $0x144] sm:$0xff]
      %v232 = vld [vmem:[%s169 + $0x14c] sm:$0xf]
      %v233 = vld [vmem:[%s169 + $0x150] sm:$0xff]
      %v234 = vld [vmem:[%s169 + $0x158] sm:$0xf]
      %v235 = vld [vmem:[%s169 + $0x15c] sm:$0xff]
      %v236 = vld [vmem:[%s169 + $0x164] sm:$0xf]
      %v237 = vld [vmem:[%s169 + $0x168] sm:$0xff]
      %v238 = vld [vmem:[%s169 + $0x170] sm:$0xf]
      %v239 = vld [vmem:[%s169 + $0x174] sm:$0xff]
      %v240 = vld [vmem:[%s169 + $0x17c] sm:$0xf]
      %v241 = vld [vmem:[%s1] sm:$0xf]
      %v242 = vld [vmem:[%s1 + $0x4] sm:$0xf]
      %v243 = vld [vmem:[%s1 + $0x8] sm:$0xf]
      %v244 = vld [vmem:[%s1 + $0xc] sm:$0xf]
      %v245 = vld [vmem:[%s1 + $0x10] sm:$0xf]
      %v246 = vld [vmem:[%s1 + $0x14] sm:$0xf]
      %v247 = vld [vmem:[%s1 + $0x18] sm:$0xf]
      %v248 = vld [vmem:[%s1 + $0x1c] sm:$0xf]
      %v249 = vld [vmem:[%s1 + $0x20] sm:$0xf]
      %v250 = vld [vmem:[%s1 + $0x24] sm:$0xf]
      %v251 = vld [vmem:[%s1 + $0x28] sm:$0xf]
      %v252 = vld [vmem:[%s1 + $0x2c] sm:$0xf]
      %v253 = vld [vmem:[%s1 + $0x30] sm:$0xf]
      %v254 = vld [vmem:[%s1 + $0x34] sm:$0xf]
      %v255 = vld [vmem:[%s1 + $0x38] sm:$0xf]
      %v256 = vld [vmem:[%s1 + $0x3c] sm:$0xf]
      %v257 = vld [vmem:[%s1 + $0x40] sm:$0xf]
      %v258 = vld [vmem:[%s1 + $0x44] sm:$0xf]
      %v259 = vld [vmem:[%s1 + $0x48] sm:$0xf]
      %v260 = vld [vmem:[%s1 + $0x4c] sm:$0xf]
      %v261 = vld [vmem:[%s1 + $0x50] sm:$0xf]
      %v262 = vld [vmem:[%s1 + $0x54] sm:$0xf]
      %v263 = vld [vmem:[%s1 + $0x58] sm:$0xf]
      %v264 = vld [vmem:[%s1 + $0x5c] sm:$0xf]
      %v265 = vld [vmem:[%s1 + $0x60] sm:$0xf]
      %v266 = vld [vmem:[%s1 + $0x64] sm:$0xf]
      %v267 = vld [vmem:[%s1 + $0x68] sm:$0xf]
      %v268 = vld [vmem:[%s1 + $0x6c] sm:$0xf]
      %v269 = vld [vmem:[%s1 + $0x70] sm:$0xf]
      %v270 = vld [vmem:[%s1 + $0x74] sm:$0xf]
      %v271 = vld [vmem:[%s1 + $0x78] sm:$0xf]
      %v272 = vld [vmem:[%s1 + $0x7c] sm:$0xf]
      %v273 = vld [vmem:[%s1 + $0x80] sm:$0xf]
      %v274 = vld [vmem:[%s1 + $0x84] sm:$0xf]
      %v275 = vld [vmem:[%s1 + $0x88] sm:$0xf]
      %v276 = vld [vmem:[%s1 + $0x8c] sm:$0xf]
      %v277 = vld [vmem:[%s1 + $0x90] sm:$0xf]
      %v278 = vld [vmem:[%s1 + $0x94] sm:$0xf]
      %v279 = vld [vmem:[%s1 + $0x98] sm:$0xf]
      %v280 = vld [vmem:[%s1 + $0x9c] sm:$0xf]
      %v281 = vld [vmem:[%s1 + $0xa0] sm:$0xf]
      %v282 = vld [vmem:[%s1 + $0xa4] sm:$0xf]
      %v283 = vld [vmem:[%s1 + $0xa8] sm:$0xf]
      %v284 = vld [vmem:[%s1 + $0xac] sm:$0xf]
      %v285 = vld [vmem:[%s1 + $0xb0] sm:$0xf]
      %v286 = vld [vmem:[%s1 + $0xb4] sm:$0xf]
      %v287 = vld [vmem:[%s1 + $0xb8] sm:$0xf]
      %v288 = vld [vmem:[%s1 + $0xbc] sm:$0xf]
      %v289 = vld [vmem:[%s2] sm:$0x1]
      %v291 = vperm.slane %v289, 0
      %v357 = vunpack.c.l.b16 %v177
      %v358 = vunpack.c.h.b16 %v177
      %v359 = vunpack.c.l.b16 %v178
      %v360 = vunpack.c.l.b16 %v179
      %v361 = vunpack.c.h.b16 %v179
      %v362 = vunpack.c.l.b16 %v180
      %v363 = vunpack.c.l.b16 %v181
      %v364 = vunpack.c.h.b16 %v181
      %v365 = vunpack.c.l.b16 %v182
      %v366 = vunpack.c.l.b16 %v183
      %v367 = vunpack.c.h.b16 %v183
      %v368 = vunpack.c.l.b16 %v184
      %v369 = vunpack.c.l.b16 %v185
      %v370 = vunpack.c.h.b16 %v185
      %v371 = vunpack.c.l.b16 %v186
      %v372 = vunpack.c.l.b16 %v187
      %v373 = vunpack.c.h.b16 %v187
      %v374 = vunpack.c.l.b16 %v188
      %v375 = vunpack.c.l.b16 %v189
      %v376 = vunpack.c.h.b16 %v189
      %v377 = vunpack.c.l.b16 %v190
      %v378 = vunpack.c.l.b16 %v191
      %v379 = vunpack.c.h.b16 %v191
      %v380 = vunpack.c.l.b16 %v192
      %v381 = vunpack.c.l.b16 %v193
      %v382 = vunpack.c.h.b16 %v193
      %v383 = vunpack.c.l.b16 %v194
      %v384 = vunpack.c.l.b16 %v195
      %v385 = vunpack.c.h.b16 %v195
      %v386 = vunpack.c.l.b16 %v196
      %v387 = vunpack.c.l.b16 %v197
      %v388 = vunpack.c.h.b16 %v197
      %v389 = vunpack.c.l.b16 %v198
      %v390 = vunpack.c.l.b16 %v199
      %v391 = vunpack.c.h.b16 %v199
      %v392 = vunpack.c.l.b16 %v200
      %v393 = vunpack.c.l.b16 %v201
      %v394 = vunpack.c.h.b16 %v201
      %v395 = vunpack.c.l.b16 %v202
      %v396 = vunpack.c.l.b16 %v203
      %v397 = vunpack.c.h.b16 %v203
      %v398 = vunpack.c.l.b16 %v204
      %v399 = vunpack.c.l.b16 %v205
      %v400 = vunpack.c.h.b16 %v205
      %v401 = vunpack.c.l.b16 %v206
      %v402 = vunpack.c.l.b16 %v207
      %v403 = vunpack.c.h.b16 %v207
      %v404 = vunpack.c.l.b16 %v208
      %v405 = vunpack.c.l.b16 %v209
      %v406 = vunpack.c.h.b16 %v209
      %v407 = vunpack.c.l.b16 %v210
      %v408 = vunpack.c.l.b16 %v211
      %v409 = vunpack.c.h.b16 %v211
      %v410 = vunpack.c.l.b16 %v212
      %v411 = vunpack.c.l.b16 %v213
      %v412 = vunpack.c.h.b16 %v213
      %v413 = vunpack.c.l.b16 %v214
      %v414 = vunpack.c.l.b16 %v215
      %v415 = vunpack.c.h.b16 %v215
      %v416 = vunpack.c.l.b16 %v216
      %v417 = vunpack.c.l.b16 %v217
      %v418 = vunpack.c.h.b16 %v217
      %v419 = vunpack.c.l.b16 %v218
      %v420 = vunpack.c.l.b16 %v219
      %v421 = vunpack.c.h.b16 %v219
      %v422 = vunpack.c.l.b16 %v220
      %v423 = vunpack.c.l.b16 %v221
      %v424 = vunpack.c.h.b16 %v221
      %v425 = vunpack.c.l.b16 %v222
      %v426 = vunpack.c.l.b16 %v223
      %v427 = vunpack.c.h.b16 %v223
      %v428 = vunpack.c.l.b16 %v224
      %v429 = vunpack.c.l.b16 %v225
      %v430 = vunpack.c.h.b16 %v225
      %v431 = vunpack.c.l.b16 %v226
      %v432 = vunpack.c.l.b16 %v227
      %v433 = vunpack.c.h.b16 %v227
      %v434 = vunpack.c.l.b16 %v228
      %v435 = vunpack.c.l.b16 %v229
      %v436 = vunpack.c.h.b16 %v229
      %v437 = vunpack.c.l.b16 %v230
      %v438 = vunpack.c.l.b16 %v231
      %v439 = vunpack.c.h.b16 %v231
      %v440 = vunpack.c.l.b16 %v232
      %v441 = vunpack.c.l.b16 %v233
      %v442 = vunpack.c.h.b16 %v233
      %v443 = vunpack.c.l.b16 %v234
      %v444 = vunpack.c.l.b16 %v235
      %v445 = vunpack.c.h.b16 %v235
      %v446 = vunpack.c.l.b16 %v236
      %v447 = vunpack.c.l.b16 %v237
      %v448 = vunpack.c.h.b16 %v237
      %v449 = vunpack.c.l.b16 %v238
      %v450 = vunpack.c.l.b16 %v239
      %v451 = vunpack.c.h.b16 %v239
      %v452 = vunpack.c.l.b16 %v240
      %v453 = vpack.c.b16 %v360, %v357
      %v454 = vpack.c.b16 %v361, %v358
      %v455 = vpack.c.b16 %v362, %v359
      %v456 = vpack.c.b16 %v366, %v363
      %v457 = vpack.c.b16 %v367, %v364
      %v458 = vpack.c.b16 %v368, %v365
      %v459 = vpack.c.b16 %v372, %v369
      %v460 = vpack.c.b16 %v373, %v370
      %v461 = vpack.c.b16 %v374, %v371
      %v462 = vpack.c.b16 %v378, %v375
      %v463 = vpack.c.b16 %v379, %v376
      %v464 = vpack.c.b16 %v380, %v377
      %v465 = vpack.c.b16 %v384, %v381
      %v466 = vpack.c.b16 %v385, %v382
      %v467 = vpack.c.b16 %v386, %v383
      %v468 = vpack.c.b16 %v390, %v387
      %v469 = vpack.c.b16 %v391, %v388
      %v470 = vpack.c.b16 %v392, %v389
      %v471 = vpack.c.b16 %v396, %v393
      %v472 = vpack.c.b16 %v397, %v394
      %v473 = vpack.c.b16 %v398, %v395
      %v474 = vpack.c.b16 %v402, %v399
      %v475 = vpack.c.b16 %v403, %v400
      %v476 = vpack.c.b16 %v404, %v401
      %v477 = vpack.c.b16 %v408, %v405
      %v478 = vpack.c.b16 %v409, %v406
      %v479 = vpack.c.b16 %v410, %v407
      %v480 = vpack.c.b16 %v414, %v411
      %v481 = vpack.c.b16 %v415, %v412
      %v482 = vpack.c.b16 %v416, %v413
      %v483 = vpack.c.b16 %v420, %v417
      %v484 = vpack.c.b16 %v421, %v418
      %v485 = vpack.c.b16 %v422, %v419
      %v486 = vpack.c.b16 %v426, %v423
      %v487 = vpack.c.b16 %v427, %v424
      %v488 = vpack.c.b16 %v428, %v425
      %v489 = vpack.c.b16 %v432, %v429
      %v490 = vpack.c.b16 %v433, %v430
      %v491 = vpack.c.b16 %v434, %v431
      %v492 = vpack.c.b16 %v438, %v435
      %v493 = vpack.c.b16 %v439, %v436
      %v494 = vpack.c.b16 %v440, %v437
      %v495 = vpack.c.b16 %v444, %v441
      %v496 = vpack.c.b16 %v445, %v442
      %v497 = vpack.c.b16 %v446, %v443
      %v498 = vpack.c.b16 %v450, %v447
      %v499 = vpack.c.b16 %v451, %v448
      %v500 = vpack.c.b16 %v452, %v449
      %v597 = vunpack.c.l.b16 %v241
      %v598 = vunpack.c.l.b16 %v242
      %v599 = vunpack.c.l.b16 %v243
      %v600 = vunpack.c.l.b16 %v244
      %v601 = vunpack.c.l.b16 %v245
      %v602 = vunpack.c.l.b16 %v246
      %v603 = vunpack.c.l.b16 %v247
      %v604 = vunpack.c.l.b16 %v248
      %v605 = vunpack.c.l.b16 %v249
      %v606 = vunpack.c.l.b16 %v250
      %v607 = vunpack.c.l.b16 %v251
      %v608 = vunpack.c.l.b16 %v252
      %v609 = vunpack.c.l.b16 %v253
      %v610 = vunpack.c.l.b16 %v254
      %v611 = vunpack.c.l.b16 %v255
      %v612 = vunpack.c.l.b16 %v256
      %v613 = vunpack.c.l.b16 %v257
      %v614 = vunpack.c.l.b16 %v258
      %v615 = vunpack.c.l.b16 %v259
      %v616 = vunpack.c.l.b16 %v260
      %v617 = vunpack.c.l.b16 %v261
      %v618 = vunpack.c.l.b16 %v262
      %v619 = vunpack.c.l.b16 %v263
      %v620 = vunpack.c.l.b16 %v264
      %v621 = vunpack.c.l.b16 %v265
      %v622 = vunpack.c.l.b16 %v266
      %v623 = vunpack.c.l.b16 %v267
      %v624 = vunpack.c.l.b16 %v268
      %v625 = vunpack.c.l.b16 %v269
      %v626 = vunpack.c.l.b16 %v270
      %v627 = vunpack.c.l.b16 %v271
      %v628 = vunpack.c.l.b16 %v272
      %v629 = vunpack.c.l.b16 %v273
      %v630 = vunpack.c.l.b16 %v274
      %v631 = vunpack.c.l.b16 %v275
      %v632 = vunpack.c.l.b16 %v276
      %v633 = vunpack.c.l.b16 %v277
      %v634 = vunpack.c.l.b16 %v278
      %v635 = vunpack.c.l.b16 %v279
      %v636 = vunpack.c.l.b16 %v280
      %v637 = vunpack.c.l.b16 %v281
      %v638 = vunpack.c.l.b16 %v282
      %v639 = vunpack.c.l.b16 %v283
      %v640 = vunpack.c.l.b16 %v284
      %v641 = vunpack.c.l.b16 %v285
      %v642 = vunpack.c.l.b16 %v286
      %v643 = vunpack.c.l.b16 %v287
      %v644 = vunpack.c.l.b16 %v288
      %v645 = vpack.c.b16 %v598, %v597
      %v646 = vpack.c.b16 %v600, %v599
      %v647 = vpack.c.b16 %v602, %v601
      %v648 = vpack.c.b16 %v604, %v603
      %v649 = vpack.c.b16 %v606, %v605
      %v650 = vpack.c.b16 %v608, %v607
      %v651 = vpack.c.b16 %v610, %v609
      %v652 = vpack.c.b16 %v612, %v611
      %v653 = vpack.c.b16 %v614, %v613
      %v654 = vpack.c.b16 %v616, %v615
      %v655 = vpack.c.b16 %v618, %v617
      %v656 = vpack.c.b16 %v620, %v619
      %v657 = vpack.c.b16 %v622, %v621
      %v658 = vpack.c.b16 %v624, %v623
      %v659 = vpack.c.b16 %v626, %v625
      %v660 = vpack.c.b16 %v628, %v627
      %v661 = vpack.c.b16 %v630, %v629
      %v662 = vpack.c.b16 %v632, %v631
      %v663 = vpack.c.b16 %v634, %v633
      %v664 = vpack.c.b16 %v636, %v635
      %v665 = vpack.c.b16 %v638, %v637
      %v666 = vpack.c.b16 %v640, %v639
      %v667 = vpack.c.b16 %v642, %v641
      %v668 = vpack.c.b16 %v644, %v643
      %693 = vmatpush.bf16.msra.mxu0 %v652
      %694 = vmatpush.bf16.msra.mxu0 %v651
      %695 = vmatpush.bf16.msra.mxu0 %v650
      %696 = vmatpush.bf16.msra.mxu0 %v649
      %697 = vmatpush.bf16.msra.mxu0 %v648
      %698 = vmatpush.bf16.msra.mxu0 %v647
      %699 = vmatpush.bf16.msra.mxu0 %v646
      %700 = vmatpush.bf16.msra.mxu0 %v645
      %701 = vmatmul.bf16.gmra.mxu0 %v453
      %v702 = vpop.f32.mrf.mxu0
      %v703 = vadd.f32 %v291, %v702
      %v704 = vpop.f32.mrf.mxu0
      %v705 = vadd.f32 %v291, %v704
      %706 = vmatmul.bf16.gmra.mxu0 %v456
      %v707 = vpop.f32.mrf.mxu0
      %v708 = vadd.f32 %v291, %v707
      %v709 = vpop.f32.mrf.mxu0
      %v710 = vadd.f32 %v291, %v709
      %711 = vmatmul.bf16.gmra.mxu0 %v459
      %v712 = vpop.f32.mrf.mxu0
      %v713 = vadd.f32 %v291, %v712
      %v714 = vpop.f32.mrf.mxu0
      %v715 = vadd.f32 %v291, %v714
      %716 = vmatmul.bf16.gmra.mxu0 %v462
      %v717 = vpop.f32.mrf.mxu0
      %v718 = vadd.f32 %v291, %v717
      %v719 = vpop.f32.mrf.mxu0
      %v720 = vadd.f32 %v291, %v719
      %721 = vmatmul.bf16.gmra.mxu0 %v465
      %v722 = vpop.f32.mrf.mxu0
      %v723 = vadd.f32 %v291, %v722
      %v724 = vpop.f32.mrf.mxu0
      %v725 = vadd.f32 %v291, %v724
      %726 = vmatmul.bf16.gmra.mxu0 %v468
      %v727 = vpop.f32.mrf.mxu0
      %v728 = vadd.f32 %v291, %v727
      %v729 = vpop.f32.mrf.mxu0
      %v730 = vadd.f32 %v291, %v729
      %731 = vmatmul.bf16.gmra.mxu0 %v471
      %v732 = vpop.f32.mrf.mxu0
      %v733 = vadd.f32 %v291, %v732
      %v734 = vpop.f32.mrf.mxu0
      %v735 = vadd.f32 %v291, %v734
      %736 = vmatmul.bf16.gmra.mxu0 %v474
      %v737 = vpop.f32.mrf.mxu0
      %v738 = vadd.f32 %v291, %v737
      %v739 = vpop.f32.mrf.mxu0
      %v740 = vadd.f32 %v291, %v739
      %741 = vmatmul.bf16.gmra.mxu0 %v477
      %v742 = vpop.f32.mrf.mxu0
      %v743 = vadd.f32 %v291, %v742
      %v744 = vpop.f32.mrf.mxu0
      %v745 = vadd.f32 %v291, %v744
      %746 = vmatmul.bf16.gmra.mxu0 %v480
      %v747 = vpop.f32.mrf.mxu0
      %v748 = vadd.f32 %v291, %v747
      %v749 = vpop.f32.mrf.mxu0
      %v750 = vadd.f32 %v291, %v749
      %751 = vmatmul.bf16.gmra.mxu0 %v483
      %v752 = vpop.f32.mrf.mxu0
      %v753 = vadd.f32 %v291, %v752
      %v754 = vpop.f32.mrf.mxu0
      %v755 = vadd.f32 %v291, %v754
      %756 = vmatmul.bf16.gmra.mxu0 %v486
      %v757 = vpop.f32.mrf.mxu0
      %v758 = vadd.f32 %v291, %v757
      %v759 = vpop.f32.mrf.mxu0
      %v760 = vadd.f32 %v291, %v759
      %761 = vmatmul.bf16.gmra.mxu0 %v489
      %v762 = vpop.f32.mrf.mxu0
      %v763 = vadd.f32 %v291, %v762
      %v764 = vpop.f32.mrf.mxu0
      %v765 = vadd.f32 %v291, %v764
      %766 = vmatmul.bf16.gmra.mxu0 %v492
      %v767 = vpop.f32.mrf.mxu0
      %v768 = vadd.f32 %v291, %v767
      %v769 = vpop.f32.mrf.mxu0
      %v770 = vadd.f32 %v291, %v769
      %771 = vmatmul.bf16.gmra.mxu0 %v495
      %v772 = vpop.f32.mrf.mxu0
      %v773 = vadd.f32 %v291, %v772
      %v774 = vpop.f32.mrf.mxu0
      %v775 = vadd.f32 %v291, %v774
      %776 = vmatmul.bf16.gmra.mxu0 %v498
      %v777 = vpop.f32.mrf.mxu0
      %v778 = vadd.f32 %v291, %v777
      %v779 = vpop.f32.mrf.mxu0
      %v780 = vadd.f32 %v291, %v779
      %781 = vdwg.mxu0
      %782 = vmatpush.bf16.msra.mxu0 %v660
      %783 = vmatpush.bf16.msra.mxu0 %v659
      %784 = vmatpush.bf16.msra.mxu0 %v658
      %785 = vmatpush.bf16.msra.mxu0 %v657
      %786 = vmatpush.bf16.msra.mxu0 %v656
      %787 = vmatpush.bf16.msra.mxu0 %v655
      %788 = vmatpush.bf16.msra.mxu0 %v654
      %789 = vmatpush.bf16.msra.mxu0 %v653
      %790 = vmatmul.bf16.gmra.mxu0 %v454
      %v791 = vpop.f32.mrf.mxu0
      %v792 = vadd.f32 %v703, %v791
      %v793 = vpop.f32.mrf.mxu0
      %v794 = vadd.f32 %v705, %v793
      %795 = vmatmul.bf16.gmra.mxu0 %v457
      %v796 = vpop.f32.mrf.mxu0
      %v797 = vadd.f32 %v708, %v796
      %v798 = vpop.f32.mrf.mxu0
      %v799 = vadd.f32 %v710, %v798
      %800 = vmatmul.bf16.gmra.mxu0 %v460
      %v801 = vpop.f32.mrf.mxu0
      %v802 = vadd.f32 %v713, %v801
      %v803 = vpop.f32.mrf.mxu0
      %v804 = vadd.f32 %v715, %v803
      %805 = vmatmul.bf16.gmra.mxu0 %v463
      %v806 = vpop.f32.mrf.mxu0
      %v807 = vadd.f32 %v718, %v806
      %v808 = vpop.f32.mrf.mxu0
      %v809 = vadd.f32 %v720, %v808
      %810 = vmatmul.bf16.gmra.mxu0 %v466
      %v811 = vpop.f32.mrf.mxu0
      %v812 = vadd.f32 %v723, %v811
      %v813 = vpop.f32.mrf.mxu0
      %v814 = vadd.f32 %v725, %v813
      %815 = vmatmul.bf16.gmra.mxu0 %v469
      %v816 = vpop.f32.mrf.mxu0
      %v817 = vadd.f32 %v728, %v816
      %v818 = vpop.f32.mrf.mxu0
      %v819 = vadd.f32 %v730, %v818
      %820 = vmatmul.bf16.gmra.mxu0 %v472
      %v821 = vpop.f32.mrf.mxu0
      %v822 = vadd.f32 %v733, %v821
      %v823 = vpop.f32.mrf.mxu0
      %v824 = vadd.f32 %v735, %v823
      %825 = vmatmul.bf16.gmra.mxu0 %v475
      %v826 = vpop.f32.mrf.mxu0
      %v827 = vadd.f32 %v738, %v826
      %v828 = vpop.f32.mrf.mxu0
      %v829 = vadd.f32 %v740, %v828
      %830 = vmatmul.bf16.gmra.mxu0 %v478
      %v831 = vpop.f32.mrf.mxu0
      %v832 = vadd.f32 %v743, %v831
      %v833 = vpop.f32.mrf.mxu0
      %v834 = vadd.f32 %v745, %v833
      %835 = vmatmul.bf16.gmra.mxu0 %v481
      %v836 = vpop.f32.mrf.mxu0
      %v837 = vadd.f32 %v748, %v836
      %v838 = vpop.f32.mrf.mxu0
      %v839 = vadd.f32 %v750, %v838
      %840 = vmatmul.bf16.gmra.mxu0 %v484
      %v841 = vpop.f32.mrf.mxu0
      %v842 = vadd.f32 %v753, %v841
      %v843 = vpop.f32.mrf.mxu0
      %v844 = vadd.f32 %v755, %v843
      %845 = vmatmul.bf16.gmra.mxu0 %v487
      %v846 = vpop.f32.mrf.mxu0
      %v847 = vadd.f32 %v758, %v846
      %v848 = vpop.f32.mrf.mxu0
      %v849 = vadd.f32 %v760, %v848
      %850 = vmatmul.bf16.gmra.mxu0 %v490
      %v851 = vpop.f32.mrf.mxu0
      %v852 = vadd.f32 %v763, %v851
      %v853 = vpop.f32.mrf.mxu0
      %v854 = vadd.f32 %v765, %v853
      %855 = vmatmul.bf16.gmra.mxu0 %v493
      %v856 = vpop.f32.mrf.mxu0
      %v857 = vadd.f32 %v768, %v856
      %v858 = vpop.f32.mrf.mxu0
      %v859 = vadd.f32 %v770, %v858
      %860 = vmatmul.bf16.gmra.mxu0 %v496
      %v861 = vpop.f32.mrf.mxu0
      %v862 = vadd.f32 %v773, %v861
      %v863 = vpop.f32.mrf.mxu0
      %v864 = vadd.f32 %v775, %v863
      %865 = vmatmul.bf16.gmra.mxu0 %v499
      %v866 = vpop.f32.mrf.mxu0
      %v867 = vadd.f32 %v778, %v866
      %v868 = vpop.f32.mrf.mxu0
      %v869 = vadd.f32 %v780, %v868
      %870 = vdwg.mxu0
      %871 = vmatpush.bf16.msra.mxu0 %v668
      %872 = vmatpush.bf16.msra.mxu0 %v667
      %873 = vmatpush.bf16.msra.mxu0 %v666
      %874 = vmatpush.bf16.msra.mxu0 %v665
      %875 = vmatpush.bf16.msra.mxu0 %v664
      %876 = vmatpush.bf16.msra.mxu0 %v663
      %877 = vmatpush.bf16.msra.mxu0 %v662
      %878 = vmatpush.bf16.msra.mxu0 %v661
      %879 = vmatmul.bf16.gmra.mxu0 %v455
      %v880 = vpop.f32.mrf.mxu0
      %v881 = vadd.f32 %v792, %v880
      %v882 = vpop.f32.mrf.mxu0
      %v883 = vadd.f32 %v794, %v882
      %884 = vmatmul.bf16.gmra.mxu0 %v458
      %v885 = vpop.f32.mrf.mxu0
      %v886 = vadd.f32 %v797, %v885
      %v887 = vpop.f32.mrf.mxu0
      %v888 = vadd.f32 %v799, %v887
      %889 = vmatmul.bf16.gmra.mxu0 %v461
      %v890 = vpop.f32.mrf.mxu0
      %v891 = vadd.f32 %v802, %v890
      %v892 = vpop.f32.mrf.mxu0
      %v893 = vadd.f32 %v804, %v892
      %894 = vmatmul.bf16.gmra.mxu0 %v464
      %v895 = vpop.f32.mrf.mxu0
      %v896 = vadd.f32 %v807, %v895
      %v897 = vpop.f32.mrf.mxu0
      %v898 = vadd.f32 %v809, %v897
      %899 = vmatmul.bf16.gmra.mxu0 %v467
      %v900 = vpop.f32.mrf.mxu0
      %v901 = vadd.f32 %v812, %v900
      %v902 = vpop.f32.mrf.mxu0
      %v903 = vadd.f32 %v814, %v902
      %904 = vmatmul.bf16.gmra.mxu0 %v470
      %v905 = vpop.f32.mrf.mxu0
      %v906 = vadd.f32 %v817, %v905
      %v907 = vpop.f32.mrf.mxu0
      %v908 = vadd.f32 %v819, %v907
      %909 = vmatmul.bf16.gmra.mxu0 %v473
      %v910 = vpop.f32.mrf.mxu0
      %v911 = vadd.f32 %v822, %v910
      %v912 = vpop.f32.mrf.mxu0
      %v913 = vadd.f32 %v824, %v912
      %914 = vmatmul.bf16.gmra.mxu0 %v476
      %v915 = vpop.f32.mrf.mxu0
      %v916 = vadd.f32 %v827, %v915
      %v917 = vpop.f32.mrf.mxu0
      %v918 = vadd.f32 %v829, %v917
      %919 = vmatmul.bf16.gmra.mxu0 %v479
      %v920 = vpop.f32.mrf.mxu0
      %v921 = vadd.f32 %v832, %v920
      %v922 = vpop.f32.mrf.mxu0
      %v923 = vadd.f32 %v834, %v922
      %924 = vmatmul.bf16.gmra.mxu0 %v482
      %v925 = vpop.f32.mrf.mxu0
      %v926 = vadd.f32 %v837, %v925
      %v927 = vpop.f32.mrf.mxu0
      %v928 = vadd.f32 %v839, %v927
      %929 = vmatmul.bf16.gmra.mxu0 %v485
      %v930 = vpop.f32.mrf.mxu0
      %v931 = vadd.f32 %v842, %v930
      %v932 = vpop.f32.mrf.mxu0
      %v933 = vadd.f32 %v844, %v932
      %934 = vmatmul.bf16.gmra.mxu0 %v488
      %v935 = vpop.f32.mrf.mxu0
      %v936 = vadd.f32 %v847, %v935
      %v937 = vpop.f32.mrf.mxu0
      %v938 = vadd.f32 %v849, %v937
      %939 = vmatmul.bf16.gmra.mxu0 %v491
      %v940 = vpop.f32.mrf.mxu0
      %v941 = vadd.f32 %v852, %v940
      %v942 = vpop.f32.mrf.mxu0
      %v943 = vadd.f32 %v854, %v942
      %944 = vmatmul.bf16.gmra.mxu0 %v494
      %v945 = vpop.f32.mrf.mxu0
      %v946 = vadd.f32 %v857, %v945
      %v947 = vpop.f32.mrf.mxu0
      %v948 = vadd.f32 %v859, %v947
      %949 = vmatmul.bf16.gmra.mxu0 %v497
      %v950 = vpop.f32.mrf.mxu0
      %v951 = vadd.f32 %v862, %v950
      %v952 = vpop.f32.mrf.mxu0
      %v953 = vadd.f32 %v864, %v952
      %954 = vmatmul.bf16.gmra.mxu0 %v500
      %v955 = vpop.f32.mrf.mxu0
      %v956 = vadd.f32 %v867, %v955
      %v957 = vpop.f32.mrf.mxu0
      %v958 = vadd.f32 %v869, %v957
      %959 = vdwg.mxu0
      %v960 = vlaneseq
      %v961 = vand.u32 %v960, 127
      %vm962 = vcmp.ge.s32.totalorder %v961, 18
      %v963 = vxor.u32 %v881, 2147483648
      %v964 = vxor.u32 %v883, 2147483648
      %v965 = vxor.u32 %v886, 2147483648
      %v966 = vxor.u32 %v888, 2147483648
      %v967 = vxor.u32 %v891, 2147483648
      %v968 = vxor.u32 %v893, 2147483648
      %v969 = vxor.u32 %v896, 2147483648
      %v970 = vxor.u32 %v898, 2147483648
      %v971 = vxor.u32 %v901, 2147483648
      %v972 = vxor.u32 %v903, 2147483648
      %v973 = vxor.u32 %v906, 2147483648
      %v974 = vxor.u32 %v908, 2147483648
      %v975 = vxor.u32 %v911, 2147483648
      %v976 = vxor.u32 %v913, 2147483648
      %v977 = vxor.u32 %v916, 2147483648
      %v978 = vxor.u32 %v918, 2147483648
      %v979 = vxor.u32 %v921, 2147483648
      %v980 = vxor.u32 %v923, 2147483648
      %v981 = vxor.u32 %v926, 2147483648
      %v982 = vxor.u32 %v928, 2147483648
      %v983 = vxor.u32 %v931, 2147483648
      %v984 = vxor.u32 %v933, 2147483648
      %v985 = vxor.u32 %v936, 2147483648
      %v986 = vxor.u32 %v938, 2147483648
      %v987 = vxor.u32 %v941, 2147483648
      %v988 = vxor.u32 %v943, 2147483648
      %v989 = vxor.u32 %v946, 2147483648
      %v990 = vxor.u32 %v948, 2147483648
      %v991 = vxor.u32 %v951, 2147483648
      %v992 = vxor.u32 %v953, 2147483648
      %v993 = vxor.u32 %v956, 2147483648
      %v994 = vxor.u32 %v958, 2147483648
      %v995 = vmul.f32 %v963, 1.442695
      %v996 = vpow.pop %v995
      %v997 = vmul.f32 %v964, 1.442695
      %v998 = vpow.pop %v997
      %v999 = vmul.f32 %v965, 1.442695
      %v1000 = vpow.pop %v999
      %v1001 = vmul.f32 %v966, 1.442695
      %v1002 = vpow.pop %v1001
      %v1003 = vmul.f32 %v967, 1.442695
      %v1004 = vpow.pop %v1003
      %v1005 = vmul.f32 %v968, 1.442695
      %v1006 = vpow.pop %v1005
      %v1007 = vmul.f32 %v969, 1.442695
      %v1008 = vpow.pop %v1007
      %v1009 = vmul.f32 %v970, 1.442695
      %v1010 = vpow.pop %v1009
      %v1011 = vmul.f32 %v971, 1.442695
      %v1012 = vpow.pop %v1011
      %v1013 = vmul.f32 %v972, 1.442695
      %v1014 = vpow.pop %v1013
      %v1015 = vmul.f32 %v973, 1.442695
      %v1016 = vpow.pop %v1015
      %v1017 = vmul.f32 %v974, 1.442695
      %v1018 = vpow.pop %v1017
      %v1019 = vmul.f32 %v975, 1.442695
      %v1020 = vpow.pop %v1019
      %v1021 = vmul.f32 %v976, 1.442695
      %v1022 = vpow.pop %v1021
      %v1023 = vmul.f32 %v977, 1.442695
      %v1024 = vpow.pop %v1023
      %v1025 = vmul.f32 %v978, 1.442695
      %v1026 = vpow.pop %v1025
      %v1027 = vmul.f32 %v979, 1.442695
      %v1028 = vpow.pop %v1027
      %v1029 = vmul.f32 %v980, 1.442695
      %v1030 = vpow.pop %v1029
      %v1031 = vmul.f32 %v981, 1.442695
      %v1032 = vpow.pop %v1031
      %v1033 = vmul.f32 %v982, 1.442695
      %v1034 = vpow.pop %v1033
      %v1035 = vmul.f32 %v983, 1.442695
      %v1036 = vpow.pop %v1035
      %v1037 = vmul.f32 %v984, 1.442695
      %v1038 = vpow.pop %v1037
      %v1039 = vmul.f32 %v985, 1.442695
      %v1040 = vpow.pop %v1039
      %v1041 = vmul.f32 %v986, 1.442695
      %v1042 = vpow.pop %v1041
      %v1043 = vmul.f32 %v987, 1.442695
      %v1044 = vpow.pop %v1043
      %v1045 = vmul.f32 %v988, 1.442695
      %v1046 = vpow.pop %v1045
      %v1047 = vmul.f32 %v989, 1.442695
      %v1048 = vpow.pop %v1047
      %v1049 = vmul.f32 %v990, 1.442695
      %v1050 = vpow.pop %v1049
      %v1051 = vmul.f32 %v991, 1.442695
      %v1052 = vpow.pop %v1051
      %v1053 = vmul.f32 %v992, 1.442695
      %v1054 = vpow.pop %v1053
      %v1055 = vmul.f32 %v993, 1.442695
      %v1056 = vpow.pop %v1055
      %v1057 = vmul.f32 %v994, 1.442695
      %v1058 = vpow.pop %v1057
      %v1059 = vadd.f32 %v996, 1.0
      %v1060 = vadd.f32 %v998, 1.0
      %v1061 = vadd.f32 %v1000, 1.0
      %v1062 = vadd.f32 %v1002, 1.0
      %v1063 = vadd.f32 %v1004, 1.0
      %v1064 = vadd.f32 %v1006, 1.0
      %v1065 = vadd.f32 %v1008, 1.0
      %v1066 = vadd.f32 %v1010, 1.0
      %v1067 = vadd.f32 %v1012, 1.0
      %v1068 = vadd.f32 %v1014, 1.0
      %v1069 = vadd.f32 %v1016, 1.0
      %v1070 = vadd.f32 %v1018, 1.0
      %v1071 = vadd.f32 %v1020, 1.0
      %v1072 = vadd.f32 %v1022, 1.0
      %v1073 = vadd.f32 %v1024, 1.0
      %v1074 = vadd.f32 %v1026, 1.0
      %v1075 = vadd.f32 %v1028, 1.0
      %v1076 = vadd.f32 %v1030, 1.0
      %v1077 = vadd.f32 %v1032, 1.0
      %v1078 = vadd.f32 %v1034, 1.0
      %v1079 = vadd.f32 %v1036, 1.0
      %v1080 = vadd.f32 %v1038, 1.0
      %v1081 = vadd.f32 %v1040, 1.0
      %v1082 = vadd.f32 %v1042, 1.0
      %v1083 = vadd.f32 %v1044, 1.0
      %v1084 = vadd.f32 %v1046, 1.0
      %v1085 = vadd.f32 %v1048, 1.0
      %v1086 = vadd.f32 %v1050, 1.0
      %v1087 = vadd.f32 %v1052, 1.0
      %v1088 = vadd.f32 %v1054, 1.0
      %v1089 = vadd.f32 %v1056, 1.0
      %v1090 = vadd.f32 %v1058, 1.0
      %v1091 = vrcp.pop %v1059
      %v1092 = vmul.f32 %v1059, %v1091
      %v1093 = vsub.f32 1.0, %v1092
      %v1094 = vmul.f32 %v1091, %v1093
      %v1095 = vadd.f32 %v1091, %v1094
      %vm1096 = vweird.f32 %v1059
      %vm1097 = vweird.f32 %v1091
      %vm1098 = vmor %vm1096, %vm1097
      %v1099 = vsel %vm1098, %v1091, %v1095
      %v1100 = vand.u32 2147483647, %v1059
      %vm1101 = vcmp.eq.f32.partialorder %v1100, 8.507059e+37
      %v1102 = vand.u32 %v1059, 2147483648
      %v1103 = vor.u32 1.1754944e-38, %v1102
      %v1104 = vsel %vm1101, %v1103, %v1099
      %v1105 = vmul.f32 1.0, %v1104
      %v1106 = vrcp.pop %v1060
      %v1107 = vmul.f32 %v1060, %v1106
      %v1108 = vsub.f32 1.0, %v1107
      %v1109 = vmul.f32 %v1106, %v1108
      %v1110 = vadd.f32 %v1106, %v1109
      %vm1111 = vweird.f32 %v1060
      %vm1112 = vweird.f32 %v1106
      %vm1113 = vmor %vm1111, %vm1112
      %v1114 = vsel %vm1113, %v1106, %v1110
      %v1115 = vand.u32 2147483647, %v1060
      %vm1116 = vcmp.eq.f32.partialorder %v1115, 8.507059e+37
      %v1117 = vand.u32 %v1060, 2147483648
      %v1118 = vor.u32 1.1754944e-38, %v1117
      %v1119 = vsel %vm1116, %v1118, %v1114
      %v1120 = vmul.f32 1.0, %v1119
      %v1121 = vrcp.pop %v1061
      %v1122 = vmul.f32 %v1061, %v1121
      %v1123 = vsub.f32 1.0, %v1122
      %v1124 = vmul.f32 %v1121, %v1123
      %v1125 = vadd.f32 %v1121, %v1124
      %vm1126 = vweird.f32 %v1061
      %vm1127 = vweird.f32 %v1121
      %vm1128 = vmor %vm1126, %vm1127
      %v1129 = vsel %vm1128, %v1121, %v1125
      %v1130 = vand.u32 2147483647, %v1061
      %vm1131 = vcmp.eq.f32.partialorder %v1130, 8.507059e+37
      %v1132 = vand.u32 %v1061, 2147483648
      %v1133 = vor.u32 1.1754944e-38, %v1132
      %v1134 = vsel %vm1131, %v1133, %v1129
      %v1135 = vmul.f32 1.0, %v1134
      %v1136 = vrcp.pop %v1062
      %v1137 = vmul.f32 %v1062, %v1136
      %v1138 = vsub.f32 1.0, %v1137
      %v1139 = vmul.f32 %v1136, %v1138
      %v1140 = vadd.f32 %v1136, %v1139
      %vm1141 = vweird.f32 %v1062
      %vm1142 = vweird.f32 %v1136
      %vm1143 = vmor %vm1141, %vm1142
      %v1144 = vsel %vm1143, %v1136, %v1140
      %v1145 = vand.u32 2147483647, %v1062
      %vm1146 = vcmp.eq.f32.partialorder %v1145, 8.507059e+37
      %v1147 = vand.u32 %v1062, 2147483648
      %v1148 = vor.u32 1.1754944e-38, %v1147
      %v1149 = vsel %vm1146, %v1148, %v1144
      %v1150 = vmul.f32 1.0, %v1149
      %v1151 = vrcp.pop %v1063
      %v1152 = vmul.f32 %v1063, %v1151
      %v1153 = vsub.f32 1.0, %v1152
      %v1154 = vmul.f32 %v1151, %v1153
      %v1155 = vadd.f32 %v1151, %v1154
      %vm1156 = vweird.f32 %v1063
      %vm1157 = vweird.f32 %v1151
      %vm1158 = vmor %vm1156, %vm1157
      %v1159 = vsel %vm1158, %v1151, %v1155
      %v1160 = vand.u32 2147483647, %v1063
      %vm1161 = vcmp.eq.f32.partialorder %v1160, 8.507059e+37
      %v1162 = vand.u32 %v1063, 2147483648
      %v1163 = vor.u32 1.1754944e-38, %v1162
      %v1164 = vsel %vm1161, %v1163, %v1159
      %v1165 = vmul.f32 1.0, %v1164
      %v1166 = vrcp.pop %v1064
      %v1167 = vmul.f32 %v1064, %v1166
      %v1168 = vsub.f32 1.0, %v1167
      %v1169 = vmul.f32 %v1166, %v1168
      %v1170 = vadd.f32 %v1166, %v1169
      %vm1171 = vweird.f32 %v1064
      %vm1172 = vweird.f32 %v1166
      %vm1173 = vmor %vm1171, %vm1172
      %v1174 = vsel %vm1173, %v1166, %v1170
      %v1175 = vand.u32 2147483647, %v1064
      %vm1176 = vcmp.eq.f32.partialorder %v1175, 8.507059e+37
      %v1177 = vand.u32 %v1064, 2147483648
      %v1178 = vor.u32 1.1754944e-38, %v1177
      %v1179 = vsel %vm1176, %v1178, %v1174
      %v1180 = vmul.f32 1.0, %v1179
      %v1181 = vrcp.pop %v1065
      %v1182 = vmul.f32 %v1065, %v1181
      %v1183 = vsub.f32 1.0, %v1182
      %v1184 = vmul.f32 %v1181, %v1183
      %v1185 = vadd.f32 %v1181, %v1184
      %vm1186 = vweird.f32 %v1065
      %vm1187 = vweird.f32 %v1181
      %vm1188 = vmor %vm1186, %vm1187
      %v1189 = vsel %vm1188, %v1181, %v1185
      %v1190 = vand.u32 2147483647, %v1065
      %vm1191 = vcmp.eq.f32.partialorder %v1190, 8.507059e+37
      %v1192 = vand.u32 %v1065, 2147483648
      %v1193 = vor.u32 1.1754944e-38, %v1192
      %v1194 = vsel %vm1191, %v1193, %v1189
      %v1195 = vmul.f32 1.0, %v1194
      %v1196 = vrcp.pop %v1066
      %v1197 = vmul.f32 %v1066, %v1196
      %v1198 = vsub.f32 1.0, %v1197
      %v1199 = vmul.f32 %v1196, %v1198
      %v1200 = vadd.f32 %v1196, %v1199
      %vm1201 = vweird.f32 %v1066
      %vm1202 = vweird.f32 %v1196
      %vm1203 = vmor %vm1201, %vm1202
      %v1204 = vsel %vm1203, %v1196, %v1200
      %v1205 = vand.u32 2147483647, %v1066
      %vm1206 = vcmp.eq.f32.partialorder %v1205, 8.507059e+37
      %v1207 = vand.u32 %v1066, 2147483648
      %v1208 = vor.u32 1.1754944e-38, %v1207
      %v1209 = vsel %vm1206, %v1208, %v1204
      %v1210 = vmul.f32 1.0, %v1209
      %v1211 = vrcp.pop %v1067
      %v1212 = vmul.f32 %v1067, %v1211
      %v1213 = vsub.f32 1.0, %v1212
      %v1214 = vmul.f32 %v1211, %v1213
      %v1215 = vadd.f32 %v1211, %v1214
      %vm1216 = vweird.f32 %v1067
      %vm1217 = vweird.f32 %v1211
      %vm1218 = vmor %vm1216, %vm1217
      %v1219 = vsel %vm1218, %v1211, %v1215
      %v1220 = vand.u32 2147483647, %v1067
      %vm1221 = vcmp.eq.f32.partialorder %v1220, 8.507059e+37
      %v1222 = vand.u32 %v1067, 2147483648
      %v1223 = vor.u32 1.1754944e-38, %v1222
      %v1224 = vsel %vm1221, %v1223, %v1219
      %v1225 = vmul.f32 1.0, %v1224
      %v1226 = vrcp.pop %v1068
      %v1227 = vmul.f32 %v1068, %v1226
      %v1228 = vsub.f32 1.0, %v1227
      %v1229 = vmul.f32 %v1226, %v1228
      %v1230 = vadd.f32 %v1226, %v1229
      %vm1231 = vweird.f32 %v1068
      %vm1232 = vweird.f32 %v1226
      %vm1233 = vmor %vm1231, %vm1232
      %v1234 = vsel %vm1233, %v1226, %v1230
      %v1235 = vand.u32 2147483647, %v1068
      %vm1236 = vcmp.eq.f32.partialorder %v1235, 8.507059e+37
      %v1237 = vand.u32 %v1068, 2147483648
      %v1238 = vor.u32 1.1754944e-38, %v1237
      %v1239 = vsel %vm1236, %v1238, %v1234
      %v1240 = vmul.f32 1.0, %v1239
      %v1241 = vrcp.pop %v1069
      %v1242 = vmul.f32 %v1069, %v1241
      %v1243 = vsub.f32 1.0, %v1242
      %v1244 = vmul.f32 %v1241, %v1243
      %v1245 = vadd.f32 %v1241, %v1244
      %vm1246 = vweird.f32 %v1069
      %vm1247 = vweird.f32 %v1241
      %vm1248 = vmor %vm1246, %vm1247
      %v1249 = vsel %vm1248, %v1241, %v1245
      %v1250 = vand.u32 2147483647, %v1069
      %vm1251 = vcmp.eq.f32.partialorder %v1250, 8.507059e+37
      %v1252 = vand.u32 %v1069, 2147483648
      %v1253 = vor.u32 1.1754944e-38, %v1252
      %v1254 = vsel %vm1251, %v1253, %v1249
      %v1255 = vmul.f32 1.0, %v1254
      %v1256 = vrcp.pop %v1070
      %v1257 = vmul.f32 %v1070, %v1256
      %v1258 = vsub.f32 1.0, %v1257
      %v1259 = vmul.f32 %v1256, %v1258
      %v1260 = vadd.f32 %v1256, %v1259
      %vm1261 = vweird.f32 %v1070
      %vm1262 = vweird.f32 %v1256
      %vm1263 = vmor %vm1261, %vm1262
      %v1264 = vsel %vm1263, %v1256, %v1260
      %v1265 = vand.u32 2147483647, %v1070
      %vm1266 = vcmp.eq.f32.partialorder %v1265, 8.507059e+37
      %v1267 = vand.u32 %v1070, 2147483648
      %v1268 = vor.u32 1.1754944e-38, %v1267
      %v1269 = vsel %vm1266, %v1268, %v1264
      %v1270 = vmul.f32 1.0, %v1269
      %v1271 = vrcp.pop %v1071
      %v1272 = vmul.f32 %v1071, %v1271
      %v1273 = vsub.f32 1.0, %v1272
      %v1274 = vmul.f32 %v1271, %v1273
      %v1275 = vadd.f32 %v1271, %v1274
      %vm1276 = vweird.f32 %v1071
      %vm1277 = vweird.f32 %v1271
      %vm1278 = vmor %vm1276, %vm1277
      %v1279 = vsel %vm1278, %v1271, %v1275
      %v1280 = vand.u32 2147483647, %v1071
      %vm1281 = vcmp.eq.f32.partialorder %v1280, 8.507059e+37
      %v1282 = vand.u32 %v1071, 2147483648
      %v1283 = vor.u32 1.1754944e-38, %v1282
      %v1284 = vsel %vm1281, %v1283, %v1279
      %v1285 = vmul.f32 1.0, %v1284
      %v1286 = vrcp.pop %v1072
      %v1287 = vmul.f32 %v1072, %v1286
      %v1288 = vsub.f32 1.0, %v1287
      %v1289 = vmul.f32 %v1286, %v1288
      %v1290 = vadd.f32 %v1286, %v1289
      %vm1291 = vweird.f32 %v1072
      %vm1292 = vweird.f32 %v1286
      %vm1293 = vmor %vm1291, %vm1292
      %v1294 = vsel %vm1293, %v1286, %v1290
      %v1295 = vand.u32 2147483647, %v1072
      %vm1296 = vcmp.eq.f32.partialorder %v1295, 8.507059e+37
      %v1297 = vand.u32 %v1072, 2147483648
      %v1298 = vor.u32 1.1754944e-38, %v1297
      %v1299 = vsel %vm1296, %v1298, %v1294
      %v1300 = vmul.f32 1.0, %v1299
      %v1301 = vrcp.pop %v1073
      %v1302 = vmul.f32 %v1073, %v1301
      %v1303 = vsub.f32 1.0, %v1302
      %v1304 = vmul.f32 %v1301, %v1303
      %v1305 = vadd.f32 %v1301, %v1304
      %vm1306 = vweird.f32 %v1073
      %vm1307 = vweird.f32 %v1301
      %vm1308 = vmor %vm1306, %vm1307
      %v1309 = vsel %vm1308, %v1301, %v1305
      %v1310 = vand.u32 2147483647, %v1073
      %vm1311 = vcmp.eq.f32.partialorder %v1310, 8.507059e+37
      %v1312 = vand.u32 %v1073, 2147483648
      %v1313 = vor.u32 1.1754944e-38, %v1312
      %v1314 = vsel %vm1311, %v1313, %v1309
      %v1315 = vmul.f32 1.0, %v1314
      %v1316 = vrcp.pop %v1074
      %v1317 = vmul.f32 %v1074, %v1316
      %v1318 = vsub.f32 1.0, %v1317
      %v1319 = vmul.f32 %v1316, %v1318
      %v1320 = vadd.f32 %v1316, %v1319
      %vm1321 = vweird.f32 %v1074
      %vm1322 = vweird.f32 %v1316
      %vm1323 = vmor %vm1321, %vm1322
      %v1324 = vsel %vm1323, %v1316, %v1320
      %v1325 = vand.u32 2147483647, %v1074
      %vm1326 = vcmp.eq.f32.partialorder %v1325, 8.507059e+37
      %v1327 = vand.u32 %v1074, 2147483648
      %v1328 = vor.u32 1.1754944e-38, %v1327
      %v1329 = vsel %vm1326, %v1328, %v1324
      %v1330 = vmul.f32 1.0, %v1329
      %v1331 = vrcp.pop %v1075
      %v1332 = vmul.f32 %v1075, %v1331
      %v1333 = vsub.f32 1.0, %v1332
      %v1334 = vmul.f32 %v1331, %v1333
      %v1335 = vadd.f32 %v1331, %v1334
      %vm1336 = vweird.f32 %v1075
      %vm1337 = vweird.f32 %v1331
      %vm1338 = vmor %vm1336, %vm1337
      %v1339 = vsel %vm1338, %v1331, %v1335
      %v1340 = vand.u32 2147483647, %v1075
      %vm1341 = vcmp.eq.f32.partialorder %v1340, 8.507059e+37
      %v1342 = vand.u32 %v1075, 2147483648
      %v1343 = vor.u32 1.1754944e-38, %v1342
      %v1344 = vsel %vm1341, %v1343, %v1339
      %v1345 = vmul.f32 1.0, %v1344
      %v1346 = vrcp.pop %v1076
      %v1347 = vmul.f32 %v1076, %v1346
      %v1348 = vsub.f32 1.0, %v1347
      %v1349 = vmul.f32 %v1346, %v1348
      %v1350 = vadd.f32 %v1346, %v1349
      %vm1351 = vweird.f32 %v1076
      %vm1352 = vweird.f32 %v1346
      %vm1353 = vmor %vm1351, %vm1352
      %v1354 = vsel %vm1353, %v1346, %v1350
      %v1355 = vand.u32 2147483647, %v1076
      %vm1356 = vcmp.eq.f32.partialorder %v1355, 8.507059e+37
      %v1357 = vand.u32 %v1076, 2147483648
      %v1358 = vor.u32 1.1754944e-38, %v1357
      %v1359 = vsel %vm1356, %v1358, %v1354
      %v1360 = vmul.f32 1.0, %v1359
      %v1361 = vrcp.pop %v1077
      %v1362 = vmul.f32 %v1077, %v1361
      %v1363 = vsub.f32 1.0, %v1362
      %v1364 = vmul.f32 %v1361, %v1363
      %v1365 = vadd.f32 %v1361, %v1364
      %vm1366 = vweird.f32 %v1077
      %vm1367 = vweird.f32 %v1361
      %vm1368 = vmor %vm1366, %vm1367
      %v1369 = vsel %vm1368, %v1361, %v1365
      %v1370 = vand.u32 2147483647, %v1077
      %vm1371 = vcmp.eq.f32.partialorder %v1370, 8.507059e+37
      %v1372 = vand.u32 %v1077, 2147483648
      %v1373 = vor.u32 1.1754944e-38, %v1372
      %v1374 = vsel %vm1371, %v1373, %v1369
      %v1375 = vmul.f32 1.0, %v1374
      %v1376 = vrcp.pop %v1078
      %v1377 = vmul.f32 %v1078, %v1376
      %v1378 = vsub.f32 1.0, %v1377
      %v1379 = vmul.f32 %v1376, %v1378
      %v1380 = vadd.f32 %v1376, %v1379
      %vm1381 = vweird.f32 %v1078
      %vm1382 = vweird.f32 %v1376
      %vm1383 = vmor %vm1381, %vm1382
      %v1384 = vsel %vm1383, %v1376, %v1380
      %v1385 = vand.u32 2147483647, %v1078
      %vm1386 = vcmp.eq.f32.partialorder %v1385, 8.507059e+37
      %v1387 = vand.u32 %v1078, 2147483648
      %v1388 = vor.u32 1.1754944e-38, %v1387
      %v1389 = vsel %vm1386, %v1388, %v1384
      %v1390 = vmul.f32 1.0, %v1389
      %v1391 = vrcp.pop %v1079
      %v1392 = vmul.f32 %v1079, %v1391
      %v1393 = vsub.f32 1.0, %v1392
      %v1394 = vmul.f32 %v1391, %v1393
      %v1395 = vadd.f32 %v1391, %v1394
      %vm1396 = vweird.f32 %v1079
      %vm1397 = vweird.f32 %v1391
      %vm1398 = vmor %vm1396, %vm1397
      %v1399 = vsel %vm1398, %v1391, %v1395
      %v1400 = vand.u32 2147483647, %v1079
      %vm1401 = vcmp.eq.f32.partialorder %v1400, 8.507059e+37
      %v1402 = vand.u32 %v1079, 2147483648
      %v1403 = vor.u32 1.1754944e-38, %v1402
      %v1404 = vsel %vm1401, %v1403, %v1399
      %v1405 = vmul.f32 1.0, %v1404
      %v1406 = vrcp.pop %v1080
      %v1407 = vmul.f32 %v1080, %v1406
      %v1408 = vsub.f32 1.0, %v1407
      %v1409 = vmul.f32 %v1406, %v1408
      %v1410 = vadd.f32 %v1406, %v1409
      %vm1411 = vweird.f32 %v1080
      %vm1412 = vweird.f32 %v1406
      %vm1413 = vmor %vm1411, %vm1412
      %v1414 = vsel %vm1413, %v1406, %v1410
      %v1415 = vand.u32 2147483647, %v1080
      %vm1416 = vcmp.eq.f32.partialorder %v1415, 8.507059e+37
      %v1417 = vand.u32 %v1080, 2147483648
      %v1418 = vor.u32 1.1754944e-38, %v1417
      %v1419 = vsel %vm1416, %v1418, %v1414
      %v1420 = vmul.f32 1.0, %v1419
      %v1421 = vrcp.pop %v1081
      %v1422 = vmul.f32 %v1081, %v1421
      %v1423 = vsub.f32 1.0, %v1422
      %v1424 = vmul.f32 %v1421, %v1423
      %v1425 = vadd.f32 %v1421, %v1424
      %vm1426 = vweird.f32 %v1081
      %vm1427 = vweird.f32 %v1421
      %vm1428 = vmor %vm1426, %vm1427
      %v1429 = vsel %vm1428, %v1421, %v1425
      %v1430 = vand.u32 2147483647, %v1081
      %vm1431 = vcmp.eq.f32.partialorder %v1430, 8.507059e+37
      %v1432 = vand.u32 %v1081, 2147483648
      %v1433 = vor.u32 1.1754944e-38, %v1432
      %v1434 = vsel %vm1431, %v1433, %v1429
      %v1435 = vmul.f32 1.0, %v1434
      %v1436 = vrcp.pop %v1082
      %v1437 = vmul.f32 %v1082, %v1436
      %v1438 = vsub.f32 1.0, %v1437
      %v1439 = vmul.f32 %v1436, %v1438
      %v1440 = vadd.f32 %v1436, %v1439
      %vm1441 = vweird.f32 %v1082
      %vm1442 = vweird.f32 %v1436
      %vm1443 = vmor %vm1441, %vm1442
      %v1444 = vsel %vm1443, %v1436, %v1440
      %v1445 = vand.u32 2147483647, %v1082
      %vm1446 = vcmp.eq.f32.partialorder %v1445, 8.507059e+37
      %v1447 = vand.u32 %v1082, 2147483648
      %v1448 = vor.u32 1.1754944e-38, %v1447
      %v1449 = vsel %vm1446, %v1448, %v1444
      %v1450 = vmul.f32 1.0, %v1449
      %v1451 = vrcp.pop %v1083
      %v1452 = vmul.f32 %v1083, %v1451
      %v1453 = vsub.f32 1.0, %v1452
      %v1454 = vmul.f32 %v1451, %v1453
      %v1455 = vadd.f32 %v1451, %v1454
      %vm1456 = vweird.f32 %v1083
      %vm1457 = vweird.f32 %v1451
      %vm1458 = vmor %vm1456, %vm1457
      %v1459 = vsel %vm1458, %v1451, %v1455
      %v1460 = vand.u32 2147483647, %v1083
      %vm1461 = vcmp.eq.f32.partialorder %v1460, 8.507059e+37
      %v1462 = vand.u32 %v1083, 2147483648
      %v1463 = vor.u32 1.1754944e-38, %v1462
      %v1464 = vsel %vm1461, %v1463, %v1459
      %v1465 = vmul.f32 1.0, %v1464
      %v1466 = vrcp.pop %v1084
      %v1467 = vmul.f32 %v1084, %v1466
      %v1468 = vsub.f32 1.0, %v1467
      %v1469 = vmul.f32 %v1466, %v1468
      %v1470 = vadd.f32 %v1466, %v1469
      %vm1471 = vweird.f32 %v1084
      %vm1472 = vweird.f32 %v1466
      %vm1473 = vmor %vm1471, %vm1472
      %v1474 = vsel %vm1473, %v1466, %v1470
      %v1475 = vand.u32 2147483647, %v1084
      %vm1476 = vcmp.eq.f32.partialorder %v1475, 8.507059e+37
      %v1477 = vand.u32 %v1084, 2147483648
      %v1478 = vor.u32 1.1754944e-38, %v1477
      %v1479 = vsel %vm1476, %v1478, %v1474
      %v1480 = vmul.f32 1.0, %v1479
      %v1481 = vrcp.pop %v1085
      %v1482 = vmul.f32 %v1085, %v1481
      %v1483 = vsub.f32 1.0, %v1482
      %v1484 = vmul.f32 %v1481, %v1483
      %v1485 = vadd.f32 %v1481, %v1484
      %vm1486 = vweird.f32 %v1085
      %vm1487 = vweird.f32 %v1481
      %vm1488 = vmor %vm1486, %vm1487
      %v1489 = vsel %vm1488, %v1481, %v1485
      %v1490 = vand.u32 2147483647, %v1085
      %vm1491 = vcmp.eq.f32.partialorder %v1490, 8.507059e+37
      %v1492 = vand.u32 %v1085, 2147483648
      %v1493 = vor.u32 1.1754944e-38, %v1492
      %v1494 = vsel %vm1491, %v1493, %v1489
      %v1495 = vmul.f32 1.0, %v1494
      %v1496 = vrcp.pop %v1086
      %v1497 = vmul.f32 %v1086, %v1496
      %v1498 = vsub.f32 1.0, %v1497
      %v1499 = vmul.f32 %v1496, %v1498
      %v1500 = vadd.f32 %v1496, %v1499
      %vm1501 = vweird.f32 %v1086
      %vm1502 = vweird.f32 %v1496
      %vm1503 = vmor %vm1501, %vm1502
      %v1504 = vsel %vm1503, %v1496, %v1500
      %v1505 = vand.u32 2147483647, %v1086
      %vm1506 = vcmp.eq.f32.partialorder %v1505, 8.507059e+37
      %v1507 = vand.u32 %v1086, 2147483648
      %v1508 = vor.u32 1.1754944e-38, %v1507
      %v1509 = vsel %vm1506, %v1508, %v1504
      %v1510 = vmul.f32 1.0, %v1509
      %v1511 = vrcp.pop %v1087
      %v1512 = vmul.f32 %v1087, %v1511
      %v1513 = vsub.f32 1.0, %v1512
      %v1514 = vmul.f32 %v1511, %v1513
      %v1515 = vadd.f32 %v1511, %v1514
      %vm1516 = vweird.f32 %v1087
      %vm1517 = vweird.f32 %v1511
      %vm1518 = vmor %vm1516, %vm1517
      %v1519 = vsel %vm1518, %v1511, %v1515
      %v1520 = vand.u32 2147483647, %v1087
      %vm1521 = vcmp.eq.f32.partialorder %v1520, 8.507059e+37
      %v1522 = vand.u32 %v1087, 2147483648
      %v1523 = vor.u32 1.1754944e-38, %v1522
      %v1524 = vsel %vm1521, %v1523, %v1519
      %v1525 = vmul.f32 1.0, %v1524
      %v1526 = vrcp.pop %v1088
      %v1527 = vmul.f32 %v1088, %v1526
      %v1528 = vsub.f32 1.0, %v1527
      %v1529 = vmul.f32 %v1526, %v1528
      %v1530 = vadd.f32 %v1526, %v1529
      %vm1531 = vweird.f32 %v1088
      %vm1532 = vweird.f32 %v1526
      %vm1533 = vmor %vm1531, %vm1532
      %v1534 = vsel %vm1533, %v1526, %v1530
      %v1535 = vand.u32 2147483647, %v1088
      %vm1536 = vcmp.eq.f32.partialorder %v1535, 8.507059e+37
      %v1537 = vand.u32 %v1088, 2147483648
      %v1538 = vor.u32 1.1754944e-38, %v1537
      %v1539 = vsel %vm1536, %v1538, %v1534
      %v1540 = vmul.f32 1.0, %v1539
      %v1541 = vrcp.pop %v1089
      %v1542 = vmul.f32 %v1089, %v1541
      %v1543 = vsub.f32 1.0, %v1542
      %v1544 = vmul.f32 %v1541, %v1543
      %v1545 = vadd.f32 %v1541, %v1544
      %vm1546 = vweird.f32 %v1089
      %vm1547 = vweird.f32 %v1541
      %vm1548 = vmor %vm1546, %vm1547
      %v1549 = vsel %vm1548, %v1541, %v1545
      %v1550 = vand.u32 2147483647, %v1089
      %vm1551 = vcmp.eq.f32.partialorder %v1550, 8.507059e+37
      %v1552 = vand.u32 %v1089, 2147483648
      %v1553 = vor.u32 1.1754944e-38, %v1552
      %v1554 = vsel %vm1551, %v1553, %v1549
      %v1555 = vmul.f32 1.0, %v1554
      %v1556 = vrcp.pop %v1090
      %v1557 = vmul.f32 %v1090, %v1556
      %v1558 = vsub.f32 1.0, %v1557
      %v1559 = vmul.f32 %v1556, %v1558
      %v1560 = vadd.f32 %v1556, %v1559
      %vm1561 = vweird.f32 %v1090
      %vm1562 = vweird.f32 %v1556
      %vm1563 = vmor %vm1561, %vm1562
      %v1564 = vsel %vm1563, %v1556, %v1560
      %v1565 = vand.u32 2147483647, %v1090
      %vm1566 = vcmp.eq.f32.partialorder %v1565, 8.507059e+37
      %v1567 = vand.u32 %v1090, 2147483648
      %v1568 = vor.u32 1.1754944e-38, %v1567
      %v1569 = vsel %vm1566, %v1568, %v1564
      %v1570 = vmul.f32 1.0, %v1569
      %v1571 = vsel %vm962, %v1105, %v881
      %v1572 = vsel %vm962, %v1120, %v883
      %v1573 = vsel %vm962, %v1135, %v886
      %v1574 = vsel %vm962, %v1150, %v888
      %v1575 = vsel %vm962, %v1165, %v891
      %v1576 = vsel %vm962, %v1180, %v893
      %v1577 = vsel %vm962, %v1195, %v896
      %v1578 = vsel %vm962, %v1210, %v898
      %v1579 = vsel %vm962, %v1225, %v901
      %v1580 = vsel %vm962, %v1240, %v903
      %v1581 = vsel %vm962, %v1255, %v906
      %v1582 = vsel %vm962, %v1270, %v908
      %v1583 = vsel %vm962, %v1285, %v911
      %v1584 = vsel %vm962, %v1300, %v913
      %v1585 = vsel %vm962, %v1315, %v916
      %v1586 = vsel %vm962, %v1330, %v918
      %v1587 = vsel %vm962, %v1345, %v921
      %v1588 = vsel %vm962, %v1360, %v923
      %v1589 = vsel %vm962, %v1375, %v926
      %v1590 = vsel %vm962, %v1390, %v928
      %v1591 = vsel %vm962, %v1405, %v931
      %v1592 = vsel %vm962, %v1420, %v933
      %v1593 = vsel %vm962, %v1435, %v936
      %v1594 = vsel %vm962, %v1450, %v938
      %v1595 = vsel %vm962, %v1465, %v941
      %v1596 = vsel %vm962, %v1480, %v943
      %v1597 = vsel %vm962, %v1495, %v946
      %v1598 = vsel %vm962, %v1510, %v948
      %v1599 = vsel %vm962, %v1525, %v951
      %v1600 = vsel %vm962, %v1540, %v953
      %v1601 = vsel %vm962, %v1555, %v956
      %v1602 = vsel %vm962, %v1570, %v958
      %1603 = vst [vmem:[%s175] sm:$0xff] %v1571
      %1604 = vst [vmem:[%s175 + $0x8] sm:$0xff] %v1572
      %1605 = vst [vmem:[%s175 + $0x10] sm:$0xff] %v1573
      %1606 = vst [vmem:[%s175 + $0x18] sm:$0xff] %v1574
      %1607 = vst [vmem:[%s175 + $0x20] sm:$0xff] %v1575
      %1608 = vst [vmem:[%s175 + $0x28] sm:$0xff] %v1576
      %1609 = vst [vmem:[%s175 + $0x30] sm:$0xff] %v1577
      %1610 = vst [vmem:[%s175 + $0x38] sm:$0xff] %v1578
      %1611 = vst [vmem:[%s175 + $0x40] sm:$0xff] %v1579
      %1612 = vst [vmem:[%s175 + $0x48] sm:$0xff] %v1580
      %1613 = vst [vmem:[%s175 + $0x50] sm:$0xff] %v1581
      %1614 = vst [vmem:[%s175 + $0x58] sm:$0xff] %v1582
      %1615 = vst [vmem:[%s175 + $0x60] sm:$0xff] %v1583
      %1616 = vst [vmem:[%s175 + $0x68] sm:$0xff] %v1584
      %1617 = vst [vmem:[%s175 + $0x70] sm:$0xff] %v1585
      %1618 = vst [vmem:[%s175 + $0x78] sm:$0xff] %v1586
      %1619 = vst [vmem:[%s175 + $0x80] sm:$0xff] %v1587
      %1620 = vst [vmem:[%s175 + $0x88] sm:$0xff] %v1588
      %1621 = vst [vmem:[%s175 + $0x90] sm:$0xff] %v1589
      %1622 = vst [vmem:[%s175 + $0x98] sm:$0xff] %v1590
      %1623 = vst [vmem:[%s175 + $0xa0] sm:$0xff] %v1591
      %1624 = vst [vmem:[%s175 + $0xa8] sm:$0xff] %v1592
      %1625 = vst [vmem:[%s175 + $0xb0] sm:$0xff] %v1593
      %1626 = vst [vmem:[%s175 + $0xb8] sm:$0xff] %v1594
      %1627 = vst [vmem:[%s175 + $0xc0] sm:$0xff] %v1595
      %1628 = vst [vmem:[%s175 + $0xc8] sm:$0xff] %v1596
      %1629 = vst [vmem:[%s175 + $0xd0] sm:$0xff] %v1597
      %1630 = vst [vmem:[%s175 + $0xd8] sm:$0xff] %v1598
      %1631 = vst [vmem:[%s175 + $0xe0] sm:$0xff] %v1599
      %1632 = vst [vmem:[%s175 + $0xe8] sm:$0xff] %v1600
      %1633 = vst [vmem:[%s175 + $0xf0] sm:$0xff] %v1601
      %1634 = vst [vmem:[%s175 + $0xf8] sm:$0xff] %v1602
      %s1635 = smul.u32 32, %s14
      %p1636 = scmp.lt.s32.totalorder %s1635, 63
      %s1637 = scalar_select %p1636, %s1635, 63
      %s1638 = smul.addr %s1637, 8
      %s1639 = scalar_lea.vmem %s3, %s1638
      // Predicated region
      $region33: #{conv_update_forward.5} parent=31 // pred_check
        %p1640 = pneg %p100
      $region34: #{conv_update_forward.5} parent=31 // pred_check_branch
        %1642 = sbr.rel (%p1640) target = $region36
      $region35: #{conv_update_forward.5} parent=31 // pred_region
        %s1643 = smul.u32 32, %s14
      $region36: #{conv_update_forward.5} parent=31 // pred_fallthru
        _
    $region32: #{conv_update_forward.5} parent=5 // pred_fallthru
      _
    %p1644 = scmp.le.s32.totalorder 2, %s9
    // Predicated region
    $region37: #{conv_update_forward.5} parent=5 // pred_check
      %p1645 = pneg %p1644
    $region38: #{conv_update_forward.5} parent=5 // pred_check_branch
      %1647 = sbr.rel (%p1645) target = $region40
    $region39: #{conv_update_forward.5} parent=5 // pred_region
      %s1648 = ssub.s32 %s9, 2
      // Predicated region
      $region41: #{conv_update_forward.5} parent=39 // pred_check
        %p1649 = pneg %p106
      $region42: #{conv_update_forward.5} parent=39 // pred_check_branch
        %1651 = sbr.rel (%p1649) target = $region44
      $region43: #{conv_update_forward.5} parent=39 // pred_region
        %s1652 = smul.u32 32, %s15
        %p1653 = scmp.lt.s32.totalorder %s1652, 63
        %s1654 = scalar_select %p1653, %s1652, 63
        %s1655 = smul.addr %s1654, 8
        %s1656 = scalar_lea.vmem %s3, %s1655
      $region44: #{conv_update_forward.5} parent=39 // pred_fallthru
        _
    $region40: #{conv_update_forward.5} parent=5 // pred_fallthru
      _
  $region6: #{conv_update_forward.5} parent=0 // loop_footer
    %s13 = sadd.s32 1, %s9
  $region7: #{conv_update_forward.5} parent=0 // loop_footer_branch
    %8 = sbr.rel target = $region3
  $region8: #{conv_update_forward.5} parent=0 // loop_exit
    _

// kernel: conv_update_forward.6
$region0: #{conv_update_forward.6}
  #allocation0 [shape = 'u32[]', space=smem, size = 0x4, offset = 0x4, fixed_abs, tag = 'smem constant byte address 0x4 - core index']
  #allocation1 [shape = 'u32[72,128]{1,0:T(1,128)}', space=vmem, size = 0x9000, scoped, tag = 'internal scratch']
  %s0 = inlined_call_operand.vmem [shape: bf16[512,384], index: 0, kind: input, shape index: {}]
  %s1 = inlined_call_operand.vmem [shape: bf16[384,128], index: 1, kind: input, shape index: {}]
  %s2 = inlined_call_operand.vmem [shape: f32[1,128], index: 2, kind: input, shape index: {}]
  %s3 = inlined_call_operand.vmem [shape: f32[512,128], index: 3, kind: output, shape index: {}]
  %s4 = sld [smem:[#allocation0]]
  $region45: #{conv_update_forward.6} parent=0
    _
  %s6 = ssub.s32 1, %s4
  %s7 = scalar_select 0, %s6, %s4
  loop: start=0, step=1, limit=4
  $region2: #{conv_update_forward.6} parent=0 // loop_pre_header
    _
  $region3: #{conv_update_forward.6} parent=0 // loop_header
    %s9 = sphi 0, %s13
    %p10 = scmp.ge.s32.totalorder %s9, 4
    %s19 = sphi 0, %s21
    %s22 = sphi 0, %s19
    %s23 = sphi 0, %s22
    %s39 = sphi 0, %s23
    %s43 = sphi 0, %s43
    %s45 = sphi 0, %s43
    %s46 = sphi 0, %s45
    %s60 = sphi 0, %s46
    %s64 = sphi 0, %s64
    %s66 = sphi 0, %s64
    %s67 = sphi 0, %s66
    %s81 = sphi 0, %s67
    %s87 = sphi 0, %s89
    %s90 = sphi 0, %s87
    %s91 = sphi 0, %s90
    %s107 = sphi 0, %s91
  $region4: #{conv_update_forward.6} parent=0 // loop_header_branch
    %12 = sbr.rel (%p10) target = $region8
  $region5: #{conv_update_forward.6} parent=0 // loop_body
    %s14 = ssub.s32 %s9, 1
    %s15 = ssub.s32 %s9, 2
    %s16 = sadd.s32 %s9, 1
    %s17 = ssub.s32 %s9, %s16
    %p18 = scmp.eq.s32.totalorder %s17, 0
    %s20 = sadd.s32 %s19, 1
    %s21 = scalar_select %p18, %s19, %s20
    %p24 = pneg %p18
    %p25 = scmp.eq.s32.totalorder %s9, 1
    %p26 = por %p24, %p25
    %p27 = scmp.ne.s32.totalorder %s19, %s22
    %p28 = scmp.eq.s32.totalorder %s9, 0
    %p29 = por %p27, %p28
    %p30 = scmp.ne.s32.totalorder %s19, %s22
    %p31 = scmp.eq.s32.totalorder %s14, 1
    %p32 = por %p30, %p31
    %p33 = scmp.ne.s32.totalorder %s22, %s23
    %p34 = scmp.eq.s32.totalorder %s14, 0
    %p35 = por %p33, %p34
    %p36 = scmp.ne.s32.totalorder %s22, %s23
    %p37 = scmp.eq.s32.totalorder %s15, 1
    %p38 = por %p36, %p37
    %p40 = scmp.ne.s32.totalorder %s23, %s39
    %p41 = scmp.eq.s32.totalorder %s15, 0
    %p42 = por %p40, %p41
    %s44 = sadd.s32 %s43, 1
    %p47 = scmp.eq.s32.totalorder %s9, 1
    %p48 = scmp.ne.s32.totalorder %s43, %s45
    %p49 = scmp.eq.s32.totalorder %s9, 0
    %p50 = por %p48, %p49
    %p51 = scmp.ne.s32.totalorder %s43, %s45
    %p52 = scmp.eq.s32.totalorder %s14, 1
    %p53 = por %p51, %p52
    %p54 = scmp.ne.s32.totalorder %s45, %s46
    %p55 = scmp.eq.s32.totalorder %s14, 0
    %p56 = por %p54, %p55
    %p57 = scmp.ne.s32.totalorder %s45, %s46
    %p58 = scmp.eq.s32.totalorder %s15, 1
    %p59 = por %p57, %p58
    %p61 = scmp.ne.s32.totalorder %s46, %s60
    %p62 = scmp.eq.s32.totalorder %s15, 0
    %p63 = por %p61, %p62
    %s65 = sadd.s32 %s64, 1
    %p68 = scmp.eq.s32.totalorder %s9, 1
    %p69 = scmp.ne.s32.totalorder %s64, %s66
    %p70 = scmp.eq.s32.totalorder %s9, 0
    %p71 = por %p69, %p70
    %p72 = scmp.ne.s32.totalorder %s64, %s66
    %p73 = scmp.eq.s32.totalorder %s14, 1
    %p74 = por %p72, %p73
    %p75 = scmp.ne.s32.totalorder %s66, %s67
    %p76 = scmp.eq.s32.totalorder %s14, 0
    %p77 = por %p75, %p76
    %p78 = scmp.ne.s32.totalorder %s66, %s67
    %p79 = scmp.eq.s32.totalorder %s15, 1
    %p80 = por %p78, %p79
    %p82 = scmp.ne.s32.totalorder %s67, %s81
    %p83 = scmp.eq.s32.totalorder %s15, 0
    %p84 = por %p82, %p83
    %s85 = ssub.s32 %s9, %s16
    %p86 = scmp.eq.s32.totalorder %s85, 0
    %s88 = sadd.s32 %s87, 1
    %s89 = scalar_select %p86, %s87, %s88
    %p92 = pneg %p86
    %p93 = scmp.eq.s32.totalorder %s9, 1
    %p94 = por %p92, %p93
    %p95 = scmp.ne.s32.totalorder %s87, %s90
    %p96 = scmp.eq.s32.totalorder %s9, 0
    %p97 = por %p95, %p96
    %p98 = scmp.ne.s32.totalorder %s87, %s90
    %p99 = scmp.eq.s32.totalorder %s14, 1
    %p100 = por %p98, %p99
    %p101 = scmp.ne.s32.totalorder %s90, %s91
    %p102 = scmp.eq.s32.totalorder %s14, 0
    %p103 = por %p101, %p102
    %p104 = scmp.ne.s32.totalorder %s90, %s91
    %p105 = scmp.eq.s32.totalorder %s15, 1
    %p106 = por %p104, %p105
    %p108 = scmp.ne.s32.totalorder %s91, %s107
    %p109 = scmp.eq.s32.totalorder %s15, 0
    %p110 = por %p108, %p109
    %p111 = scmp.le.s32.totalorder 1, %s9
    %p112 = scmp.lt.s32.totalorder %s9, 3
    %p113 = pnand %p111, %p112
    %p114 = pneg %p113
    // Predicated region
    $region9: #{conv_update_forward.6} parent=5 // pred_check
      _
    $region10: #{conv_update_forward.6} parent=5 // pred_check_branch
      %116 = sbr.rel (%p113) target = $region12
    $region11: #{conv_update_forward.6} parent=5 // pred_region
      %s117 = ssub.s32 %s9, 1
      // Predicated region
      $region13: #{conv_update_forward.6} parent=11 // pred_check
        %p118 = pneg %p56
      $region14: #{conv_update_forward.6} parent=11 // pred_check_branch
        %120 = sbr.rel (%p118) target = $region16
      $region15: #{conv_update_forward.6} parent=11 // pred_region
        _
      $region16: #{conv_update_forward.6} parent=11 // pred_fallthru
        _
      // Predicated region
      $region17: #{conv_update_forward.6} parent=11 // pred_check
        %p121 = pneg %p77
      $region18: #{conv_update_forward.6} parent=11 // pred_check_branch
        %123 = sbr.rel (%p121) target = $region20
      $region19: #{conv_update_forward.6} parent=11 // pred_region
        _
      $region20: #{conv_update_forward.6} parent=11 // pred_fallthru
        _
    $region12: #{conv_update_forward.6} parent=5 // pred_fallthru
      _
    %p124 = scmp.lt.s32.totalorder %s9, 2
    // Predicated region
    $region21: #{conv_update_forward.6} parent=5 // pred_check
      %p125 = pneg %p124
    $region22: #{conv_update_forward.6} parent=5 // pred_check_branch
      %127 = sbr.rel (%p125) target = $region24
    $region23: #{conv_update_forward.6} parent=5 // pred_region
      // Predicated region
      $region25: #{conv_update_forward.6} parent=23 // pred_check
        %p128 = pneg %p29
      $region26: #{conv_update_forward.6} parent=23 // pred_check_branch
        %130 = sbr.rel (%p128) target = $region28
      $region27: #{conv_update_forward.6} parent=23 // pred_region
        %s131 = smul.u32 32, %s9
        %p132 = scmp.lt.s32.totalorder %s131, 63
        %s133 = scalar_select %p132, %s131, 63
        %s134 = smul.addr %s133, 3
        %s135 = smul.addr %s134, 4
        %s136 = scalar_lea.vmem %s0, %s135
        %s137 = smul.u32 32, %s9
      $region28: #{conv_update_forward.6} parent=23 // pred_fallthru
        _
    $region24: #{conv_update_forward.6} parent=5 // pred_fallthru
      _
    %p138 = scmp.le.s32.totalorder 1, %s9
    %p139 = scmp.lt.s32.totalorder %s9, 3
    %p140 = pnand %p138, %p139
    %p141 = pneg %p140
    // Predicated region
    $region29: #{conv_update_forward.6} parent=5 // pred_check
      _
    $region30: #{conv_update_forward.6} parent=5 // pred_check_branch
      %143 = sbr.rel (%p140) target = $region32
    $region31: #{conv_update_forward.6} parent=5 // pred_region
      %s144 = ssub.s32 %s9, 1
      %s145 = smul.u32 32, %s14
      %p146 = scmp.lt.s32.totalorder %s145, 63
      %s147 = scalar_select %p146, %s145, 63
      %s148 = smul.addr %s147, 3
      %s149 = smul.addr %s148, 4
      %s150 = scalar_lea.vmem %s0, %s149
      %p151 = pneg %p35
      %p152 = pneg %p32
      %p153 = pneg %p56
      %p154 = pneg %p53
      %p155 = pneg %p77
      %p156 = pneg %p74
      %p157 = pneg %p103
      %p158 = pneg %p100
      %s159 = smul.u32 32, %s14
      %p160 = scmp.lt.s32.totalorder %s159, 63
      %s161 = scalar_select %p160, %s159, 63
      %s162 = smul.addr %s161, 8
      %s163 = scalar_lea.vmem %s3, %s162
      %s164 = smul.u32 32, %s14
      %p165 = scmp.lt.s32.totalorder %s164, 63
      %s166 = scalar_select %p165, %s164, 63
      %s167 = smul.addr %s166, 3
      %s168 = smul.addr %s167, 4
      %s169 = scalar_lea.vmem %s0, %s168
      %s170 = smul.u32 32, %s14
      %s171 = smul.u32 32, %s14
      %p172 = scmp.lt.s32.totalorder %s171, 63
      %s173 = scalar_select %p172, %s171, 63
      %s174 = smul.addr %s173, 8
      %s175 = scalar_lea.vmem %s3, %s174
      %s176 = smul.u32 32, %s14
      %v177 = vld [vmem:[%s169] sm:$0xff]
      %v178 = vld [vmem:[%s169 + $0x8] sm:$0xf]
      %v179 = vld [vmem:[%s169 + $0xc] sm:$0xff]
      %v180 = vld [vmem:[%s169 + $0x14] sm:$0xf]
      %v181 = vld [vmem:[%s169 + $0x18] sm:$0xff]
      %v182 = vld [vmem:[%s169 + $0x20] sm:$0xf]
      %v183 = vld [vmem:[%s169 + $0x24] sm:$0xff]
      %v184 = vld [vmem:[%s169 + $0x2c] sm:$0xf]
      %v185 = vld [vmem:[%s169 + $0x30] sm:$0xff]
      %v186 = vld [vmem:[%s169 + $0x38] sm:$0xf]
      %v187 = vld [vmem:[%s169 + $0x3c] sm:$0xff]
      %v188 = vld [vmem:[%s169 + $0x44] sm:$0xf]
      %v189 = vld [vmem:[%s169 + $0x48] sm:$0xff]
      %v190 = vld [vmem:[%s169 + $0x50] sm:$0xf]
      %v191 = vld [vmem:[%s169 + $0x54] sm:$0xff]
      %v192 = vld [vmem:[%s169 + $0x5c] sm:$0xf]
      %v193 = vld [vmem:[%s169 + $0x60] sm:$0xff]
      %v194 = vld [vmem:[%s169 + $0x68] sm:$0xf]
      %v195 = vld [vmem:[%s169 + $0x6c] sm:$0xff]
      %v196 = vld [vmem:[%s169 + $0x74] sm:$0xf]
      %v197 = vld [vmem:[%s169 + $0x78] sm:$0xff]
      %v198 = vld [vmem:[%s169 + $0x80] sm:$0xf]
      %v199 = vld [vmem:[%s169 + $0x84] sm:$0xff]
      %v200 = vld [vmem:[%s169 + $0x8c] sm:$0xf]
      %v201 = vld [vmem:[%s169 + $0x90] sm:$0xff]
      %v202 = vld [vmem:[%s169 + $0x98] sm:$0xf]
      %v203 = vld [vmem:[%s169 + $0x9c] sm:$0xff]
      %v204 = vld [vmem:[%s169 + $0xa4] sm:$0xf]
      %v205 = vld [vmem:[%s169 + $0xa8] sm:$0xff]
      %v206 = vld [vmem:[%s169 + $0xb0] sm:$0xf]
      %v207 = vld [vmem:[%s169 + $0xb4] sm:$0xff]
      %v208 = vld [vmem:[%s169 + $0xbc] sm:$0xf]
      %v209 = vld [vmem:[%s169 + $0xc0] sm:$0xff]
      %v210 = vld [vmem:[%s169 + $0xc8] sm:$0xf]
      %v211 = vld [vmem:[%s169 + $0xcc] sm:$0xff]
      %v212 = vld [vmem:[%s169 + $0xd4] sm:$0xf]
      %v213 = vld [vmem:[%s169 + $0xd8] sm:$0xff]
      %v214 = vld [vmem:[%s169 + $0xe0] sm:$0xf]
      %v215 = vld [vmem:[%s169 + $0xe4] sm:$0xff]
      %v216 = vld [vmem:[%s169 + $0xec] sm:$0xf]
      %v217 = vld [vmem:[%s169 + $0xf0] sm:$0xff]
      %v218 = vld [vmem:[%s169 + $0xf8] sm:$0xf]
      %v219 = vld [vmem:[%s169 + $0xfc] sm:$0xff]
      %v220 = vld [vmem:[%s169 + $0x104] sm:$0xf]
      %v221 = vld [vmem:[%s169 + $0x108] sm:$0xff]
      %v222 = vld [vmem:[%s169 + $0x110] sm:$0xf]
      %v223 = vld [vmem:[%s169 + $0x114] sm:$0xff]
      %v224 = vld [vmem:[%s169 + $0x11c] sm:$0xf]
      %v225 = vld [vmem:[%s169 + $0x120] sm:$0xff]
      %v226 = vld [vmem:[%s169 + $0x128] sm:$0xf]
      %v227 = vld [vmem:[%s169 + $0x12c] sm:$0xff]
      %v228 = vld [vmem:[%s169 + $0x134] sm:$0xf]
      %v229 = vld [vmem:[%s169 + $0x138] sm:$0xff]
      %v230 = vld [vmem:[%s169 + $0x140] sm:$0xf]
      %v231 = vld [vmem:[%s169 + $0x144] sm:$0xff]
      %v232 = vld [vmem:[%s169 + $0x14c] sm:$0xf]
      %v233 = vld [vmem:[%s169 + $0x150] sm:$0xff]
      %v234 = vld [vmem:[%s169 + $0x158] sm:$0xf]
      %v235 = vld [vmem:[%s169 + $0x15c] sm:$0xff]
      %v236 = vld [vmem:[%s169 + $0x164] sm:$0xf]
      %v237 = vld [vmem:[%s169 + $0x168] sm:$0xff]
      %v238 = vld [vmem:[%s169 + $0x170] sm:$0xf]
      %v239 = vld [vmem:[%s169 + $0x174] sm:$0xff]
      %v240 = vld [vmem:[%s169 + $0x17c] sm:$0xf]
      %v241 = vld [vmem:[%s1] sm:$0xf]
      %v242 = vld [vmem:[%s1 + $0x4] sm:$0xf]
      %v243 = vld [vmem:[%s1 + $0x8] sm:$0xf]
      %v244 = vld [vmem:[%s1 + $0xc] sm:$0xf]
      %v245 = vld [vmem:[%s1 + $0x10] sm:$0xf]
      %v246 = vld [vmem:[%s1 + $0x14] sm:$0xf]
      %v247 = vld [vmem:[%s1 + $0x18] sm:$0xf]
      %v248 = vld [vmem:[%s1 + $0x1c] sm:$0xf]
      %v249 = vld [vmem:[%s1 + $0x20] sm:$0xf]
      %v250 = vld [vmem:[%s1 + $0x24] sm:$0xf]
      %v251 = vld [vmem:[%s1 + $0x28] sm:$0xf]
      %v252 = vld [vmem:[%s1 + $0x2c] sm:$0xf]
      %v253 = vld [vmem:[%s1 + $0x30] sm:$0xf]
      %v254 = vld [vmem:[%s1 + $0x34] sm:$0xf]
      %v255 = vld [vmem:[%s1 + $0x38] sm:$0xf]
      %v256 = vld [vmem:[%s1 + $0x3c] sm:$0xf]
      %v257 = vld [vmem:[%s1 + $0x40] sm:$0xf]
      %v258 = vld [vmem:[%s1 + $0x44] sm:$0xf]
      %v259 = vld [vmem:[%s1 + $0x48] sm:$0xf]
      %v260 = vld [vmem:[%s1 + $0x4c] sm:$0xf]
      %v261 = vld [vmem:[%s1 + $0x50] sm:$0xf]
      %v262 = vld [vmem:[%s1 + $0x54] sm:$0xf]
      %v263 = vld [vmem:[%s1 + $0x58] sm:$0xf]
      %v264 = vld [vmem:[%s1 + $0x5c] sm:$0xf]
      %v265 = vld [vmem:[%s1 + $0x60] sm:$0xf]
      %v266 = vld [vmem:[%s1 + $0x64] sm:$0xf]
      %v267 = vld [vmem:[%s1 + $0x68] sm:$0xf]
      %v268 = vld [vmem:[%s1 + $0x6c] sm:$0xf]
      %v269 = vld [vmem:[%s1 + $0x70] sm:$0xf]
      %v270 = vld [vmem:[%s1 + $0x74] sm:$0xf]
      %v271 = vld [vmem:[%s1 + $0x78] sm:$0xf]
      %v272 = vld [vmem:[%s1 + $0x7c] sm:$0xf]
      %v273 = vld [vmem:[%s1 + $0x80] sm:$0xf]
      %v274 = vld [vmem:[%s1 + $0x84] sm:$0xf]
      %v275 = vld [vmem:[%s1 + $0x88] sm:$0xf]
      %v276 = vld [vmem:[%s1 + $0x8c] sm:$0xf]
      %v277 = vld [vmem:[%s1 + $0x90] sm:$0xf]
      %v278 = vld [vmem:[%s1 + $0x94] sm:$0xf]
      %v279 = vld [vmem:[%s1 + $0x98] sm:$0xf]
      %v280 = vld [vmem:[%s1 + $0x9c] sm:$0xf]
      %v281 = vld [vmem:[%s1 + $0xa0] sm:$0xf]
      %v282 = vld [vmem:[%s1 + $0xa4] sm:$0xf]
      %v283 = vld [vmem:[%s1 + $0xa8] sm:$0xf]
      %v284 = vld [vmem:[%s1 + $0xac] sm:$0xf]
      %v285 = vld [vmem:[%s1 + $0xb0] sm:$0xf]
      %v286 = vld [vmem:[%s1 + $0xb4] sm:$0xf]
      %v287 = vld [vmem:[%s1 + $0xb8] sm:$0xf]
      %v288 = vld [vmem:[%s1 + $0xbc] sm:$0xf]
      %v289 = vld [vmem:[%s2] sm:$0x1]
      %v291 = vperm.slane %v289, 0
      %v357 = vunpack.c.l.b16 %v177
      %v358 = vunpack.c.h.b16 %v177
      %v359 = vunpack.c.l.b16 %v178
      %v360 = vunpack.c.l.b16 %v179
      %v361 = vunpack.c.h.b16 %v179
      %v362 = vunpack.c.l.b16 %v180
      %v363 = vunpack.c.l.b16 %v181
      %v364 = vunpack.c.h.b16 %v181
      %v365 = vunpack.c.l.b16 %v182
      %v366 = vunpack.c.l.b16 %v183
      %v367 = vunpack.c.h.b16 %v183
      %v368 = vunpack.c.l.b16 %v184
      %v369 = vunpack.c.l.b16 %v185
      %v370 = vunpack.c.h.b16 %v185
      %v371 = vunpack.c.l.b16 %v186
      %v372 = vunpack.c.l.b16 %v187
      %v373 = vunpack.c.h.b16 %v187
      %v374 = vunpack.c.l.b16 %v188
      %v375 = vunpack.c.l.b16 %v189
      %v376 = vunpack.c.h.b16 %v189
      %v377 = vunpack.c.l.b16 %v190
      %v378 = vunpack.c.l.b16 %v191
      %v379 = vunpack.c.h.b16 %v191
      %v380 = vunpack.c.l.b16 %v192
      %v381 = vunpack.c.l.b16 %v193
      %v382 = vunpack.c.h.b16 %v193
      %v383 = vunpack.c.l.b16 %v194
      %v384 = vunpack.c.l.b16 %v195
      %v385 = vunpack.c.h.b16 %v195
      %v386 = vunpack.c.l.b16 %v196
      %v387 = vunpack.c.l.b16 %v197
      %v388 = vunpack.c.h.b16 %v197
      %v389 = vunpack.c.l.b16 %v198
      %v390 = vunpack.c.l.b16 %v199
      %v391 = vunpack.c.h.b16 %v199
      %v392 = vunpack.c.l.b16 %v200
      %v393 = vunpack.c.l.b16 %v201
      %v394 = vunpack.c.h.b16 %v201
      %v395 = vunpack.c.l.b16 %v202
      %v396 = vunpack.c.l.b16 %v203
      %v397 = vunpack.c.h.b16 %v203
      %v398 = vunpack.c.l.b16 %v204
      %v399 = vunpack.c.l.b16 %v205
      %v400 = vunpack.c.h.b16 %v205
      %v401 = vunpack.c.l.b16 %v206
      %v402 = vunpack.c.l.b16 %v207
      %v403 = vunpack.c.h.b16 %v207
      %v404 = vunpack.c.l.b16 %v208
      %v405 = vunpack.c.l.b16 %v209
      %v406 = vunpack.c.h.b16 %v209
      %v407 = vunpack.c.l.b16 %v210
      %v408 = vunpack.c.l.b16 %v211
      %v409 = vunpack.c.h.b16 %v211
      %v410 = vunpack.c.l.b16 %v212
      %v411 = vunpack.c.l.b16 %v213
      %v412 = vunpack.c.h.b16 %v213
      %v413 = vunpack.c.l.b16 %v214
      %v414 = vunpack.c.l.b16 %v215
      %v415 = vunpack.c.h.b16 %v215
      %v416 = vunpack.c.l.b16 %v216
      %v417 = vunpack.c.l.b16 %v217
      %v418 = vunpack.c.h.b16 %v217
      %v419 = vunpack.c.l.b16 %v218
      %v420 = vunpack.c.l.b16 %v219
      %v421 = vunpack.c.h.b16 %v219
      %v422 = vunpack.c.l.b16 %v220
      %v423 = vunpack.c.l.b16 %v221
      %v424 = vunpack.c.h.b16 %v221
      %v425 = vunpack.c.l.b16 %v222
      %v426 = vunpack.c.l.b16 %v223
      %v427 = vunpack.c.h.b16 %v223
      %v428 = vunpack.c.l.b16 %v224
      %v429 = vunpack.c.l.b16 %v225
      %v430 = vunpack.c.h.b16 %v225
      %v431 = vunpack.c.l.b16 %v226
      %v432 = vunpack.c.l.b16 %v227
      %v433 = vunpack.c.h.b16 %v227
      %v434 = vunpack.c.l.b16 %v228
      %v435 = vunpack.c.l.b16 %v229
      %v436 = vunpack.c.h.b16 %v229
      %v437 = vunpack.c.l.b16 %v230
      %v438 = vunpack.c.l.b16 %v231
      %v439 = vunpack.c.h.b16 %v231
      %v440 = vunpack.c.l.b16 %v232
      %v441 = vunpack.c.l.b16 %v233
      %v442 = vunpack.c.h.b16 %v233
      %v443 = vunpack.c.l.b16 %v234
      %v444 = vunpack.c.l.b16 %v235
      %v445 = vunpack.c.h.b16 %v235
      %v446 = vunpack.c.l.b16 %v236
      %v447 = vunpack.c.l.b16 %v237
      %v448 = vunpack.c.h.b16 %v237
      %v449 = vunpack.c.l.b16 %v238
      %v450 = vunpack.c.l.b16 %v239
      %v451 = vunpack.c.h.b16 %v239
      %v452 = vunpack.c.l.b16 %v240
      %v453 = vpack.c.b16 %v360, %v357
      %v454 = vpack.c.b16 %v361, %v358
      %v455 = vpack.c.b16 %v362, %v359
      %v456 = vpack.c.b16 %v366, %v363
      %v457 = vpack.c.b16 %v367, %v364
      %v458 = vpack.c.b16 %v368, %v365
      %v459 = vpack.c.b16 %v372, %v369
      %v460 = vpack.c.b16 %v373, %v370
      %v461 = vpack.c.b16 %v374, %v371
      %v462 = vpack.c.b16 %v378, %v375
      %v463 = vpack.c.b16 %v379, %v376
      %v464 = vpack.c.b16 %v380, %v377
      %v465 = vpack.c.b16 %v384, %v381
      %v466 = vpack.c.b16 %v385, %v382
      %v467 = vpack.c.b16 %v386, %v383
      %v468 = vpack.c.b16 %v390, %v387
      %v469 = vpack.c.b16 %v391, %v388
      %v470 = vpack.c.b16 %v392, %v389
      %v471 = vpack.c.b16 %v396, %v393
      %v472 = vpack.c.b16 %v397, %v394
      %v473 = vpack.c.b16 %v398, %v395
      %v474 = vpack.c.b16 %v402, %v399
      %v475 = vpack.c.b16 %v403, %v400
      %v476 = vpack.c.b16 %v404, %v401
      %v477 = vpack.c.b16 %v408, %v405
      %v478 = vpack.c.b16 %v409, %v406
      %v479 = vpack.c.b16 %v410, %v407
      %v480 = vpack.c.b16 %v414, %v411
      %v481 = vpack.c.b16 %v415, %v412
      %v482 = vpack.c.b16 %v416, %v413
      %v483 = vpack.c.b16 %v420, %v417
      %v484 = vpack.c.b16 %v421, %v418
      %v485 = vpack.c.b16 %v422, %v419
      %v486 = vpack.c.b16 %v426, %v423
      %v487 = vpack.c.b16 %v427, %v424
      %v488 = vpack.c.b16 %v428, %v425
      %v489 = vpack.c.b16 %v432, %v429
      %v490 = vpack.c.b16 %v433, %v430
      %v491 = vpack.c.b16 %v434, %v431
      %v492 = vpack.c.b16 %v438, %v435
      %v493 = vpack.c.b16 %v439, %v436
      %v494 = vpack.c.b16 %v440, %v437
      %v495 = vpack.c.b16 %v444, %v441
      %v496 = vpack.c.b16 %v445, %v442
      %v497 = vpack.c.b16 %v446, %v443
      %v498 = vpack.c.b16 %v450, %v447
      %v499 = vpack.c.b16 %v451, %v448
      %v500 = vpack.c.b16 %v452, %v449
      %v597 = vunpack.c.l.b16 %v241
      %v598 = vunpack.c.l.b16 %v242
      %v599 = vunpack.c.l.b16 %v243
      %v600 = vunpack.c.l.b16 %v244
      %v601 = vunpack.c.l.b16 %v245
      %v602 = vunpack.c.l.b16 %v246
      %v603 = vunpack.c.l.b16 %v247
      %v604 = vunpack.c.l.b16 %v248
      %v605 = vunpack.c.l.b16 %v249
      %v606 = vunpack.c.l.b16 %v250
      %v607 = vunpack.c.l.b16 %v251
      %v608 = vunpack.c.l.b16 %v252
      %v609 = vunpack.c.l.b16 %v253
      %v610 = vunpack.c.l.b16 %v254
      %v611 = vunpack.c.l.b16 %v255
      %v612 = vunpack.c.l.b16 %v256
      %v613 = vunpack.c.l.b16 %v257
      %v614 = vunpack.c.l.b16 %v258
      %v615 = vunpack.c.l.b16 %v259
      %v616 = vunpack.c.l.b16 %v260
      %v617 = vunpack.c.l.b16 %v261
      %v618 = vunpack.c.l.b16 %v262
      %v619 = vunpack.c.l.b16 %v263
      %v620 = vunpack.c.l.b16 %v264
      %v621 = vunpack.c.l.b16 %v265
      %v622 = vunpack.c.l.b16 %v266
      %v623 = vunpack.c.l.b16 %v267
      %v624 = vunpack.c.l.b16 %v268
      %v625 = vunpack.c.l.b16 %v269
      %v626 = vunpack.c.l.b16 %v270
      %v627 = vunpack.c.l.b16 %v271
      %v628 = vunpack.c.l.b16 %v272
      %v629 = vunpack.c.l.b16 %v273
      %v630 = vunpack.c.l.b16 %v274
      %v631 = vunpack.c.l.b16 %v275
      %v632 = vunpack.c.l.b16 %v276
      %v633 = vunpack.c.l.b16 %v277
      %v634 = vunpack.c.l.b16 %v278
      %v635 = vunpack.c.l.b16 %v279
      %v636 = vunpack.c.l.b16 %v280
      %v637 = vunpack.c.l.b16 %v281
      %v638 = vunpack.c.l.b16 %v282
      %v639 = vunpack.c.l.b16 %v283
      %v640 = vunpack.c.l.b16 %v284
      %v641 = vunpack.c.l.b16 %v285
      %v642 = vunpack.c.l.b16 %v286
      %v643 = vunpack.c.l.b16 %v287
      %v644 = vunpack.c.l.b16 %v288
      %v645 = vpack.c.b16 %v598, %v597
      %v646 = vpack.c.b16 %v600, %v599
      %v647 = vpack.c.b16 %v602, %v601
      %v648 = vpack.c.b16 %v604, %v603
      %v649 = vpack.c.b16 %v606, %v605
      %v650 = vpack.c.b16 %v608, %v607
      %v651 = vpack.c.b16 %v610, %v609
      %v652 = vpack.c.b16 %v612, %v611
      %v653 = vpack.c.b16 %v614, %v613
      %v654 = vpack.c.b16 %v616, %v615
      %v655 = vpack.c.b16 %v618, %v617
      %v656 = vpack.c.b16 %v620, %v619
      %v657 = vpack.c.b16 %v622, %v621
      %v658 = vpack.c.b16 %v624, %v623
      %v659 = vpack.c.b16 %v626, %v625
      %v660 = vpack.c.b16 %v628, %v627
      %v661 = vpack.c.b16 %v630, %v629
      %v662 = vpack.c.b16 %v632, %v631
      %v663 = vpack.c.b16 %v634, %v633
      %v664 = vpack.c.b16 %v636, %v635
      %v665 = vpack.c.b16 %v638, %v637
      %v666 = vpack.c.b16 %v640, %v639
      %v667 = vpack.c.b16 %v642, %v641
      %v668 = vpack.c.b16 %v644, %v643
      %693 = vmatpush.bf16.msra.mxu0 %v652
      %694 = vmatpush.bf16.msra.mxu0 %v651
      %695 = vmatpush.bf16.msra.mxu0 %v650
      %696 = vmatpush.bf16.msra.mxu0 %v649
      %697 = vmatpush.bf16.msra.mxu0 %v648
      %698 = vmatpush.bf16.msra.mxu0 %v647
      %699 = vmatpush.bf16.msra.mxu0 %v646
      %700 = vmatpush.bf16.msra.mxu0 %v645
      %701 = vmatmul.bf16.gmra.mxu0 %v453
      %v702 = vpop.f32.mrf.mxu0
      %v703 = vadd.f32 %v291, %v702
      %v704 = vpop.f32.mrf.mxu0
      %v705 = vadd.f32 %v291, %v704
      %706 = vmatmul.bf16.gmra.mxu0 %v456
      %v707 = vpop.f32.mrf.mxu0
      %v708 = vadd.f32 %v291, %v707
      %v709 = vpop.f32.mrf.mxu0
      %v710 = vadd.f32 %v291, %v709
      %711 = vmatmul.bf16.gmra.mxu0 %v459
      %v712 = vpop.f32.mrf.mxu0
      %v713 = vadd.f32 %v291, %v712
      %v714 = vpop.f32.mrf.mxu0
      %v715 = vadd.f32 %v291, %v714
      %716 = vmatmul.bf16.gmra.mxu0 %v462
      %v717 = vpop.f32.mrf.mxu0
      %v718 = vadd.f32 %v291, %v717
      %v719 = vpop.f32.mrf.mxu0
      %v720 = vadd.f32 %v291, %v719
      %721 = vmatmul.bf16.gmra.mxu0 %v465
      %v722 = vpop.f32.mrf.mxu0
      %v723 = vadd.f32 %v291, %v722
      %v724 = vpop.f32.mrf.mxu0
      %v725 = vadd.f32 %v291, %v724
      %726 = vmatmul.bf16.gmra.mxu0 %v468
      %v727 = vpop.f32.mrf.mxu0
      %v728 = vadd.f32 %v291, %v727
      %v729 = vpop.f32.mrf.mxu0
      %v730 = vadd.f32 %v291, %v729
      %731 = vmatmul.bf16.gmra.mxu0 %v471
      %v732 = vpop.f32.mrf.mxu0
      %v733 = vadd.f32 %v291, %v732
      %v734 = vpop.f32.mrf.mxu0
      %v735 = vadd.f32 %v291, %v734
      %736 = vmatmul.bf16.gmra.mxu0 %v474
      %v737 = vpop.f32.mrf.mxu0
      %v738 = vadd.f32 %v291, %v737
      %v739 = vpop.f32.mrf.mxu0
      %v740 = vadd.f32 %v291, %v739
      %741 = vmatmul.bf16.gmra.mxu0 %v477
      %v742 = vpop.f32.mrf.mxu0
      %v743 = vadd.f32 %v291, %v742
      %v744 = vpop.f32.mrf.mxu0
      %v745 = vadd.f32 %v291, %v744
      %746 = vmatmul.bf16.gmra.mxu0 %v480
      %v747 = vpop.f32.mrf.mxu0
      %v748 = vadd.f32 %v291, %v747
      %v749 = vpop.f32.mrf.mxu0
      %v750 = vadd.f32 %v291, %v749
      %751 = vmatmul.bf16.gmra.mxu0 %v483
      %v752 = vpop.f32.mrf.mxu0
      %v753 = vadd.f32 %v291, %v752
      %v754 = vpop.f32.mrf.mxu0
      %v755 = vadd.f32 %v291, %v754
      %756 = vmatmul.bf16.gmra.mxu0 %v486
      %v757 = vpop.f32.mrf.mxu0
      %v758 = vadd.f32 %v291, %v757
      %v759 = vpop.f32.mrf.mxu0
      %v760 = vadd.f32 %v291, %v759
      %761 = vmatmul.bf16.gmra.mxu0 %v489
      %v762 = vpop.f32.mrf.mxu0
      %v763 = vadd.f32 %v291, %v762
      %v764 = vpop.f32.mrf.mxu0
      %v765 = vadd.f32 %v291, %v764
      %766 = vmatmul.bf16.gmra.mxu0 %v492
      %v767 = vpop.f32.mrf.mxu0
      %v768 = vadd.f32 %v291, %v767
      %v769 = vpop.f32.mrf.mxu0
      %v770 = vadd.f32 %v291, %v769
      %771 = vmatmul.bf16.gmra.mxu0 %v495
      %v772 = vpop.f32.mrf.mxu0
      %v773 = vadd.f32 %v291, %v772
      %v774 = vpop.f32.mrf.mxu0
      %v775 = vadd.f32 %v291, %v774
      %776 = vmatmul.bf16.gmra.mxu0 %v498
      %v777 = vpop.f32.mrf.mxu0
      %v778 = vadd.f32 %v291, %v777
      %v779 = vpop.f32.mrf.mxu0
      %v780 = vadd.f32 %v291, %v779
      %781 = vdwg.mxu0
      %782 = vmatpush.bf16.msra.mxu0 %v660
      %783 = vmatpush.bf16.msra.mxu0 %v659
      %784 = vmatpush.bf16.msra.mxu0 %v658
      %785 = vmatpush.bf16.msra.mxu0 %v657
      %786 = vmatpush.bf16.msra.mxu0 %v656
      %787 = vmatpush.bf16.msra.mxu0 %v655
      %788 = vmatpush.bf16.msra.mxu0 %v654
      %789 = vmatpush.bf16.msra.mxu0 %v653
      %790 = vmatmul.bf16.gmra.mxu0 %v454
      %v791 = vpop.f32.mrf.mxu0
      %v792 = vadd.f32 %v703, %v791
      %v793 = vpop.f32.mrf.mxu0
      %v794 = vadd.f32 %v705, %v793
      %795 = vmatmul.bf16.gmra.mxu0 %v457
      %v796 = vpop.f32.mrf.mxu0
      %v797 = vadd.f32 %v708, %v796
      %v798 = vpop.f32.mrf.mxu0
      %v799 = vadd.f32 %v710, %v798
      %800 = vmatmul.bf16.gmra.mxu0 %v460
      %v801 = vpop.f32.mrf.mxu0
      %v802 = vadd.f32 %v713, %v801
      %v803 = vpop.f32.mrf.mxu0
      %v804 = vadd.f32 %v715, %v803
      %805 = vmatmul.bf16.gmra.mxu0 %v463
      %v806 = vpop.f32.mrf.mxu0
      %v807 = vadd.f32 %v718, %v806
      %v808 = vpop.f32.mrf.mxu0
      %v809 = vadd.f32 %v720, %v808
      %810 = vmatmul.bf16.gmra.mxu0 %v466
      %v811 = vpop.f32.mrf.mxu0
      %v812 = vadd.f32 %v723, %v811
      %v813 = vpop.f32.mrf.mxu0
      %v814 = vadd.f32 %v725, %v813
      %815 = vmatmul.bf16.gmra.mxu0 %v469
      %v816 = vpop.f32.mrf.mxu0
      %v817 = vadd.f32 %v728, %v816
      %v818 = vpop.f32.mrf.mxu0
      %v819 = vadd.f32 %v730, %v818
      %820 = vmatmul.bf16.gmra.mxu0 %v472
      %v821 = vpop.f32.mrf.mxu0
      %v822 = vadd.f32 %v733, %v821
      %v823 = vpop.f32.mrf.mxu0
      %v824 = vadd.f32 %v735, %v823
      %825 = vmatmul.bf16.gmra.mxu0 %v475
      %v826 = vpop.f32.mrf.mxu0
      %v827 = vadd.f32 %v738, %v826
      %v828 = vpop.f32.mrf.mxu0
      %v829 = vadd.f32 %v740, %v828
      %830 = vmatmul.bf16.gmra.mxu0 %v478
      %v831 = vpop.f32.mrf.mxu0
      %v832 = vadd.f32 %v743, %v831
      %v833 = vpop.f32.mrf.mxu0
      %v834 = vadd.f32 %v745, %v833
      %835 = vmatmul.bf16.gmra.mxu0 %v481
      %v836 = vpop.f32.mrf.mxu0
      %v837 = vadd.f32 %v748, %v836
      %v838 = vpop.f32.mrf.mxu0
      %v839 = vadd.f32 %v750, %v838
      %840 = vmatmul.bf16.gmra.mxu0 %v484
      %v841 = vpop.f32.mrf.mxu0
      %v842 = vadd.f32 %v753, %v841
      %v843 = vpop.f32.mrf.mxu0
      %v844 = vadd.f32 %v755, %v843
      %845 = vmatmul.bf16.gmra.mxu0 %v487
      %v846 = vpop.f32.mrf.mxu0
      %v847 = vadd.f32 %v758, %v846
      %v848 = vpop.f32.mrf.mxu0
      %v849 = vadd.f32 %v760, %v848
      %850 = vmatmul.bf16.gmra.mxu0 %v490
      %v851 = vpop.f32.mrf.mxu0
      %v852 = vadd.f32 %v763, %v851
      %v853 = vpop.f32.mrf.mxu0
      %v854 = vadd.f32 %v765, %v853
      %855 = vmatmul.bf16.gmra.mxu0 %v493
      %v856 = vpop.f32.mrf.mxu0
      %v857 = vadd.f32 %v768, %v856
      %v858 = vpop.f32.mrf.mxu0
      %v859 = vadd.f32 %v770, %v858
      %860 = vmatmul.bf16.gmra.mxu0 %v496
      %v861 = vpop.f32.mrf.mxu0
      %v862 = vadd.f32 %v773, %v861
      %v863 = vpop.f32.mrf.mxu0
      %v864 = vadd.f32 %v775, %v863
      %865 = vmatmul.bf16.gmra.mxu0 %v499
      %v866 = vpop.f32.mrf.mxu0
      %v867 = vadd.f32 %v778, %v866
      %v868 = vpop.f32.mrf.mxu0
      %v869 = vadd.f32 %v780, %v868
      %870 = vdwg.mxu0
      %871 = vmatpush.bf16.msra.mxu0 %v668
      %872 = vmatpush.bf16.msra.mxu0 %v667
      %873 = vmatpush.bf16.msra.mxu0 %v666
      %874 = vmatpush.bf16.msra.mxu0 %v665
      %875 = vmatpush.bf16.msra.mxu0 %v664
      %876 = vmatpush.bf16.msra.mxu0 %v663
      %877 = vmatpush.bf16.msra.mxu0 %v662
      %878 = vmatpush.bf16.msra.mxu0 %v661
      %879 = vmatmul.bf16.gmra.mxu0 %v455
      %v880 = vpop.f32.mrf.mxu0
      %v881 = vadd.f32 %v792, %v880
      %v882 = vpop.f32.mrf.mxu0
      %v883 = vadd.f32 %v794, %v882
      %884 = vmatmul.bf16.gmra.mxu0 %v458
      %v885 = vpop.f32.mrf.mxu0
      %v886 = vadd.f32 %v797, %v885
      %v887 = vpop.f32.mrf.mxu0
      %v888 = vadd.f32 %v799, %v887
      %889 = vmatmul.bf16.gmra.mxu0 %v461
      %v890 = vpop.f32.mrf.mxu0
      %v891 = vadd.f32 %v802, %v890
      %v892 = vpop.f32.mrf.mxu0
      %v893 = vadd.f32 %v804, %v892
      %894 = vmatmul.bf16.gmra.mxu0 %v464
      %v895 = vpop.f32.mrf.mxu0
      %v896 = vadd.f32 %v807, %v895
      %v897 = vpop.f32.mrf.mxu0
      %v898 = vadd.f32 %v809, %v897
      %899 = vmatmul.bf16.gmra.mxu0 %v467
      %v900 = vpop.f32.mrf.mxu0
      %v901 = vadd.f32 %v812, %v900
      %v902 = vpop.f32.mrf.mxu0
      %v903 = vadd.f32 %v814, %v902
      %904 = vmatmul.bf16.gmra.mxu0 %v470
      %v905 = vpop.f32.mrf.mxu0
      %v906 = vadd.f32 %v817, %v905
      %v907 = vpop.f32.mrf.mxu0
      %v908 = vadd.f32 %v819, %v907
      %909 = vmatmul.bf16.gmra.mxu0 %v473
      %v910 = vpop.f32.mrf.mxu0
      %v911 = vadd.f32 %v822, %v910
      %v912 = vpop.f32.mrf.mxu0
      %v913 = vadd.f32 %v824, %v912
      %914 = vmatmul.bf16.gmra.mxu0 %v476
      %v915 = vpop.f32.mrf.mxu0
      %v916 = vadd.f32 %v827, %v915
      %v917 = vpop.f32.mrf.mxu0
      %v918 = vadd.f32 %v829, %v917
      %919 = vmatmul.bf16.gmra.mxu0 %v479
      %v920 = vpop.f32.mrf.mxu0
      %v921 = vadd.f32 %v832, %v920
      %v922 = vpop.f32.mrf.mxu0
      %v923 = vadd.f32 %v834, %v922
      %924 = vmatmul.bf16.gmra.mxu0 %v482
      %v925 = vpop.f32.mrf.mxu0
      %v926 = vadd.f32 %v837, %v925
      %v927 = vpop.f32.mrf.mxu0
      %v928 = vadd.f32 %v839, %v927
      %929 = vmatmul.bf16.gmra.mxu0 %v485
      %v930 = vpop.f32.mrf.mxu0
      %v931 = vadd.f32 %v842, %v930
      %v932 = vpop.f32.mrf.mxu0
      %v933 = vadd.f32 %v844, %v932
      %934 = vmatmul.bf16.gmra.mxu0 %v488
      %v935 = vpop.f32.mrf.mxu0
      %v936 = vadd.f32 %v847, %v935
      %v937 = vpop.f32.mrf.mxu0
      %v938 = vadd.f32 %v849, %v937
      %939 = vmatmul.bf16.gmra.mxu0 %v491
      %v940 = vpop.f32.mrf.mxu0
      %v941 = vadd.f32 %v852, %v940
      %v942 = vpop.f32.mrf.mxu0
      %v943 = vadd.f32 %v854, %v942
      %944 = vmatmul.bf16.gmra.mxu0 %v494
      %v945 = vpop.f32.mrf.mxu0
      %v946 = vadd.f32 %v857, %v945
      %v947 = vpop.f32.mrf.mxu0
      %v948 = vadd.f32 %v859, %v947
      %949 = vmatmul.bf16.gmra.mxu0 %v497
      %v950 = vpop.f32.mrf.mxu0
      %v951 = vadd.f32 %v862, %v950
      %v952 = vpop.f32.mrf.mxu0
      %v953 = vadd.f32 %v864, %v952
      %954 = vmatmul.bf16.gmra.mxu0 %v500
      %v955 = vpop.f32.mrf.mxu0
      %v956 = vadd.f32 %v867, %v955
      %v957 = vpop.f32.mrf.mxu0
      %v958 = vadd.f32 %v869, %v957
      %959 = vdwg.mxu0
      %v960 = vmax.f32 %v881, 0.0
      %v961 = vmax.f32 %v883, 0.0
      %v962 = vmax.f32 %v886, 0.0
      %v963 = vmax.f32 %v888, 0.0
      %v964 = vmax.f32 %v891, 0.0
      %v965 = vmax.f32 %v893, 0.0
      %v966 = vmax.f32 %v896, 0.0
      %v967 = vmax.f32 %v898, 0.0
      %v968 = vmax.f32 %v901, 0.0
      %v969 = vmax.f32 %v903, 0.0
      %v970 = vmax.f32 %v906, 0.0
      %v971 = vmax.f32 %v908, 0.0
      %v972 = vmax.f32 %v911, 0.0
      %v973 = vmax.f32 %v913, 0.0
      %v974 = vmax.f32 %v916, 0.0
      %v975 = vmax.f32 %v918, 0.0
      %v976 = vmax.f32 %v921, 0.0
      %v977 = vmax.f32 %v923, 0.0
      %v978 = vmax.f32 %v926, 0.0
      %v979 = vmax.f32 %v928, 0.0
      %v980 = vmax.f32 %v931, 0.0
      %v981 = vmax.f32 %v933, 0.0
      %v982 = vmax.f32 %v936, 0.0
      %v983 = vmax.f32 %v938, 0.0
      %v984 = vmax.f32 %v941, 0.0
      %v985 = vmax.f32 %v943, 0.0
      %v986 = vmax.f32 %v946, 0.0
      %v987 = vmax.f32 %v948, 0.0
      %v988 = vmax.f32 %v951, 0.0
      %v989 = vmax.f32 %v953, 0.0
      %v990 = vmax.f32 %v956, 0.0
      %v991 = vmax.f32 %v958, 0.0
      %992 = vst [vmem:[%s175] sm:$0xff] %v960
      %993 = vst [vmem:[%s175 + $0x8] sm:$0xff] %v961
      %994 = vst [vmem:[%s175 + $0x10] sm:$0xff] %v962
      %995 = vst [vmem:[%s175 + $0x18] sm:$0xff] %v963
      %996 = vst [vmem:[%s175 + $0x20] sm:$0xff] %v964
      %997 = vst [vmem:[%s175 + $0x28] sm:$0xff] %v965
      %998 = vst [vmem:[%s175 + $0x30] sm:$0xff] %v966
      %999 = vst [vmem:[%s175 + $0x38] sm:$0xff] %v967
      %1000 = vst [vmem:[%s175 + $0x40] sm:$0xff] %v968
      %1001 = vst [vmem:[%s175 + $0x48] sm:$0xff] %v969
      %1002 = vst [vmem:[%s175 + $0x50] sm:$0xff] %v970
      %1003 = vst [vmem:[%s175 + $0x58] sm:$0xff] %v971
      %1004 = vst [vmem:[%s175 + $0x60] sm:$0xff] %v972
      %1005 = vst [vmem:[%s175 + $0x68] sm:$0xff] %v973
      %1006 = vst [vmem:[%s175 + $0x70] sm:$0xff] %v974
      %1007 = vst [vmem:[%s175 + $0x78] sm:$0xff] %v975
      %1008 = vst [vmem:[%s175 + $0x80] sm:$0xff] %v976
      %1009 = vst [vmem:[%s175 + $0x88] sm:$0xff] %v977
      %1010 = vst [vmem:[%s175 + $0x90] sm:$0xff] %v978
      %1011 = vst [vmem:[%s175 + $0x98] sm:$0xff] %v979
      %1012 = vst [vmem:[%s175 + $0xa0] sm:$0xff] %v980
      %1013 = vst [vmem:[%s175 + $0xa8] sm:$0xff] %v981
      %1014 = vst [vmem:[%s175 + $0xb0] sm:$0xff] %v982
      %1015 = vst [vmem:[%s175 + $0xb8] sm:$0xff] %v983
      %1016 = vst [vmem:[%s175 + $0xc0] sm:$0xff] %v984
      %1017 = vst [vmem:[%s175 + $0xc8] sm:$0xff] %v985
      %1018 = vst [vmem:[%s175 + $0xd0] sm:$0xff] %v986
      %1019 = vst [vmem:[%s175 + $0xd8] sm:$0xff] %v987
      %1020 = vst [vmem:[%s175 + $0xe0] sm:$0xff] %v988
      %1021 = vst [vmem:[%s175 + $0xe8] sm:$0xff] %v989
      %1022 = vst [vmem:[%s175 + $0xf0] sm:$0xff] %v990
      %1023 = vst [vmem:[%s175 + $0xf8] sm:$0xff] %v991
      %s1024 = smul.u32 32, %s14
      %p1025 = scmp.lt.s32.totalorder %s1024, 63
      %s1026 = scalar_select %p1025, %s1024, 63
      %s1027 = smul.addr %s1026, 8
      %s1028 = scalar_lea.vmem %s3, %s1027
      // Predicated region
      $region33: #{conv_update_forward.6} parent=31 // pred_check
        %p1029 = pneg %p100
      $region34: #{conv_update_forward.6} parent=31 // pred_check_branch
        %1031 = sbr.rel (%p1029) target = $region36
      $region35: #{conv_update_forward.6} parent=31 // pred_region
        %s1032 = smul.u32 32, %s14
      $region36: #{conv_update_forward.6} parent=31 // pred_fallthru
        _
    $region32: #{conv_update_forward.6} parent=5 // pred_fallthru
      _
    %p1033 = scmp.le.s32.totalorder 2, %s9
    // Predicated region
    $region37: #{conv_update_forward.6} parent=5 // pred_check
      %p1034 = pneg %p1033
    $region38: #{conv_update_forward.6} parent=5 // pred_check_branch
      %1036 = sbr.rel (%p1034) target = $region40
    $region39: #{conv_update_forward.6} parent=5 // pred_region
      %s1037 = ssub.s32 %s9, 2
      // Predicated region
      $region41: #{conv_update_forward.6} parent=39 // pred_check
        %p1038 = pneg %p106
      $region42: #{conv_update_forward.6} parent=39 // pred_check_branch
        %1040 = sbr.rel (%p1038) target = $region44
      $region43: #{conv_update_forward.6} parent=39 // pred_region
        %s1041 = smul.u32 32, %s15
        %p1042 = scmp.lt.s32.totalorder %s1041, 63
        %s1043 = scalar_select %p1042, %s1041, 63
        %s1044 = smul.addr %s1043, 8
        %s1045 = scalar_lea.vmem %s3, %s1044
      $region44: #{conv_update_forward.6} parent=39 // pred_fallthru
        _
    $region40: #{conv_update_forward.6} parent=5 // pred_fallthru
      _
  $region6: #{conv_update_forward.6} parent=0 // loop_footer
    %s13 = sadd.s32 1, %s9
  $region7: #{conv_update_forward.6} parent=0 // loop_footer_branch
    %8 = sbr.rel target = $region3
  $region8: #{conv_update_forward.6} parent=0 // loop_exit
    _

// kernel: conv_update_forward.7
$region0: #{conv_update_forward.7}
  #allocation0 [shape = 'u32[]', space=smem, size = 0x4, offset = 0x4, fixed_abs, tag = 'smem constant byte address 0x4 - core index']
  #allocation1 [shape = 'u32[72,128]{1,0:T(1,128)}', space=vmem, size = 0x9000, scoped, tag = 'internal scratch']
  %s0 = inlined_call_operand.vmem [shape: bf16[512,256], index: 0, kind: input, shape index: {}]
  %s1 = inlined_call_operand.vmem [shape: bf16[256,128], index: 1, kind: input, shape index: {}]
  %s2 = inlined_call_operand.vmem [shape: f32[1,128], index: 2, kind: input, shape index: {}]
  %s3 = inlined_call_operand.vmem [shape: f32[512,128], index: 3, kind: output, shape index: {}]
  %s4 = sld [smem:[#allocation0]]
  $region45: #{conv_update_forward.7} parent=0
    _
  %s6 = ssub.s32 1, %s4
  %s7 = scalar_select 0, %s6, %s4
  loop: start=0, step=1, limit=4
  $region2: #{conv_update_forward.7} parent=0 // loop_pre_header
    _
  $region3: #{conv_update_forward.7} parent=0 // loop_header
    %s9 = sphi 0, %s13
    %p10 = scmp.ge.s32.totalorder %s9, 4
    %s19 = sphi 0, %s21
    %s22 = sphi 0, %s19
    %s23 = sphi 0, %s22
    %s39 = sphi 0, %s23
    %s43 = sphi 0, %s43
    %s45 = sphi 0, %s43
    %s46 = sphi 0, %s45
    %s60 = sphi 0, %s46
    %s64 = sphi 0, %s64
    %s66 = sphi 0, %s64
    %s67 = sphi 0, %s66
    %s81 = sphi 0, %s67
    %s87 = sphi 0, %s89
    %s90 = sphi 0, %s87
    %s91 = sphi 0, %s90
    %s107 = sphi 0, %s91
  $region4: #{conv_update_forward.7} parent=0 // loop_header_branch
    %12 = sbr.rel (%p10) target = $region8
  $region5: #{conv_update_forward.7} parent=0 // loop_body
    %s14 = ssub.s32 %s9, 1
    %s15 = ssub.s32 %s9, 2
    %s16 = sadd.s32 %s9, 1
    %s17 = ssub.s32 %s9, %s16
    %p18 = scmp.eq.s32.totalorder %s17, 0
    %s20 = sadd.s32 %s19, 1
    %s21 = scalar_select %p18, %s19, %s20
    %p24 = pneg %p18
    %p25 = scmp.eq.s32.totalorder %s9, 1
    %p26 = por %p24, %p25
    %p27 = scmp.ne.s32.totalorder %s19, %s22
    %p28 = scmp.eq.s32.totalorder %s9, 0
    %p29 = por %p27, %p28
    %p30 = scmp.ne.s32.totalorder %s19, %s22
    %p31 = scmp.eq.s32.totalorder %s14, 1
    %p32 = por %p30, %p31
    %p33 = scmp.ne.s32.totalorder %s22, %s23
    %p34 = scmp.eq.s32.totalorder %s14, 0
    %p35 = por %p33, %p34
    %p36 = scmp.ne.s32.totalorder %s22, %s23
    %p37 = scmp.eq.s32.totalorder %s15, 1
    %p38 = por %p36, %p37
    %p40 = scmp.ne.s32.totalorder %s23, %s39
    %p41 = scmp.eq.s32.totalorder %s15, 0
    %p42 = por %p40, %p41
    %s44 = sadd.s32 %s43, 1
    %p47 = scmp.eq.s32.totalorder %s9, 1
    %p48 = scmp.ne.s32.totalorder %s43, %s45
    %p49 = scmp.eq.s32.totalorder %s9, 0
    %p50 = por %p48, %p49
    %p51 = scmp.ne.s32.totalorder %s43, %s45
    %p52 = scmp.eq.s32.totalorder %s14, 1
    %p53 = por %p51, %p52
    %p54 = scmp.ne.s32.totalorder %s45, %s46
    %p55 = scmp.eq.s32.totalorder %s14, 0
    %p56 = por %p54, %p55
    %p57 = scmp.ne.s32.totalorder %s45, %s46
    %p58 = scmp.eq.s32.totalorder %s15, 1
    %p59 = por %p57, %p58
    %p61 = scmp.ne.s32.totalorder %s46, %s60
    %p62 = scmp.eq.s32.totalorder %s15, 0
    %p63 = por %p61, %p62
    %s65 = sadd.s32 %s64, 1
    %p68 = scmp.eq.s32.totalorder %s9, 1
    %p69 = scmp.ne.s32.totalorder %s64, %s66
    %p70 = scmp.eq.s32.totalorder %s9, 0
    %p71 = por %p69, %p70
    %p72 = scmp.ne.s32.totalorder %s64, %s66
    %p73 = scmp.eq.s32.totalorder %s14, 1
    %p74 = por %p72, %p73
    %p75 = scmp.ne.s32.totalorder %s66, %s67
    %p76 = scmp.eq.s32.totalorder %s14, 0
    %p77 = por %p75, %p76
    %p78 = scmp.ne.s32.totalorder %s66, %s67
    %p79 = scmp.eq.s32.totalorder %s15, 1
    %p80 = por %p78, %p79
    %p82 = scmp.ne.s32.totalorder %s67, %s81
    %p83 = scmp.eq.s32.totalorder %s15, 0
    %p84 = por %p82, %p83
    %s85 = ssub.s32 %s9, %s16
    %p86 = scmp.eq.s32.totalorder %s85, 0
    %s88 = sadd.s32 %s87, 1
    %s89 = scalar_select %p86, %s87, %s88
    %p92 = pneg %p86
    %p93 = scmp.eq.s32.totalorder %s9, 1
    %p94 = por %p92, %p93
    %p95 = scmp.ne.s32.totalorder %s87, %s90
    %p96 = scmp.eq.s32.totalorder %s9, 0
    %p97 = por %p95, %p96
    %p98 = scmp.ne.s32.totalorder %s87, %s90
    %p99 = scmp.eq.s32.totalorder %s14, 1
    %p100 = por %p98, %p99
    %p101 = scmp.ne.s32.totalorder %s90, %s91
    %p102 = scmp.eq.s32.totalorder %s14, 0
    %p103 = por %p101, %p102
    %p104 = scmp.ne.s32.totalorder %s90, %s91
    %p105 = scmp.eq.s32.totalorder %s15, 1
    %p106 = por %p104, %p105
    %p108 = scmp.ne.s32.totalorder %s91, %s107
    %p109 = scmp.eq.s32.totalorder %s15, 0
    %p110 = por %p108, %p109
    %p111 = scmp.le.s32.totalorder 1, %s9
    %p112 = scmp.lt.s32.totalorder %s9, 3
    %p113 = pnand %p111, %p112
    %p114 = pneg %p113
    // Predicated region
    $region9: #{conv_update_forward.7} parent=5 // pred_check
      _
    $region10: #{conv_update_forward.7} parent=5 // pred_check_branch
      %116 = sbr.rel (%p113) target = $region12
    $region11: #{conv_update_forward.7} parent=5 // pred_region
      %s117 = ssub.s32 %s9, 1
      // Predicated region
      $region13: #{conv_update_forward.7} parent=11 // pred_check
        %p118 = pneg %p56
      $region14: #{conv_update_forward.7} parent=11 // pred_check_branch
        %120 = sbr.rel (%p118) target = $region16
      $region15: #{conv_update_forward.7} parent=11 // pred_region
        _
      $region16: #{conv_update_forward.7} parent=11 // pred_fallthru
        _
      // Predicated region
      $region17: #{conv_update_forward.7} parent=11 // pred_check
        %p121 = pneg %p77
      $region18: #{conv_update_forward.7} parent=11 // pred_check_branch
        %123 = sbr.rel (%p121) target = $region20
      $region19: #{conv_update_forward.7} parent=11 // pred_region
        _
      $region20: #{conv_update_forward.7} parent=11 // pred_fallthru
        _
    $region12: #{conv_update_forward.7} parent=5 // pred_fallthru
      _
    %p124 = scmp.lt.s32.totalorder %s9, 2
    // Predicated region
    $region21: #{conv_update_forward.7} parent=5 // pred_check
      %p125 = pneg %p124
    $region22: #{conv_update_forward.7} parent=5 // pred_check_branch
      %127 = sbr.rel (%p125) target = $region24
    $region23: #{conv_update_forward.7} parent=5 // pred_region
      // Predicated region
      $region25: #{conv_update_forward.7} parent=23 // pred_check
        %p128 = pneg %p29
      $region26: #{conv_update_forward.7} parent=23 // pred_check_branch
        %130 = sbr.rel (%p128) target = $region28
      $region27: #{conv_update_forward.7} parent=23 // pred_region
        %s131 = smul.u32 32, %s9
        %p132 = scmp.lt.s32.totalorder %s131, 63
        %s133 = scalar_select %p132, %s131, 63
        %s134 = smul.addr %s133, 2
        %s135 = smul.addr %s134, 4
        %s136 = scalar_lea.vmem %s0, %s135
        %s137 = smul.u32 32, %s9
      $region28: #{conv_update_forward.7} parent=23 // pred_fallthru
        _
    $region24: #{conv_update_forward.7} parent=5 // pred_fallthru
      _
    %p138 = scmp.le.s32.totalorder 1, %s9
    %p139 = scmp.lt.s32.totalorder %s9, 3
    %p140 = pnand %p138, %p139
    %p141 = pneg %p140
    // Predicated region
    $region29: #{conv_update_forward.7} parent=5 // pred_check
      _
    $region30: #{conv_update_forward.7} parent=5 // pred_check_branch
      %143 = sbr.rel (%p140) target = $region32
    $region31: #{conv_update_forward.7} parent=5 // pred_region
      %s144 = ssub.s32 %s9, 1
      %s145 = smul.u32 32, %s14
      %p146 = scmp.lt.s32.totalorder %s145, 63
      %s147 = scalar_select %p146, %s145, 63
      %s148 = smul.addr %s147, 2
      %s149 = smul.addr %s148, 4
      %s150 = scalar_lea.vmem %s0, %s149
      %p151 = pneg %p35
      %p152 = pneg %p32
      %p153 = pneg %p56
      %p154 = pneg %p53
      %p155 = pneg %p77
      %p156 = pneg %p74
      %p157 = pneg %p103
      %p158 = pneg %p100
      %s159 = smul.u32 32, %s14
      %p160 = scmp.lt.s32.totalorder %s159, 63
      %s161 = scalar_select %p160, %s159, 63
      %s162 = smul.addr %s161, 8
      %s163 = scalar_lea.vmem %s3, %s162
      %s164 = smul.u32 32, %s14
      %p165 = scmp.lt.s32.totalorder %s164, 63
      %s166 = scalar_select %p165, %s164, 63
      %s167 = smul.addr %s166, 2
      %s168 = smul.addr %s167, 4
      %s169 = scalar_lea.vmem %s0, %s168
      %s170 = smul.u32 32, %s14
      %s171 = smul.u32 32, %s14
      %p172 = scmp.lt.s32.totalorder %s171, 63
      %s173 = scalar_select %p172, %s171, 63
      %s174 = smul.addr %s173, 8
      %s175 = scalar_lea.vmem %s3, %s174
      %s176 = smul.u32 32, %s14
      %v177 = vld [vmem:[%s169] sm:$0xff]
      %v178 = vld [vmem:[%s169 + $0x8] sm:$0xff]
      %v179 = vld [vmem:[%s169 + $0x10] sm:$0xff]
      %v180 = vld [vmem:[%s169 + $0x18] sm:$0xff]
      %v181 = vld [vmem:[%s169 + $0x20] sm:$0xff]
      %v182 = vld [vmem:[%s169 + $0x28] sm:$0xff]
      %v183 = vld [vmem:[%s169 + $0x30] sm:$0xff]
      %v184 = vld [vmem:[%s169 + $0x38] sm:$0xff]
      %v185 = vld [vmem:[%s169 + $0x40] sm:$0xff]
      %v186 = vld [vmem:[%s169 + $0x48] sm:$0xff]
      %v187 = vld [vmem:[%s169 + $0x50] sm:$0xff]
      %v188 = vld [vmem:[%s169 + $0x58] sm:$0xff]
      %v189 = vld [vmem:[%s169 + $0x60] sm:$0xff]
      %v190 = vld [vmem:[%s169 + $0x68] sm:$0xff]
      %v191 = vld [vmem:[%s169 + $0x70] sm:$0xff]
      %v192 = vld [vmem:[%s169 + $0x78] sm:$0xff]
      %v193 = vld [vmem:[%s169 + $0x80] sm:$0xff]
      %v194 = vld [vmem:[%s169 + $0x88] sm:$0xff]
      %v195 = vld [vmem:[%s169 + $0x90] sm:$0xff]
      %v196 = vld [vmem:[%s169 + $0x98] sm:$0xff]
      %v197 = vld [vmem:[%s169 + $0xa0] sm:$0xff]
      %v198 = vld [vmem:[%s169 + $0xa8] sm:$0xff]
      %v199 = vld [vmem:[%s169 + $0xb0] sm:$0xff]
      %v200 = vld [vmem:[%s169 + $0xb8] sm:$0xff]
      %v201 = vld [vmem:[%s169 + $0xc0] sm:$0xff]
      %v202 = vld [vmem:[%s169 + $0xc8] sm:$0xff]
      %v203 = vld [vmem:[%s169 + $0xd0] sm:$0xff]
      %v204 = vld [vmem:[%s169 + $0xd8] sm:$0xff]
      %v205 = vld [vmem:[%s169 + $0xe0] sm:$0xff]
      %v206 = vld [vmem:[%s169 + $0xe8] sm:$0xff]
      %v207 = vld [vmem:[%s169 + $0xf0] sm:$0xff]
      %v208 = vld [vmem:[%s169 + $0xf8] sm:$0xff]
      %v209 = vld [vmem:[%s1] sm:$0xf]
      %v210 = vld [vmem:[%s1 + $0x4] sm:$0xf]
      %v211 = vld [vmem:[%s1 + $0x8] sm:$0xf]
      %v212 = vld [vmem:[%s1 + $0xc] sm:$0xf]
      %v213 = vld [vmem:[%s1 + $0x10] sm:$0xf]
      %v214 = vld [vmem:[%s1 + $0x14] sm:$0xf]
      %v215 = vld [vmem:[%s1 + $0x18] sm:$0xf]
      %v216 = vld [vmem:[%s1 + $0x1c] sm:$0xf]
      %v217 = vld [vmem:[%s1 + $0x20] sm:$0xf]
      %v218 = vld [vmem:[%s1 + $0x24] sm:$0xf]
      %v219 = vld [vmem:[%s1 + $0x28] sm:$0xf]
      %v220 = vld [vmem:[%s1 + $0x2c] sm:$0xf]
      %v221 = vld [vmem:[%s1 + $0x30] sm:$0xf]
      %v222 = vld [vmem:[%s1 + $0x34] sm:$0xf]
      %v223 = vld [vmem:[%s1 + $0x38] sm:$0xf]
      %v224 = vld [vmem:[%s1 + $0x3c] sm:$0xf]
      %v225 = vld [vmem:[%s1 + $0x40] sm:$0xf]
      %v226 = vld [vmem:[%s1 + $0x44] sm:$0xf]
      %v227 = vld [vmem:[%s1 + $0x48] sm:$0xf]
      %v228 = vld [vmem:[%s1 + $0x4c] sm:$0xf]
      %v229 = vld [vmem:[%s1 + $0x50] sm:$0xf]
      %v230 = vld [vmem:[%s1 + $0x54] sm:$0xf]
      %v231 = vld [vmem:[%s1 + $0x58] sm:$0xf]
      %v232 = vld [vmem:[%s1 + $0x5c] sm:$0xf]
      %v233 = vld [vmem:[%s1 + $0x60] sm:$0xf]
      %v234 = vld [vmem:[%s1 + $0x64] sm:$0xf]
      %v235 = vld [vmem:[%s1 + $0x68] sm:$0xf]
      %v236 = vld [vmem:[%s1 + $0x6c] sm:$0xf]
      %v237 = vld [vmem:[%s1 + $0x70] sm:$0xf]
      %v238 = vld [vmem:[%s1 + $0x74] sm:$0xf]
      %v239 = vld [vmem:[%s1 + $0x78] sm:$0xf]
      %v240 = vld [vmem:[%s1 + $0x7c] sm:$0xf]
      %v241 = vld [vmem:[%s2] sm:$0x1]
      %v243 = vperm.slane %v241, 0
      %v277 = vunpack.c.l.b16 %v177
      %v278 = vunpack.c.h.b16 %v177
      %v279 = vunpack.c.l.b16 %v178
      %v280 = vunpack.c.h.b16 %v178
      %v281 = vunpack.c.l.b16 %v179
      %v282 = vunpack.c.h.b16 %v179
      %v283 = vunpack.c.l.b16 %v180
      %v284 = vunpack.c.h.b16 %v180
      %v285 = vunpack.c.l.b16 %v181
      %v286 = vunpack.c.h.b16 %v181
      %v287 = vunpack.c.l.b16 %v182
      %v288 = vunpack.c.h.b16 %v182
      %v289 = vunpack.c.l.b16 %v183
      %v290 = vunpack.c.h.b16 %v183
      %v291 = vunpack.c.l.b16 %v184
      %v292 = vunpack.c.h.b16 %v184
      %v293 = vunpack.c.l.b16 %v185
      %v294 = vunpack.c.h.b16 %v185
      %v295 = vunpack.c.l.b16 %v186
      %v296 = vunpack.c.h.b16 %v186
      %v297 = vunpack.c.l.b16 %v187
      %v298 = vunpack.c.h.b16 %v187
      %v299 = vunpack.c.l.b16 %v188
      %v300 = vunpack.c.h.b16 %v188
      %v301 = vunpack.c.l.b16 %v189
      %v302 = vunpack.c.h.b16 %v189
      %v303 = vunpack.c.l.b16 %v190
      %v304 = vunpack.c.h.b16 %v190
      %v305 = vunpack.c.l.b16 %v191
      %v306 = vunpack.c.h.b16 %v191
      %v307 = vunpack.c.l.b16 %v192
      %v308 = vunpack.c.h.b16 %v192
      %v309 = vunpack.c.l.b16 %v193
      %v310 = vunpack.c.h.b16 %v193
      %v311 = vunpack.c.l.b16 %v194
      %v312 = vunpack.c.h.b16 %v194
      %v313 = vunpack.c.l.b16 %v195
      %v314 = vunpack.c.h.b16 %v195
      %v315 = vunpack.c.l.b16 %v196
      %v316 = vunpack.c.h.b16 %v196
      %v317 = vunpack.c.l.b16 %v197
      %v318 = vunpack.c.h.b16 %v197
      %v319 = vunpack.c.l.b16 %v198
      %v320 = vunpack.c.h.b16 %v198
      %v321 = vunpack.c.l.b16 %v199
      %v322 = vunpack.c.h.b16 %v199
      %v323 = vunpack.c.l.b16 %v200
      %v324 = vunpack.c.h.b16 %v200
      %v325 = vunpack.c.l.b16 %v201
      %v326 = vunpack.c.h.b16 %v201
      %v327 = vunpack.c.l.b16 %v202
      %v328 = vunpack.c.h.b16 %v202
      %v329 = vunpack.c.l.b16 %v203
      %v330 = vunpack.c.h.b16 %v203
      %v331 = vunpack.c.l.b16 %v204
      %v332 = vunpack.c.h.b16 %v204
      %v333 = vunpack.c.l.b16 %v205
      %v334 = vunpack.c.h.b16 %v205
      %v335 = vunpack.c.l.b16 %v206
      %v336 = vunpack.c.h.b16 %v206
      %v337 = vunpack.c.l.b16 %v207
      %v338 = vunpack.c.h.b16 %v207
      %v339 = vunpack.c.l.b16 %v208
      %v340 = vunpack.c.h.b16 %v208
      %v341 = vpack.c.b16 %v279, %v277
      %v342 = vpack.c.b16 %v280, %v278
      %v343 = vpack.c.b16 %v283, %v281
      %v344 = vpack.c.b16 %v284, %v282
      %v345 = vpack.c.b16 %v287, %v285
      %v346 = vpack.c.b16 %v288, %v286
      %v347 = vpack.c.b16 %v291, %v289
      %v348 = vpack.c.b16 %v292, %v290
      %v349 = vpack.c.b16 %v295, %v293
      %v350 = vpack.c.b16 %v296, %v294
      %v351 = vpack.c.b16 %v299, %v297
      %v352 = vpack.c.b16 %v300, %v298
      %v353 = vpack.c.b16 %v303, %v301
      %v354 = vpack.c.b16 %v304, %v302
      %v355 = vpack.c.b16 %v307, %v305
      %v356 = vpack.c.b16 %v308, %v306
      %v357 = vpack.c.b16 %v311, %v309
      %v358 = vpack.c.b16 %v312, %v310
      %v359 = vpack.c.b16 %v315, %v313
      %v360 = vpack.c.b16 %v316, %v314
      %v361 = vpack.c.b16 %v319, %v317
      %v362 = vpack.c.b16 %v320, %v318
      %v363 = vpack.c.b16 %v323, %v321
      %v364 = vpack.c.b16 %v324, %v322
      %v365 = vpack.c.b16 %v327, %v325
      %v366 = vpack.c.b16 %v328, %v326
      %v367 = vpack.c.b16 %v331, %v329
      %v368 = vpack.c.b16 %v332, %v330
      %v369 = vpack.c.b16 %v335, %v333
      %v370 = vpack.c.b16 %v336, %v334
      %v371 = vpack.c.b16 %v339, %v337
      %v372 = vpack.c.b16 %v340, %v338
      %v437 = vunpack.c.l.b16 %v209
      %v438 = vunpack.c.l.b16 %v210
      %v439 = vunpack.c.l.b16 %v211
      %v440 = vunpack.c.l.b16 %v212
      %v441 = vunpack.c.l.b16 %v213
      %v442 = vunpack.c.l.b16 %v214
      %v443 = vunpack.c.l.b16 %v215
      %v444 = vunpack.c.l.b16 %v216
      %v445 = vunpack.c.l.b16 %v217
      %v446 = vunpack.c.l.b16 %v218
      %v447 = vunpack.c.l.b16 %v219
      %v448 = vunpack.c.l.b16 %v220
      %v449 = vunpack.c.l.b16 %v221
      %v450 = vunpack.c.l.b16 %v222
      %v451 = vunpack.c.l.b16 %v223
      %v452 = vunpack.c.l.b16 %v224
      %v453 = vunpack.c.l.b16 %v225
      %v454 = vunpack.c.l.b16 %v226
      %v455 = vunpack.c.l.b16 %v227
      %v456 = vunpack.c.l.b16 %v228
      %v457 = vunpack.c.l.b16 %v229
      %v458 = vunpack.c.l.b16 %v230
      %v459 = vunpack.c.l.b16 %v231
      %v460 = vunpack.c.l.b16 %v232
      %v461 = vunpack.c.l.b16 %v233
      %v462 = vunpack.c.l.b16 %v234
      %v463 = vunpack.c.l.b16 %v235
      %v464 = vunpack.c.l.b16 %v236
      %v465 = vunpack.c.l.b16 %v237
      %v466 = vunpack.c.l.b16 %v238
      %v467 = vunpack.c.l.b16 %v239
      %v468 = vunpack.c.l.b16 %v240
      %v469 = vpack.c.b16 %v438, %v437
      %v470 = vpack.c.b16 %v440, %v439
      %v471 = vpack.c.b16 %v442, %v441
      %v472 = vpack.c.b16 %v444, %v443
      %v473 = vpack.c.b16 %v446, %v445
      %v474 = vpack.c.b16 %v448, %v447
      %v475 = vpack.c.b16 %v450, %v449
      %v476 = vpack.c.b16 %v452, %v451
      %v477 = vpack.c.b16 %v454, %v453
      %v478 = vpack.c.b16 %v456, %v455
      %v479 = vpack.c.b16 %v458, %v457
      %v480 = vpack.c.b16 %v460, %v459
      %v481 = vpack.c.b16 %v462, %v461
      %v482 = vpack.c.b16 %v464, %v463
      %v483 = vpack.c.b16 %v466, %v465
      %v484 = vpack.c.b16 %v468, %v467
      %501 = vmatpush.bf16.msra.mxu0 %v476
      %502 = vmatpush.bf16.msra.mxu0 %v475
      %503 = vmatpush.bf16.msra.mxu0 %v474
      %504 = vmatpush.bf16.msra.mxu0 %v473
      %505 = vmatpush.bf16.msra.mxu0 %v472
      %506 = vmatpush.bf16.msra.mxu0 %v471
      %507 = vmatpush.bf16.msra.mxu0 %v470
      %508 = vmatpush.bf16.msra.mxu0 %v469
      %509 = vmatmul.bf16.gmra.mxu0 %v341
      %v510 = vpop.f32.mrf.mxu0
      %v511 = vadd.f32 %v243, %v510
      %v512 = vpop.f32.mrf.mxu0
      %v513 = vadd.f32 %v243, %v512
      %514 = vmatmul.bf16.gmra.mxu0 %v343
      %v515 = vpop.f32.mrf.mxu0
      %v516 = vadd.f32 %v243, %v515
      %v517 = vpop.f32.mrf.mxu0
      %v518 = vadd.f32 %v243, %v517
      %519 = vmatmul.bf16.gmra.mxu0 %v345
      %v520 = vpop.f32.mrf.mxu0
      %v521 = vadd.f32 %v243, %v520
      %v522 = vpop.f32.mrf.mxu0
      %v523 = vadd.f32 %v243, %v522
      %524 = vmatmul.bf16.gmra.mxu0 %v347
      %v525 = vpop.f32.mrf.mxu0
      %v526 = vadd.f32 %v243, %v525
      %v527 = vpop.f32.mrf.mxu0
      %v528 = vadd.f32 %v243, %v527
      %529 = vmatmul.bf16.gmra.mxu0 %v349
      %v530 = vpop.f32.mrf.mxu0
      %v531 = vadd.f32 %v243, %v530
      %v532 = vpop.f32.mrf.mxu0
      %v533 = vadd.f32 %v243, %v532
      %534 = vmatmul.bf16.gmra.mxu0 %v351
      %v535 = vpop.f32.mrf.mxu0
      %v536 = vadd.f32 %v243, %v535
      %v537 = vpop.f32.mrf.mxu0
      %v538 = vadd.f32 %v243, %v537
      %539 = vmatmul.bf16.gmra.mxu0 %v353
      %v540 = vpop.f32.mrf.mxu0
      %v541 = vadd.f32 %v243, %v540
      %v542 = vpop.f32.mrf.mxu0
      %v543 = vadd.f32 %v243, %v542
      %544 = vmatmul.bf16.gmra.mxu0 %v355
      %v545 = vpop.f32.mrf.mxu0
      %v546 = vadd.f32 %v243, %v545
      %v547 = vpop.f32.mrf.mxu0
      %v548 = vadd.f32 %v243, %v547
      %549 = vmatmul.bf16.gmra.mxu0 %v357
      %v550 = vpop.f32.mrf.mxu0
      %v551 = vadd.f32 %v243, %v550
      %v552 = vpop.f32.mrf.mxu0
      %v553 = vadd.f32 %v243, %v552
      %554 = vmatmul.bf16.gmra.mxu0 %v359
      %v555 = vpop.f32.mrf.mxu0
      %v556 = vadd.f32 %v243, %v555
      %v557 = vpop.f32.mrf.mxu0
      %v558 = vadd.f32 %v243, %v557
      %559 = vmatmul.bf16.gmra.mxu0 %v361
      %v560 = vpop.f32.mrf.mxu0
      %v561 = vadd.f32 %v243, %v560
      %v562 = vpop.f32.mrf.mxu0
      %v563 = vadd.f32 %v243, %v562
      %564 = vmatmul.bf16.gmra.mxu0 %v363
      %v565 = vpop.f32.mrf.mxu0
      %v566 = vadd.f32 %v243, %v565
      %v567 = vpop.f32.mrf.mxu0
      %v568 = vadd.f32 %v243, %v567
      %569 = vmatmul.bf16.gmra.mxu0 %v365
      %v570 = vpop.f32.mrf.mxu0
      %v571 = vadd.f32 %v243, %v570
      %v572 = vpop.f32.mrf.mxu0
      %v573 = vadd.f32 %v243, %v572
      %574 = vmatmul.bf16.gmra.mxu0 %v367
      %v575 = vpop.f32.mrf.mxu0
      %v576 = vadd.f32 %v243, %v575
      %v577 = vpop.f32.mrf.mxu0
      %v578 = vadd.f32 %v243, %v577
      %579 = vmatmul.bf16.gmra.mxu0 %v369
      %v580 = vpop.f32.mrf.mxu0
      %v581 = vadd.f32 %v243, %v580
      %v582 = vpop.f32.mrf.mxu0
      %v583 = vadd.f32 %v243, %v582
      %584 = vmatmul.bf16.gmra.mxu0 %v371
      %v585 = vpop.f32.mrf.mxu0
      %v586 = vadd.f32 %v243, %v585
      %v587 = vpop.f32.mrf.mxu0
      %v588 = vadd.f32 %v243, %v587
      %589 = vdwg.mxu0
      %590 = vmatpush.bf16.msra.mxu0 %v484
      %591 = vmatpush.bf16.msra.mxu0 %v483
      %592 = vmatpush.bf16.msra.mxu0 %v482
      %593 = vmatpush.bf16.msra.mxu0 %v481
      %594 = vmatpush.bf16.msra.mxu0 %v480
      %595 = vmatpush.bf16.msra.mxu0 %v479
      %596 = vmatpush.bf16.msra.mxu0 %v478
      %597 = vmatpush.bf16.msra.mxu0 %v477
      %598 = vmatmul.bf16.gmra.mxu0 %v342
      %v599 = vpop.f32.mrf.mxu0
      %v600 = vadd.f32 %v511, %v599
      %v601 = vpop.f32.mrf.mxu0
      %v602 = vadd.f32 %v513, %v601
      %603 = vmatmul.bf16.gmra.mxu0 %v344
      %v604 = vpop.f32.mrf.mxu0
      %v605 = vadd.f32 %v516, %v604
      %v606 = vpop.f32.mrf.mxu0
      %v607 = vadd.f32 %v518, %v606
      %608 = vmatmul.bf16.gmra.mxu0 %v346
      %v609 = vpop.f32.mrf.mxu0
      %v610 = vadd.f32 %v521, %v609
      %v611 = vpop.f32.mrf.mxu0
      %v612 = vadd.f32 %v523, %v611
      %613 = vmatmul.bf16.gmra.mxu0 %v348
      %v614 = vpop.f32.mrf.mxu0
      %v615 = vadd.f32 %v526, %v614
      %v616 = vpop.f32.mrf.mxu0
      %v617 = vadd.f32 %v528, %v616
      %618 = vmatmul.bf16.gmra.mxu0 %v350
      %v619 = vpop.f32.mrf.mxu0
      %v620 = vadd.f32 %v531, %v619
      %v621 = vpop.f32.mrf.mxu0
      %v622 = vadd.f32 %v533, %v621
      %623 = vmatmul.bf16.gmra.mxu0 %v352
      %v624 = vpop.f32.mrf.mxu0
      %v625 = vadd.f32 %v536, %v624
      %v626 = vpop.f32.mrf.mxu0
      %v627 = vadd.f32 %v538, %v626
      %628 = vmatmul.bf16.gmra.mxu0 %v354
      %v629 = vpop.f32.mrf.mxu0
      %v630 = vadd.f32 %v541, %v629
      %v631 = vpop.f32.mrf.mxu0
      %v632 = vadd.f32 %v543, %v631
      %633 = vmatmul.bf16.gmra.mxu0 %v356
      %v634 = vpop.f32.mrf.mxu0
      %v635 = vadd.f32 %v546, %v634
      %v636 = vpop.f32.mrf.mxu0
      %v637 = vadd.f32 %v548, %v636
      %638 = vmatmul.bf16.gmra.mxu0 %v358
      %v639 = vpop.f32.mrf.mxu0
      %v640 = vadd.f32 %v551, %v639
      %v641 = vpop.f32.mrf.mxu0
      %v642 = vadd.f32 %v553, %v641
      %643 = vmatmul.bf16.gmra.mxu0 %v360
      %v644 = vpop.f32.mrf.mxu0
      %v645 = vadd.f32 %v556, %v644
      %v646 = vpop.f32.mrf.mxu0
      %v647 = vadd.f32 %v558, %v646
      %648 = vmatmul.bf16.gmra.mxu0 %v362
      %v649 = vpop.f32.mrf.mxu0
      %v650 = vadd.f32 %v561, %v649
      %v651 = vpop.f32.mrf.mxu0
      %v652 = vadd.f32 %v563, %v651
      %653 = vmatmul.bf16.gmra.mxu0 %v364
      %v654 = vpop.f32.mrf.mxu0
      %v655 = vadd.f32 %v566, %v654
      %v656 = vpop.f32.mrf.mxu0
      %v657 = vadd.f32 %v568, %v656
      %658 = vmatmul.bf16.gmra.mxu0 %v366
      %v659 = vpop.f32.mrf.mxu0
      %v660 = vadd.f32 %v571, %v659
      %v661 = vpop.f32.mrf.mxu0
      %v662 = vadd.f32 %v573, %v661
      %663 = vmatmul.bf16.gmra.mxu0 %v368
      %v664 = vpop.f32.mrf.mxu0
      %v665 = vadd.f32 %v576, %v664
      %v666 = vpop.f32.mrf.mxu0
      %v667 = vadd.f32 %v578, %v666
      %668 = vmatmul.bf16.gmra.mxu0 %v370
      %v669 = vpop.f32.mrf.mxu0
      %v670 = vadd.f32 %v581, %v669
      %v671 = vpop.f32.mrf.mxu0
      %v672 = vadd.f32 %v583, %v671
      %673 = vmatmul.bf16.gmra.mxu0 %v372
      %v674 = vpop.f32.mrf.mxu0
      %v675 = vadd.f32 %v586, %v674
      %v676 = vpop.f32.mrf.mxu0
      %v677 = vadd.f32 %v588, %v676
      %678 = vdwg.mxu0
      %v679 = vlaneseq
      %v680 = vand.u32 %v679, 127
      %vm681 = vcmp.ge.s32.totalorder %v680, 18
      %v682 = vxor.u32 %v600, 2147483648
      %v683 = vxor.u32 %v602, 2147483648
      %v684 = vxor.u32 %v605, 2147483648
      %v685 = vxor.u32 %v607, 2147483648
      %v686 = vxor.u32 %v610, 2147483648
      %v687 = vxor.u32 %v612, 2147483648
      %v688 = vxor.u32 %v615, 2147483648
      %v689 = vxor.u32 %v617, 2147483648
      %v690 = vxor.u32 %v620, 2147483648
      %v691 = vxor.u32 %v622, 2147483648
      %v692 = vxor.u32 %v625, 2147483648
      %v693 = vxor.u32 %v627, 2147483648
      %v694 = vxor.u32 %v630, 2147483648
      %v695 = vxor.u32 %v632, 2147483648
      %v696 = vxor.u32 %v635, 2147483648
      %v697 = vxor.u32 %v637, 2147483648
      %v698 = vxor.u32 %v640, 2147483648
      %v699 = vxor.u32 %v642, 2147483648
      %v700 = vxor.u32 %v645, 2147483648
      %v701 = vxor.u32 %v647, 2147483648
      %v702 = vxor.u32 %v650, 2147483648
      %v703 = vxor.u32 %v652, 2147483648
      %v704 = vxor.u32 %v655, 2147483648
      %v705 = vxor.u32 %v657, 2147483648
      %v706 = vxor.u32 %v660, 2147483648
      %v707 = vxor.u32 %v662, 2147483648
      %v708 = vxor.u32 %v665, 2147483648
      %v709 = vxor.u32 %v667, 2147483648
      %v710 = vxor.u32 %v670, 2147483648
      %v711 = vxor.u32 %v672, 2147483648
      %v712 = vxor.u32 %v675, 2147483648
      %v713 = vxor.u32 %v677, 2147483648
      %v714 = vmul.f32 %v682, 1.442695
      %v715 = vpow.pop %v714
      %v716 = vmul.f32 %v683, 1.442695
      %v717 = vpow.pop %v716
      %v718 = vmul.f32 %v684, 1.442695
      %v719 = vpow.pop %v718
      %v720 = vmul.f32 %v685, 1.442695
      %v721 = vpow.pop %v720
      %v722 = vmul.f32 %v686, 1.442695
      %v723 = vpow.pop %v722
      %v724 = vmul.f32 %v687, 1.442695
      %v725 = vpow.pop %v724
      %v726 = vmul.f32 %v688, 1.442695
      %v727 = vpow.pop %v726
      %v728 = vmul.f32 %v689, 1.442695
      %v729 = vpow.pop %v728
      %v730 = vmul.f32 %v690, 1.442695
      %v731 = vpow.pop %v730
      %v732 = vmul.f32 %v691, 1.442695
      %v733 = vpow.pop %v732
      %v734 = vmul.f32 %v692, 1.442695
      %v735 = vpow.pop %v734
      %v736 = vmul.f32 %v693, 1.442695
      %v737 = vpow.pop %v736
      %v738 = vmul.f32 %v694, 1.442695
      %v739 = vpow.pop %v738
      %v740 = vmul.f32 %v695, 1.442695
      %v741 = vpow.pop %v740
      %v742 = vmul.f32 %v696, 1.442695
      %v743 = vpow.pop %v742
      %v744 = vmul.f32 %v697, 1.442695
      %v745 = vpow.pop %v744
      %v746 = vmul.f32 %v698, 1.442695
      %v747 = vpow.pop %v746
      %v748 = vmul.f32 %v699, 1.442695
      %v749 = vpow.pop %v748
      %v750 = vmul.f32 %v700, 1.442695
      %v751 = vpow.pop %v750
      %v752 = vmul.f32 %v701, 1.442695
      %v753 = vpow.pop %v752
      %v754 = vmul.f32 %v702, 1.442695
      %v755 = vpow.pop %v754
      %v756 = vmul.f32 %v703, 1.442695
      %v757 = vpow.pop %v756
      %v758 = vmul.f32 %v704, 1.442695
      %v759 = vpow.pop %v758
      %v760 = vmul.f32 %v705, 1.442695
      %v761 = vpow.pop %v760
      %v762 = vmul.f32 %v706, 1.442695
      %v763 = vpow.pop %v762
      %v764 = vmul.f32 %v707, 1.442695
      %v765 = vpow.pop %v764
      %v766 = vmul.f32 %v708, 1.442695
      %v767 = vpow.pop %v766
      %v768 = vmul.f32 %v709, 1.442695
      %v769 = vpow.pop %v768
      %v770 = vmul.f32 %v710, 1.442695
      %v771 = vpow.pop %v770
      %v772 = vmul.f32 %v711, 1.442695
      %v773 = vpow.pop %v772
      %v774 = vmul.f32 %v712, 1.442695
      %v775 = vpow.pop %v774
      %v776 = vmul.f32 %v713, 1.442695
      %v777 = vpow.pop %v776
      %v778 = vadd.f32 %v715, 1.0
      %v779 = vadd.f32 %v717, 1.0
      %v780 = vadd.f32 %v719, 1.0
      %v781 = vadd.f32 %v721, 1.0
      %v782 = vadd.f32 %v723, 1.0
      %v783 = vadd.f32 %v725, 1.0
      %v784 = vadd.f32 %v727, 1.0
      %v785 = vadd.f32 %v729, 1.0
      %v786 = vadd.f32 %v731, 1.0
      %v787 = vadd.f32 %v733, 1.0
      %v788 = vadd.f32 %v735, 1.0
      %v789 = vadd.f32 %v737, 1.0
      %v790 = vadd.f32 %v739, 1.0
      %v791 = vadd.f32 %v741, 1.0
      %v792 = vadd.f32 %v743, 1.0
      %v793 = vadd.f32 %v745, 1.0
      %v794 = vadd.f32 %v747, 1.0
      %v795 = vadd.f32 %v749, 1.0
      %v796 = vadd.f32 %v751, 1.0
      %v797 = vadd.f32 %v753, 1.0
      %v798 = vadd.f32 %v755, 1.0
      %v799 = vadd.f32 %v757, 1.0
      %v800 = vadd.f32 %v759, 1.0
      %v801 = vadd.f32 %v761, 1.0
      %v802 = vadd.f32 %v763, 1.0
      %v803 = vadd.f32 %v765, 1.0
      %v804 = vadd.f32 %v767, 1.0
      %v805 = vadd.f32 %v769, 1.0
      %v806 = vadd.f32 %v771, 1.0
      %v807 = vadd.f32 %v773, 1.0
      %v808 = vadd.f32 %v775, 1.0
      %v809 = vadd.f32 %v777, 1.0
      %v810 = vrcp.pop %v778
      %v811 = vmul.f32 %v778, %v810
      %v812 = vsub.f32 1.0, %v811
      %v813 = vmul.f32 %v810, %v812
      %v814 = vadd.f32 %v810, %v813
      %vm815 = vweird.f32 %v778
      %vm816 = vweird.f32 %v810
      %vm817 = vmor %vm815, %vm816
      %v818 = vsel %vm817, %v810, %v814
      %v819 = vand.u32 2147483647, %v778
      %vm820 = vcmp.eq.f32.partialorder %v819, 8.507059e+37
      %v821 = vand.u32 %v778, 2147483648
      %v822 = vor.u32 1.1754944e-38, %v821
      %v823 = vsel %vm820, %v822, %v818
      %v824 = vmul.f32 1.0, %v823
      %v825 = vrcp.pop %v779
      %v826 = vmul.f32 %v779, %v825
      %v827 = vsub.f32 1.0, %v826
      %v828 = vmul.f32 %v825, %v827
      %v829 = vadd.f32 %v825, %v828
      %vm830 = vweird.f32 %v779
      %vm831 = vweird.f32 %v825
      %vm832 = vmor %vm830, %vm831
      %v833 = vsel %vm832, %v825, %v829
      %v834 = vand.u32 2147483647, %v779
      %vm835 = vcmp.eq.f32.partialorder %v834, 8.507059e+37
      %v836 = vand.u32 %v779, 2147483648
      %v837 = vor.u32 1.1754944e-38, %v836
      %v838 = vsel %vm835, %v837, %v833
      %v839 = vmul.f32 1.0, %v838
      %v840 = vrcp.pop %v780
      %v841 = vmul.f32 %v780, %v840
      %v842 = vsub.f32 1.0, %v841
      %v843 = vmul.f32 %v840, %v842
      %v844 = vadd.f32 %v840, %v843
      %vm845 = vweird.f32 %v780
      %vm846 = vweird.f32 %v840
      %vm847 = vmor %vm845, %vm846
      %v848 = vsel %vm847, %v840, %v844
      %v849 = vand.u32 2147483647, %v780
      %vm850 = vcmp.eq.f32.partialorder %v849, 8.507059e+37
      %v851 = vand.u32 %v780, 2147483648
      %v852 = vor.u32 1.1754944e-38, %v851
      %v853 = vsel %vm850, %v852, %v848
      %v854 = vmul.f32 1.0, %v853
      %v855 = vrcp.pop %v781
      %v856 = vmul.f32 %v781, %v855
      %v857 = vsub.f32 1.0, %v856
      %v858 = vmul.f32 %v855, %v857
      %v859 = vadd.f32 %v855, %v858
      %vm860 = vweird.f32 %v781
      %vm861 = vweird.f32 %v855
      %vm862 = vmor %vm860, %vm861
      %v863 = vsel %vm862, %v855, %v859
      %v864 = vand.u32 2147483647, %v781
      %vm865 = vcmp.eq.f32.partialorder %v864, 8.507059e+37
      %v866 = vand.u32 %v781, 2147483648
      %v867 = vor.u32 1.1754944e-38, %v866
      %v868 = vsel %vm865, %v867, %v863
      %v869 = vmul.f32 1.0, %v868
      %v870 = vrcp.pop %v782
      %v871 = vmul.f32 %v782, %v870
      %v872 = vsub.f32 1.0, %v871
      %v873 = vmul.f32 %v870, %v872
      %v874 = vadd.f32 %v870, %v873
      %vm875 = vweird.f32 %v782
      %vm876 = vweird.f32 %v870
      %vm877 = vmor %vm875, %vm876
      %v878 = vsel %vm877, %v870, %v874
      %v879 = vand.u32 2147483647, %v782
      %vm880 = vcmp.eq.f32.partialorder %v879, 8.507059e+37
      %v881 = vand.u32 %v782, 2147483648
      %v882 = vor.u32 1.1754944e-38, %v881
      %v883 = vsel %vm880, %v882, %v878
      %v884 = vmul.f32 1.0, %v883
      %v885 = vrcp.pop %v783
      %v886 = vmul.f32 %v783, %v885
      %v887 = vsub.f32 1.0, %v886
      %v888 = vmul.f32 %v885, %v887
      %v889 = vadd.f32 %v885, %v888
      %vm890 = vweird.f32 %v783
      %vm891 = vweird.f32 %v885
      %vm892 = vmor %vm890, %vm891
      %v893 = vsel %vm892, %v885, %v889
      %v894 = vand.u32 2147483647, %v783
      %vm895 = vcmp.eq.f32.partialorder %v894, 8.507059e+37
      %v896 = vand.u32 %v783, 2147483648
      %v897 = vor.u32 1.1754944e-38, %v896
      %v898 = vsel %vm895, %v897, %v893
      %v899 = vmul.f32 1.0, %v898
      %v900 = vrcp.pop %v784
      %v901 = vmul.f32 %v784, %v900
      %v902 = vsub.f32 1.0, %v901
      %v903 = vmul.f32 %v900, %v902
      %v904 = vadd.f32 %v900, %v903
      %vm905 = vweird.f32 %v784
      %vm906 = vweird.f32 %v900
      %vm907 = vmor %vm905, %vm906
      %v908 = vsel %vm907, %v900, %v904
      %v909 = vand.u32 2147483647, %v784
      %vm910 = vcmp.eq.f32.partialorder %v909, 8.507059e+37
      %v911 = vand.u32 %v784, 2147483648
      %v912 = vor.u32 1.1754944e-38, %v911
      %v913 = vsel %vm910, %v912, %v908
      %v914 = vmul.f32 1.0, %v913
      %v915 = vrcp.pop %v785
      %v916 = vmul.f32 %v785, %v915
      %v917 = vsub.f32 1.0, %v916
      %v918 = vmul.f32 %v915, %v917
      %v919 = vadd.f32 %v915, %v918
      %vm920 = vweird.f32 %v785
      %vm921 = vweird.f32 %v915
      %vm922 = vmor %vm920, %vm921
      %v923 = vsel %vm922, %v915, %v919
      %v924 = vand.u32 2147483647, %v785
      %vm925 = vcmp.eq.f32.partialorder %v924, 8.507059e+37
      %v926 = vand.u32 %v785, 2147483648
      %v927 = vor.u32 1.1754944e-38, %v926
      %v928 = vsel %vm925, %v927, %v923
      %v929 = vmul.f32 1.0, %v928
      %v930 = vrcp.pop %v786
      %v931 = vmul.f32 %v786, %v930
      %v932 = vsub.f32 1.0, %v931
      %v933 = vmul.f32 %v930, %v932
      %v934 = vadd.f32 %v930, %v933
      %vm935 = vweird.f32 %v786
      %vm936 = vweird.f32 %v930
      %vm937 = vmor %vm935, %vm936
      %v938 = vsel %vm937, %v930, %v934
      %v939 = vand.u32 2147483647, %v786
      %vm940 = vcmp.eq.f32.partialorder %v939, 8.507059e+37
      %v941 = vand.u32 %v786, 2147483648
      %v942 = vor.u32 1.1754944e-38, %v941
      %v943 = vsel %vm940, %v942, %v938
      %v944 = vmul.f32 1.0, %v943
      %v945 = vrcp.pop %v787
      %v946 = vmul.f32 %v787, %v945
      %v947 = vsub.f32 1.0, %v946
      %v948 = vmul.f32 %v945, %v947
      %v949 = vadd.f32 %v945, %v948
      %vm950 = vweird.f32 %v787
      %vm951 = vweird.f32 %v945
      %vm952 = vmor %vm950, %vm951
      %v953 = vsel %vm952, %v945, %v949
      %v954 = vand.u32 2147483647, %v787
      %vm955 = vcmp.eq.f32.partialorder %v954, 8.507059e+37
      %v956 = vand.u32 %v787, 2147483648
      %v957 = vor.u32 1.1754944e-38, %v956
      %v958 = vsel %vm955, %v957, %v953
      %v959 = vmul.f32 1.0, %v958
      %v960 = vrcp.pop %v788
      %v961 = vmul.f32 %v788, %v960
      %v962 = vsub.f32 1.0, %v961
      %v963 = vmul.f32 %v960, %v962
      %v964 = vadd.f32 %v960, %v963
      %vm965 = vweird.f32 %v788
      %vm966 = vweird.f32 %v960
      %vm967 = vmor %vm965, %vm966
      %v968 = vsel %vm967, %v960, %v964
      %v969 = vand.u32 2147483647, %v788
      %vm970 = vcmp.eq.f32.partialorder %v969, 8.507059e+37
      %v971 = vand.u32 %v788, 2147483648
      %v972 = vor.u32 1.1754944e-38, %v971
      %v973 = vsel %vm970, %v972, %v968
      %v974 = vmul.f32 1.0, %v973
      %v975 = vrcp.pop %v789
      %v976 = vmul.f32 %v789, %v975
      %v977 = vsub.f32 1.0, %v976
      %v978 = vmul.f32 %v975, %v977
      %v979 = vadd.f32 %v975, %v978
      %vm980 = vweird.f32 %v789
      %vm981 = vweird.f32 %v975
      %vm982 = vmor %vm980, %vm981
      %v983 = vsel %vm982, %v975, %v979
      %v984 = vand.u32 2147483647, %v789
      %vm985 = vcmp.eq.f32.partialorder %v984, 8.507059e+37
      %v986 = vand.u32 %v789, 2147483648
      %v987 = vor.u32 1.1754944e-38, %v986
      %v988 = vsel %vm985, %v987, %v983
      %v989 = vmul.f32 1.0, %v988
      %v990 = vrcp.pop %v790
      %v991 = vmul.f32 %v790, %v990
      %v992 = vsub.f32 1.0, %v991
      %v993 = vmul.f32 %v990, %v992
      %v994 = vadd.f32 %v990, %v993
      %vm995 = vweird.f32 %v790
      %vm996 = vweird.f32 %v990
      %vm997 = vmor %vm995, %vm996
      %v998 = vsel %vm997, %v990, %v994
      %v999 = vand.u32 2147483647, %v790
      %vm1000 = vcmp.eq.f32.partialorder %v999, 8.507059e+37
      %v1001 = vand.u32 %v790, 2147483648
      %v1002 = vor.u32 1.1754944e-38, %v1001
      %v1003 = vsel %vm1000, %v1002, %v998
      %v1004 = vmul.f32 1.0, %v1003
      %v1005 = vrcp.pop %v791
      %v1006 = vmul.f32 %v791, %v1005
      %v1007 = vsub.f32 1.0, %v1006
      %v1008 = vmul.f32 %v1005, %v1007
      %v1009 = vadd.f32 %v1005, %v1008
      %vm1010 = vweird.f32 %v791
      %vm1011 = vweird.f32 %v1005
      %vm1012 = vmor %vm1010, %vm1011
      %v1013 = vsel %vm1012, %v1005, %v1009
      %v1014 = vand.u32 2147483647, %v791
      %vm1015 = vcmp.eq.f32.partialorder %v1014, 8.507059e+37
      %v1016 = vand.u32 %v791, 2147483648
      %v1017 = vor.u32 1.1754944e-38, %v1016
      %v1018 = vsel %vm1015, %v1017, %v1013
      %v1019 = vmul.f32 1.0, %v1018
      %v1020 = vrcp.pop %v792
      %v1021 = vmul.f32 %v792, %v1020
      %v1022 = vsub.f32 1.0, %v1021
      %v1023 = vmul.f32 %v1020, %v1022
      %v1024 = vadd.f32 %v1020, %v1023
      %vm1025 = vweird.f32 %v792
      %vm1026 = vweird.f32 %v1020
      %vm1027 = vmor %vm1025, %vm1026
      %v1028 = vsel %vm1027, %v1020, %v1024
      %v1029 = vand.u32 2147483647, %v792
      %vm1030 = vcmp.eq.f32.partialorder %v1029, 8.507059e+37
      %v1031 = vand.u32 %v792, 2147483648
      %v1032 = vor.u32 1.1754944e-38, %v1031
      %v1033 = vsel %vm1030, %v1032, %v1028
      %v1034 = vmul.f32 1.0, %v1033
      %v1035 = vrcp.pop %v793
      %v1036 = vmul.f32 %v793, %v1035
      %v1037 = vsub.f32 1.0, %v1036
      %v1038 = vmul.f32 %v1035, %v1037
      %v1039 = vadd.f32 %v1035, %v1038
      %vm1040 = vweird.f32 %v793
      %vm1041 = vweird.f32 %v1035
      %vm1042 = vmor %vm1040, %vm1041
      %v1043 = vsel %vm1042, %v1035, %v1039
      %v1044 = vand.u32 2147483647, %v793
      %vm1045 = vcmp.eq.f32.partialorder %v1044, 8.507059e+37
      %v1046 = vand.u32 %v793, 2147483648
      %v1047 = vor.u32 1.1754944e-38, %v1046
      %v1048 = vsel %vm1045, %v1047, %v1043
      %v1049 = vmul.f32 1.0, %v1048
      %v1050 = vrcp.pop %v794
      %v1051 = vmul.f32 %v794, %v1050
      %v1052 = vsub.f32 1.0, %v1051
      %v1053 = vmul.f32 %v1050, %v1052
      %v1054 = vadd.f32 %v1050, %v1053
      %vm1055 = vweird.f32 %v794
      %vm1056 = vweird.f32 %v1050
      %vm1057 = vmor %vm1055, %vm1056
      %v1058 = vsel %vm1057, %v1050, %v1054
      %v1059 = vand.u32 2147483647, %v794
      %vm1060 = vcmp.eq.f32.partialorder %v1059, 8.507059e+37
      %v1061 = vand.u32 %v794, 2147483648
      %v1062 = vor.u32 1.1754944e-38, %v1061
      %v1063 = vsel %vm1060, %v1062, %v1058
      %v1064 = vmul.f32 1.0, %v1063
      %v1065 = vrcp.pop %v795
      %v1066 = vmul.f32 %v795, %v1065
      %v1067 = vsub.f32 1.0, %v1066
      %v1068 = vmul.f32 %v1065, %v1067
      %v1069 = vadd.f32 %v1065, %v1068
      %vm1070 = vweird.f32 %v795
      %vm1071 = vweird.f32 %v1065
      %vm1072 = vmor %vm1070, %vm1071
      %v1073 = vsel %vm1072, %v1065, %v1069
      %v1074 = vand.u32 2147483647, %v795
      %vm1075 = vcmp.eq.f32.partialorder %v1074, 8.507059e+37
      %v1076 = vand.u32 %v795, 2147483648
      %v1077 = vor.u32 1.1754944e-38, %v1076
      %v1078 = vsel %vm1075, %v1077, %v1073
      %v1079 = vmul.f32 1.0, %v1078
      %v1080 = vrcp.pop %v796
      %v1081 = vmul.f32 %v796, %v1080
      %v1082 = vsub.f32 1.0, %v1081
      %v1083 = vmul.f32 %v1080, %v1082
      %v1084 = vadd.f32 %v1080, %v1083
      %vm1085 = vweird.f32 %v796
      %vm1086 = vweird.f32 %v1080
      %vm1087 = vmor %vm1085, %vm1086
      %v1088 = vsel %vm1087, %v1080, %v1084
      %v1089 = vand.u32 2147483647, %v796
      %vm1090 = vcmp.eq.f32.partialorder %v1089, 8.507059e+37
      %v1091 = vand.u32 %v796, 2147483648
      %v1092 = vor.u32 1.1754944e-38, %v1091
      %v1093 = vsel %vm1090, %v1092, %v1088
      %v1094 = vmul.f32 1.0, %v1093
      %v1095 = vrcp.pop %v797
      %v1096 = vmul.f32 %v797, %v1095
      %v1097 = vsub.f32 1.0, %v1096
      %v1098 = vmul.f32 %v1095, %v1097
      %v1099 = vadd.f32 %v1095, %v1098
      %vm1100 = vweird.f32 %v797
      %vm1101 = vweird.f32 %v1095
      %vm1102 = vmor %vm1100, %vm1101
      %v1103 = vsel %vm1102, %v1095, %v1099
      %v1104 = vand.u32 2147483647, %v797
      %vm1105 = vcmp.eq.f32.partialorder %v1104, 8.507059e+37
      %v1106 = vand.u32 %v797, 2147483648
      %v1107 = vor.u32 1.1754944e-38, %v1106
      %v1108 = vsel %vm1105, %v1107, %v1103
      %v1109 = vmul.f32 1.0, %v1108
      %v1110 = vrcp.pop %v798
      %v1111 = vmul.f32 %v798, %v1110
      %v1112 = vsub.f32 1.0, %v1111
      %v1113 = vmul.f32 %v1110, %v1112
      %v1114 = vadd.f32 %v1110, %v1113
      %vm1115 = vweird.f32 %v798
      %vm1116 = vweird.f32 %v1110
      %vm1117 = vmor %vm1115, %vm1116
      %v1118 = vsel %vm1117, %v1110, %v1114
      %v1119 = vand.u32 2147483647, %v798
      %vm1120 = vcmp.eq.f32.partialorder %v1119, 8.507059e+37
      %v1121 = vand.u32 %v798, 2147483648
      %v1122 = vor.u32 1.1754944e-38, %v1121
      %v1123 = vsel %vm1120, %v1122, %v1118
      %v1124 = vmul.f32 1.0, %v1123
      %v1125 = vrcp.pop %v799
      %v1126 = vmul.f32 %v799, %v1125
      %v1127 = vsub.f32 1.0, %v1126
      %v1128 = vmul.f32 %v1125, %v1127
      %v1129 = vadd.f32 %v1125, %v1128
      %vm1130 = vweird.f32 %v799
      %vm1131 = vweird.f32 %v1125
      %vm1132 = vmor %vm1130, %vm1131
      %v1133 = vsel %vm1132, %v1125, %v1129
      %v1134 = vand.u32 2147483647, %v799
      %vm1135 = vcmp.eq.f32.partialorder %v1134, 8.507059e+37
      %v1136 = vand.u32 %v799, 2147483648
      %v1137 = vor.u32 1.1754944e-38, %v1136
      %v1138 = vsel %vm1135, %v1137, %v1133
      %v1139 = vmul.f32 1.0, %v1138
      %v1140 = vrcp.pop %v800
      %v1141 = vmul.f32 %v800, %v1140
      %v1142 = vsub.f32 1.0, %v1141
      %v1143 = vmul.f32 %v1140, %v1142
      %v1144 = vadd.f32 %v1140, %v1143
      %vm1145 = vweird.f32 %v800
      %vm1146 = vweird.f32 %v1140
      %vm1147 = vmor %vm1145, %vm1146
      %v1148 = vsel %vm1147, %v1140, %v1144
      %v1149 = vand.u32 2147483647, %v800
      %vm1150 = vcmp.eq.f32.partialorder %v1149, 8.507059e+37
      %v1151 = vand.u32 %v800, 2147483648
      %v1152 = vor.u32 1.1754944e-38, %v1151
      %v1153 = vsel %vm1150, %v1152, %v1148
      %v1154 = vmul.f32 1.0, %v1153
      %v1155 = vrcp.pop %v801
      %v1156 = vmul.f32 %v801, %v1155
      %v1157 = vsub.f32 1.0, %v1156
      %v1158 = vmul.f32 %v1155, %v1157
      %v1159 = vadd.f32 %v1155, %v1158
      %vm1160 = vweird.f32 %v801
      %vm1161 = vweird.f32 %v1155
      %vm1162 = vmor %vm1160, %vm1161
      %v1163 = vsel %vm1162, %v1155, %v1159
      %v1164 = vand.u32 2147483647, %v801
      %vm1165 = vcmp.eq.f32.partialorder %v1164, 8.507059e+37
      %v1166 = vand.u32 %v801, 2147483648
      %v1167 = vor.u32 1.1754944e-38, %v1166
      %v1168 = vsel %vm1165, %v1167, %v1163
      %v1169 = vmul.f32 1.0, %v1168
      %v1170 = vrcp.pop %v802
      %v1171 = vmul.f32 %v802, %v1170
      %v1172 = vsub.f32 1.0, %v1171
      %v1173 = vmul.f32 %v1170, %v1172
      %v1174 = vadd.f32 %v1170, %v1173
      %vm1175 = vweird.f32 %v802
      %vm1176 = vweird.f32 %v1170
      %vm1177 = vmor %vm1175, %vm1176
      %v1178 = vsel %vm1177, %v1170, %v1174
      %v1179 = vand.u32 2147483647, %v802
      %vm1180 = vcmp.eq.f32.partialorder %v1179, 8.507059e+37
      %v1181 = vand.u32 %v802, 2147483648
      %v1182 = vor.u32 1.1754944e-38, %v1181
      %v1183 = vsel %vm1180, %v1182, %v1178
      %v1184 = vmul.f32 1.0, %v1183
      %v1185 = vrcp.pop %v803
      %v1186 = vmul.f32 %v803, %v1185
      %v1187 = vsub.f32 1.0, %v1186
      %v1188 = vmul.f32 %v1185, %v1187
      %v1189 = vadd.f32 %v1185, %v1188
      %vm1190 = vweird.f32 %v803
      %vm1191 = vweird.f32 %v1185
      %vm1192 = vmor %vm1190, %vm1191
      %v1193 = vsel %vm1192, %v1185, %v1189
      %v1194 = vand.u32 2147483647, %v803
      %vm1195 = vcmp.eq.f32.partialorder %v1194, 8.507059e+37
      %v1196 = vand.u32 %v803, 2147483648
      %v1197 = vor.u32 1.1754944e-38, %v1196
      %v1198 = vsel %vm1195, %v1197, %v1193
      %v1199 = vmul.f32 1.0, %v1198
      %v1200 = vrcp.pop %v804
      %v1201 = vmul.f32 %v804, %v1200
      %v1202 = vsub.f32 1.0, %v1201
      %v1203 = vmul.f32 %v1200, %v1202
      %v1204 = vadd.f32 %v1200, %v1203
      %vm1205 = vweird.f32 %v804
      %vm1206 = vweird.f32 %v1200
      %vm1207 = vmor %vm1205, %vm1206
      %v1208 = vsel %vm1207, %v1200, %v1204
      %v1209 = vand.u32 2147483647, %v804
      %vm1210 = vcmp.eq.f32.partialorder %v1209, 8.507059e+37
      %v1211 = vand.u32 %v804, 2147483648
      %v1212 = vor.u32 1.1754944e-38, %v1211
      %v1213 = vsel %vm1210, %v1212, %v1208
      %v1214 = vmul.f32 1.0, %v1213
      %v1215 = vrcp.pop %v805
      %v1216 = vmul.f32 %v805, %v1215
      %v1217 = vsub.f32 1.0, %v1216
      %v1218 = vmul.f32 %v1215, %v1217
      %v1219 = vadd.f32 %v1215, %v1218
      %vm1220 = vweird.f32 %v805
      %vm1221 = vweird.f32 %v1215
      %vm1222 = vmor %vm1220, %vm1221
      %v1223 = vsel %vm1222, %v1215, %v1219
      %v1224 = vand.u32 2147483647, %v805
      %vm1225 = vcmp.eq.f32.partialorder %v1224, 8.507059e+37
      %v1226 = vand.u32 %v805, 2147483648
      %v1227 = vor.u32 1.1754944e-38, %v1226
      %v1228 = vsel %vm1225, %v1227, %v1223
      %v1229 = vmul.f32 1.0, %v1228
      %v1230 = vrcp.pop %v806
      %v1231 = vmul.f32 %v806, %v1230
      %v1232 = vsub.f32 1.0, %v1231
      %v1233 = vmul.f32 %v1230, %v1232
      %v1234 = vadd.f32 %v1230, %v1233
      %vm1235 = vweird.f32 %v806
      %vm1236 = vweird.f32 %v1230
      %vm1237 = vmor %vm1235, %vm1236
      %v1238 = vsel %vm1237, %v1230, %v1234
      %v1239 = vand.u32 2147483647, %v806
      %vm1240 = vcmp.eq.f32.partialorder %v1239, 8.507059e+37
      %v1241 = vand.u32 %v806, 2147483648
      %v1242 = vor.u32 1.1754944e-38, %v1241
      %v1243 = vsel %vm1240, %v1242, %v1238
      %v1244 = vmul.f32 1.0, %v1243
      %v1245 = vrcp.pop %v807
      %v1246 = vmul.f32 %v807, %v1245
      %v1247 = vsub.f32 1.0, %v1246
      %v1248 = vmul.f32 %v1245, %v1247
      %v1249 = vadd.f32 %v1245, %v1248
      %vm1250 = vweird.f32 %v807
      %vm1251 = vweird.f32 %v1245
      %vm1252 = vmor %vm1250, %vm1251
      %v1253 = vsel %vm1252, %v1245, %v1249
      %v1254 = vand.u32 2147483647, %v807
      %vm1255 = vcmp.eq.f32.partialorder %v1254, 8.507059e+37
      %v1256 = vand.u32 %v807, 2147483648
      %v1257 = vor.u32 1.1754944e-38, %v1256
      %v1258 = vsel %vm1255, %v1257, %v1253
      %v1259 = vmul.f32 1.0, %v1258
      %v1260 = vrcp.pop %v808
      %v1261 = vmul.f32 %v808, %v1260
      %v1262 = vsub.f32 1.0, %v1261
      %v1263 = vmul.f32 %v1260, %v1262
      %v1264 = vadd.f32 %v1260, %v1263
      %vm1265 = vweird.f32 %v808
      %vm1266 = vweird.f32 %v1260
      %vm1267 = vmor %vm1265, %vm1266
      %v1268 = vsel %vm1267, %v1260, %v1264
      %v1269 = vand.u32 2147483647, %v808
      %vm1270 = vcmp.eq.f32.partialorder %v1269, 8.507059e+37
      %v1271 = vand.u32 %v808, 2147483648
      %v1272 = vor.u32 1.1754944e-38, %v1271
      %v1273 = vsel %vm1270, %v1272, %v1268
      %v1274 = vmul.f32 1.0, %v1273
      %v1275 = vrcp.pop %v809
      %v1276 = vmul.f32 %v809, %v1275
      %v1277 = vsub.f32 1.0, %v1276
      %v1278 = vmul.f32 %v1275, %v1277
      %v1279 = vadd.f32 %v1275, %v1278
      %vm1280 = vweird.f32 %v809
      %vm1281 = vweird.f32 %v1275
      %vm1282 = vmor %vm1280, %vm1281
      %v1283 = vsel %vm1282, %v1275, %v1279
      %v1284 = vand.u32 2147483647, %v809
      %vm1285 = vcmp.eq.f32.partialorder %v1284, 8.507059e+37
      %v1286 = vand.u32 %v809, 2147483648
      %v1287 = vor.u32 1.1754944e-38, %v1286
      %v1288 = vsel %vm1285, %v1287, %v1283
      %v1289 = vmul.f32 1.0, %v1288
      %v1290 = vsel %vm681, %v824, %v600
      %v1291 = vsel %vm681, %v839, %v602
      %v1292 = vsel %vm681, %v854, %v605
      %v1293 = vsel %vm681, %v869, %v607
      %v1294 = vsel %vm681, %v884, %v610
      %v1295 = vsel %vm681, %v899, %v612
      %v1296 = vsel %vm681, %v914, %v615
      %v1297 = vsel %vm681, %v929, %v617
      %v1298 = vsel %vm681, %v944, %v620
      %v1299 = vsel %vm681, %v959, %v622
      %v1300 = vsel %vm681, %v974, %v625
      %v1301 = vsel %vm681, %v989, %v627
      %v1302 = vsel %vm681, %v1004, %v630
      %v1303 = vsel %vm681, %v1019, %v632
      %v1304 = vsel %vm681, %v1034, %v635
      %v1305 = vsel %vm681, %v1049, %v637
      %v1306 = vsel %vm681, %v1064, %v640
      %v1307 = vsel %vm681, %v1079, %v642
      %v1308 = vsel %vm681, %v1094, %v645
      %v1309 = vsel %vm681, %v1109, %v647
      %v1310 = vsel %vm681, %v1124, %v650
      %v1311 = vsel %vm681, %v1139, %v652
      %v1312 = vsel %vm681, %v1154, %v655
      %v1313 = vsel %vm681, %v1169, %v657
      %v1314 = vsel %vm681, %v1184, %v660
      %v1315 = vsel %vm681, %v1199, %v662
      %v1316 = vsel %vm681, %v1214, %v665
      %v1317 = vsel %vm681, %v1229, %v667
      %v1318 = vsel %vm681, %v1244, %v670
      %v1319 = vsel %vm681, %v1259, %v672
      %v1320 = vsel %vm681, %v1274, %v675
      %v1321 = vsel %vm681, %v1289, %v677
      %1322 = vst [vmem:[%s175] sm:$0xff] %v1290
      %1323 = vst [vmem:[%s175 + $0x8] sm:$0xff] %v1291
      %1324 = vst [vmem:[%s175 + $0x10] sm:$0xff] %v1292
      %1325 = vst [vmem:[%s175 + $0x18] sm:$0xff] %v1293
      %1326 = vst [vmem:[%s175 + $0x20] sm:$0xff] %v1294
      %1327 = vst [vmem:[%s175 + $0x28] sm:$0xff] %v1295
      %1328 = vst [vmem:[%s175 + $0x30] sm:$0xff] %v1296
      %1329 = vst [vmem:[%s175 + $0x38] sm:$0xff] %v1297
      %1330 = vst [vmem:[%s175 + $0x40] sm:$0xff] %v1298
      %1331 = vst [vmem:[%s175 + $0x48] sm:$0xff] %v1299
      %1332 = vst [vmem:[%s175 + $0x50] sm:$0xff] %v1300
      %1333 = vst [vmem:[%s175 + $0x58] sm:$0xff] %v1301
      %1334 = vst [vmem:[%s175 + $0x60] sm:$0xff] %v1302
      %1335 = vst [vmem:[%s175 + $0x68] sm:$0xff] %v1303
      %1336 = vst [vmem:[%s175 + $0x70] sm:$0xff] %v1304
      %1337 = vst [vmem:[%s175 + $0x78] sm:$0xff] %v1305
      %1338 = vst [vmem:[%s175 + $0x80] sm:$0xff] %v1306
      %1339 = vst [vmem:[%s175 + $0x88] sm:$0xff] %v1307
      %1340 = vst [vmem:[%s175 + $0x90] sm:$0xff] %v1308
      %1341 = vst [vmem:[%s175 + $0x98] sm:$0xff] %v1309
      %1342 = vst [vmem:[%s175 + $0xa0] sm:$0xff] %v1310
      %1343 = vst [vmem:[%s175 + $0xa8] sm:$0xff] %v1311
      %1344 = vst [vmem:[%s175 + $0xb0] sm:$0xff] %v1312
      %1345 = vst [vmem:[%s175 + $0xb8] sm:$0xff] %v1313
      %1346 = vst [vmem:[%s175 + $0xc0] sm:$0xff] %v1314
      %1347 = vst [vmem:[%s175 + $0xc8] sm:$0xff] %v1315
      %1348 = vst [vmem:[%s175 + $0xd0] sm:$0xff] %v1316
      %1349 = vst [vmem:[%s175 + $0xd8] sm:$0xff] %v1317
      %1350 = vst [vmem:[%s175 + $0xe0] sm:$0xff] %v1318
      %1351 = vst [vmem:[%s175 + $0xe8] sm:$0xff] %v1319
      %1352 = vst [vmem:[%s175 + $0xf0] sm:$0xff] %v1320
      %1353 = vst [vmem:[%s175 + $0xf8] sm:$0xff] %v1321
      %s1354 = smul.u32 32, %s14
      %p1355 = scmp.lt.s32.totalorder %s1354, 63
      %s1356 = scalar_select %p1355, %s1354, 63
      %s1357 = smul.addr %s1356, 8
      %s1358 = scalar_lea.vmem %s3, %s1357
      // Predicated region
      $region33: #{conv_update_forward.7} parent=31 // pred_check
        %p1359 = pneg %p100
      $region34: #{conv_update_forward.7} parent=31 // pred_check_branch
        %1361 = sbr.rel (%p1359) target = $region36
      $region35: #{conv_update_forward.7} parent=31 // pred_region
        %s1362 = smul.u32 32, %s14
      $region36: #{conv_update_forward.7} parent=31 // pred_fallthru
        _
    $region32: #{conv_update_forward.7} parent=5 // pred_fallthru
      _
    %p1363 = scmp.le.s32.totalorder 2, %s9
    // Predicated region
    $region37: #{conv_update_forward.7} parent=5 // pred_check
      %p1364 = pneg %p1363
    $region38: #{conv_update_forward.7} parent=5 // pred_check_branch
      %1366 = sbr.rel (%p1364) target = $region40
    $region39: #{conv_update_forward.7} parent=5 // pred_region
      %s1367 = ssub.s32 %s9, 2
      // Predicated region
      $region41: #{conv_update_forward.7} parent=39 // pred_check
        %p1368 = pneg %p106
      $region42: #{conv_update_forward.7} parent=39 // pred_check_branch
        %1370 = sbr.rel (%p1368) target = $region44
      $region43: #{conv_update_forward.7} parent=39 // pred_region
        %s1371 = smul.u32 32, %s15
        %p1372 = scmp.lt.s32.totalorder %s1371, 63
        %s1373 = scalar_select %p1372, %s1371, 63
        %s1374 = smul.addr %s1373, 8
        %s1375 = scalar_lea.vmem %s3, %s1374
      $region44: #{conv_update_forward.7} parent=39 // pred_fallthru
        _
    $region40: #{conv_update_forward.7} parent=5 // pred_fallthru
      _
  $region6: #{conv_update_forward.7} parent=0 // loop_footer
    %s13 = sadd.s32 1, %s9
  $region7: #{conv_update_forward.7} parent=0 // loop_footer_branch
    %8 = sbr.rel target = $region3
  $region8: #{conv_update_forward.7} parent=0 // loop_exit
    _

// kernel: conv_update_forward.8
$region0: #{conv_update_forward.8}
  #allocation0 [shape = 'u32[]', space=smem, size = 0x4, offset = 0x4, fixed_abs, tag = 'smem constant byte address 0x4 - core index']
  #allocation1 [shape = 'u32[72,128]{1,0:T(1,128)}', space=vmem, size = 0x9000, scoped, tag = 'internal scratch']
  %s0 = inlined_call_operand.vmem [shape: bf16[512,256], index: 0, kind: input, shape index: {}]
  %s1 = inlined_call_operand.vmem [shape: bf16[256,128], index: 1, kind: input, shape index: {}]
  %s2 = inlined_call_operand.vmem [shape: f32[1,128], index: 2, kind: input, shape index: {}]
  %s3 = inlined_call_operand.vmem [shape: f32[512,128], index: 3, kind: output, shape index: {}]
  %s4 = sld [smem:[#allocation0]]
  $region45: #{conv_update_forward.8} parent=0
    _
  %s6 = ssub.s32 1, %s4
  %s7 = scalar_select 0, %s6, %s4
  loop: start=0, step=1, limit=4
  $region2: #{conv_update_forward.8} parent=0 // loop_pre_header
    _
  $region3: #{conv_update_forward.8} parent=0 // loop_header
    %s9 = sphi 0, %s13
    %p10 = scmp.ge.s32.totalorder %s9, 4
    %s19 = sphi 0, %s21
    %s22 = sphi 0, %s19
    %s23 = sphi 0, %s22
    %s39 = sphi 0, %s23
    %s43 = sphi 0, %s43
    %s45 = sphi 0, %s43
    %s46 = sphi 0, %s45
    %s60 = sphi 0, %s46
    %s64 = sphi 0, %s64
    %s66 = sphi 0, %s64
    %s67 = sphi 0, %s66
    %s81 = sphi 0, %s67
    %s87 = sphi 0, %s89
    %s90 = sphi 0, %s87
    %s91 = sphi 0, %s90
    %s107 = sphi 0, %s91
  $region4: #{conv_update_forward.8} parent=0 // loop_header_branch
    %12 = sbr.rel (%p10) target = $region8
  $region5: #{conv_update_forward.8} parent=0 // loop_body
    %s14 = ssub.s32 %s9, 1
    %s15 = ssub.s32 %s9, 2
    %s16 = sadd.s32 %s9, 1
    %s17 = ssub.s32 %s9, %s16
    %p18 = scmp.eq.s32.totalorder %s17, 0
    %s20 = sadd.s32 %s19, 1
    %s21 = scalar_select %p18, %s19, %s20
    %p24 = pneg %p18
    %p25 = scmp.eq.s32.totalorder %s9, 1
    %p26 = por %p24, %p25
    %p27 = scmp.ne.s32.totalorder %s19, %s22
    %p28 = scmp.eq.s32.totalorder %s9, 0
    %p29 = por %p27, %p28
    %p30 = scmp.ne.s32.totalorder %s19, %s22
    %p31 = scmp.eq.s32.totalorder %s14, 1
    %p32 = por %p30, %p31
    %p33 = scmp.ne.s32.totalorder %s22, %s23
    %p34 = scmp.eq.s32.totalorder %s14, 0
    %p35 = por %p33, %p34
    %p36 = scmp.ne.s32.totalorder %s22, %s23
    %p37 = scmp.eq.s32.totalorder %s15, 1
    %p38 = por %p36, %p37
    %p40 = scmp.ne.s32.totalorder %s23, %s39
    %p41 = scmp.eq.s32.totalorder %s15, 0
    %p42 = por %p40, %p41
    %s44 = sadd.s32 %s43, 1
    %p47 = scmp.eq.s32.totalorder %s9, 1
    %p48 = scmp.ne.s32.totalorder %s43, %s45
    %p49 = scmp.eq.s32.totalorder %s9, 0
    %p50 = por %p48, %p49
    %p51 = scmp.ne.s32.totalorder %s43, %s45
    %p52 = scmp.eq.s32.totalorder %s14, 1
    %p53 = por %p51, %p52
    %p54 = scmp.ne.s32.totalorder %s45, %s46
    %p55 = scmp.eq.s32.totalorder %s14, 0
    %p56 = por %p54, %p55
    %p57 = scmp.ne.s32.totalorder %s45, %s46
    %p58 = scmp.eq.s32.totalorder %s15, 1
    %p59 = por %p57, %p58
    %p61 = scmp.ne.s32.totalorder %s46, %s60
    %p62 = scmp.eq.s32.totalorder %s15, 0
    %p63 = por %p61, %p62
    %s65 = sadd.s32 %s64, 1
    %p68 = scmp.eq.s32.totalorder %s9, 1
    %p69 = scmp.ne.s32.totalorder %s64, %s66
    %p70 = scmp.eq.s32.totalorder %s9, 0
    %p71 = por %p69, %p70
    %p72 = scmp.ne.s32.totalorder %s64, %s66
    %p73 = scmp.eq.s32.totalorder %s14, 1
    %p74 = por %p72, %p73
    %p75 = scmp.ne.s32.totalorder %s66, %s67
    %p76 = scmp.eq.s32.totalorder %s14, 0
    %p77 = por %p75, %p76
    %p78 = scmp.ne.s32.totalorder %s66, %s67
    %p79 = scmp.eq.s32.totalorder %s15, 1
    %p80 = por %p78, %p79
    %p82 = scmp.ne.s32.totalorder %s67, %s81
    %p83 = scmp.eq.s32.totalorder %s15, 0
    %p84 = por %p82, %p83
    %s85 = ssub.s32 %s9, %s16
    %p86 = scmp.eq.s32.totalorder %s85, 0
    %s88 = sadd.s32 %s87, 1
    %s89 = scalar_select %p86, %s87, %s88
    %p92 = pneg %p86
    %p93 = scmp.eq.s32.totalorder %s9, 1
    %p94 = por %p92, %p93
    %p95 = scmp.ne.s32.totalorder %s87, %s90
    %p96 = scmp.eq.s32.totalorder %s9, 0
    %p97 = por %p95, %p96
    %p98 = scmp.ne.s32.totalorder %s87, %s90
    %p99 = scmp.eq.s32.totalorder %s14, 1
    %p100 = por %p98, %p99
    %p101 = scmp.ne.s32.totalorder %s90, %s91
    %p102 = scmp.eq.s32.totalorder %s14, 0
    %p103 = por %p101, %p102
    %p104 = scmp.ne.s32.totalorder %s90, %s91
    %p105 = scmp.eq.s32.totalorder %s15, 1
    %p106 = por %p104, %p105
    %p108 = scmp.ne.s32.totalorder %s91, %s107
    %p109 = scmp.eq.s32.totalorder %s15, 0
    %p110 = por %p108, %p109
    %p111 = scmp.le.s32.totalorder 1, %s9
    %p112 = scmp.lt.s32.totalorder %s9, 3
    %p113 = pnand %p111, %p112
    %p114 = pneg %p113
    // Predicated region
    $region9: #{conv_update_forward.8} parent=5 // pred_check
      _
    $region10: #{conv_update_forward.8} parent=5 // pred_check_branch
      %116 = sbr.rel (%p113) target = $region12
    $region11: #{conv_update_forward.8} parent=5 // pred_region
      %s117 = ssub.s32 %s9, 1
      // Predicated region
      $region13: #{conv_update_forward.8} parent=11 // pred_check
        %p118 = pneg %p56
      $region14: #{conv_update_forward.8} parent=11 // pred_check_branch
        %120 = sbr.rel (%p118) target = $region16
      $region15: #{conv_update_forward.8} parent=11 // pred_region
        _
      $region16: #{conv_update_forward.8} parent=11 // pred_fallthru
        _
      // Predicated region
      $region17: #{conv_update_forward.8} parent=11 // pred_check
        %p121 = pneg %p77
      $region18: #{conv_update_forward.8} parent=11 // pred_check_branch
        %123 = sbr.rel (%p121) target = $region20
      $region19: #{conv_update_forward.8} parent=11 // pred_region
        _
      $region20: #{conv_update_forward.8} parent=11 // pred_fallthru
        _
    $region12: #{conv_update_forward.8} parent=5 // pred_fallthru
      _
    %p124 = scmp.lt.s32.totalorder %s9, 2
    // Predicated region
    $region21: #{conv_update_forward.8} parent=5 // pred_check
      %p125 = pneg %p124
    $region22: #{conv_update_forward.8} parent=5 // pred_check_branch
      %127 = sbr.rel (%p125) target = $region24
    $region23: #{conv_update_forward.8} parent=5 // pred_region
      // Predicated region
      $region25: #{conv_update_forward.8} parent=23 // pred_check
        %p128 = pneg %p29
      $region26: #{conv_update_forward.8} parent=23 // pred_check_branch
        %130 = sbr.rel (%p128) target = $region28
      $region27: #{conv_update_forward.8} parent=23 // pred_region
        %s131 = smul.u32 32, %s9
        %p132 = scmp.lt.s32.totalorder %s131, 63
        %s133 = scalar_select %p132, %s131, 63
        %s134 = smul.addr %s133, 2
        %s135 = smul.addr %s134, 4
        %s136 = scalar_lea.vmem %s0, %s135
        %s137 = smul.u32 32, %s9
      $region28: #{conv_update_forward.8} parent=23 // pred_fallthru
        _
    $region24: #{conv_update_forward.8} parent=5 // pred_fallthru
      _
    %p138 = scmp.le.s32.totalorder 1, %s9
    %p139 = scmp.lt.s32.totalorder %s9, 3
    %p140 = pnand %p138, %p139
    %p141 = pneg %p140
    // Predicated region
    $region29: #{conv_update_forward.8} parent=5 // pred_check
      _
    $region30: #{conv_update_forward.8} parent=5 // pred_check_branch
      %143 = sbr.rel (%p140) target = $region32
    $region31: #{conv_update_forward.8} parent=5 // pred_region
      %s144 = ssub.s32 %s9, 1
      %s145 = smul.u32 32, %s14
      %p146 = scmp.lt.s32.totalorder %s145, 63
      %s147 = scalar_select %p146, %s145, 63
      %s148 = smul.addr %s147, 2
      %s149 = smul.addr %s148, 4
      %s150 = scalar_lea.vmem %s0, %s149
      %p151 = pneg %p35
      %p152 = pneg %p32
      %p153 = pneg %p56
      %p154 = pneg %p53
      %p155 = pneg %p77
      %p156 = pneg %p74
      %p157 = pneg %p103
      %p158 = pneg %p100
      %s159 = smul.u32 32, %s14
      %p160 = scmp.lt.s32.totalorder %s159, 63
      %s161 = scalar_select %p160, %s159, 63
      %s162 = smul.addr %s161, 8
      %s163 = scalar_lea.vmem %s3, %s162
      %s164 = smul.u32 32, %s14
      %p165 = scmp.lt.s32.totalorder %s164, 63
      %s166 = scalar_select %p165, %s164, 63
      %s167 = smul.addr %s166, 2
      %s168 = smul.addr %s167, 4
      %s169 = scalar_lea.vmem %s0, %s168
      %s170 = smul.u32 32, %s14
      %s171 = smul.u32 32, %s14
      %p172 = scmp.lt.s32.totalorder %s171, 63
      %s173 = scalar_select %p172, %s171, 63
      %s174 = smul.addr %s173, 8
      %s175 = scalar_lea.vmem %s3, %s174
      %s176 = smul.u32 32, %s14
      %v177 = vld [vmem:[%s169] sm:$0xff]
      %v178 = vld [vmem:[%s169 + $0x8] sm:$0xff]
      %v179 = vld [vmem:[%s169 + $0x10] sm:$0xff]
      %v180 = vld [vmem:[%s169 + $0x18] sm:$0xff]
      %v181 = vld [vmem:[%s169 + $0x20] sm:$0xff]
      %v182 = vld [vmem:[%s169 + $0x28] sm:$0xff]
      %v183 = vld [vmem:[%s169 + $0x30] sm:$0xff]
      %v184 = vld [vmem:[%s169 + $0x38] sm:$0xff]
      %v185 = vld [vmem:[%s169 + $0x40] sm:$0xff]
      %v186 = vld [vmem:[%s169 + $0x48] sm:$0xff]
      %v187 = vld [vmem:[%s169 + $0x50] sm:$0xff]
      %v188 = vld [vmem:[%s169 + $0x58] sm:$0xff]
      %v189 = vld [vmem:[%s169 + $0x60] sm:$0xff]
      %v190 = vld [vmem:[%s169 + $0x68] sm:$0xff]
      %v191 = vld [vmem:[%s169 + $0x70] sm:$0xff]
      %v192 = vld [vmem:[%s169 + $0x78] sm:$0xff]
      %v193 = vld [vmem:[%s169 + $0x80] sm:$0xff]
      %v194 = vld [vmem:[%s169 + $0x88] sm:$0xff]
      %v195 = vld [vmem:[%s169 + $0x90] sm:$0xff]
      %v196 = vld [vmem:[%s169 + $0x98] sm:$0xff]
      %v197 = vld [vmem:[%s169 + $0xa0] sm:$0xff]
      %v198 = vld [vmem:[%s169 + $0xa8] sm:$0xff]
      %v199 = vld [vmem:[%s169 + $0xb0] sm:$0xff]
      %v200 = vld [vmem:[%s169 + $0xb8] sm:$0xff]
      %v201 = vld [vmem:[%s169 + $0xc0] sm:$0xff]
      %v202 = vld [vmem:[%s169 + $0xc8] sm:$0xff]
      %v203 = vld [vmem:[%s169 + $0xd0] sm:$0xff]
      %v204 = vld [vmem:[%s169 + $0xd8] sm:$0xff]
      %v205 = vld [vmem:[%s169 + $0xe0] sm:$0xff]
      %v206 = vld [vmem:[%s169 + $0xe8] sm:$0xff]
      %v207 = vld [vmem:[%s169 + $0xf0] sm:$0xff]
      %v208 = vld [vmem:[%s169 + $0xf8] sm:$0xff]
      %v209 = vld [vmem:[%s1] sm:$0xf]
      %v210 = vld [vmem:[%s1 + $0x4] sm:$0xf]
      %v211 = vld [vmem:[%s1 + $0x8] sm:$0xf]
      %v212 = vld [vmem:[%s1 + $0xc] sm:$0xf]
      %v213 = vld [vmem:[%s1 + $0x10] sm:$0xf]
      %v214 = vld [vmem:[%s1 + $0x14] sm:$0xf]
      %v215 = vld [vmem:[%s1 + $0x18] sm:$0xf]
      %v216 = vld [vmem:[%s1 + $0x1c] sm:$0xf]
      %v217 = vld [vmem:[%s1 + $0x20] sm:$0xf]
      %v218 = vld [vmem:[%s1 + $0x24] sm:$0xf]
      %v219 = vld [vmem:[%s1 + $0x28] sm:$0xf]
      %v220 = vld [vmem:[%s1 + $0x2c] sm:$0xf]
      %v221 = vld [vmem:[%s1 + $0x30] sm:$0xf]
      %v222 = vld [vmem:[%s1 + $0x34] sm:$0xf]
      %v223 = vld [vmem:[%s1 + $0x38] sm:$0xf]
      %v224 = vld [vmem:[%s1 + $0x3c] sm:$0xf]
      %v225 = vld [vmem:[%s1 + $0x40] sm:$0xf]
      %v226 = vld [vmem:[%s1 + $0x44] sm:$0xf]
      %v227 = vld [vmem:[%s1 + $0x48] sm:$0xf]
      %v228 = vld [vmem:[%s1 + $0x4c] sm:$0xf]
      %v229 = vld [vmem:[%s1 + $0x50] sm:$0xf]
      %v230 = vld [vmem:[%s1 + $0x54] sm:$0xf]
      %v231 = vld [vmem:[%s1 + $0x58] sm:$0xf]
      %v232 = vld [vmem:[%s1 + $0x5c] sm:$0xf]
      %v233 = vld [vmem:[%s1 + $0x60] sm:$0xf]
      %v234 = vld [vmem:[%s1 + $0x64] sm:$0xf]
      %v235 = vld [vmem:[%s1 + $0x68] sm:$0xf]
      %v236 = vld [vmem:[%s1 + $0x6c] sm:$0xf]
      %v237 = vld [vmem:[%s1 + $0x70] sm:$0xf]
      %v238 = vld [vmem:[%s1 + $0x74] sm:$0xf]
      %v239 = vld [vmem:[%s1 + $0x78] sm:$0xf]
      %v240 = vld [vmem:[%s1 + $0x7c] sm:$0xf]
      %v241 = vld [vmem:[%s2] sm:$0x1]
      %v243 = vperm.slane %v241, 0
      %v277 = vunpack.c.l.b16 %v177
      %v278 = vunpack.c.h.b16 %v177
      %v279 = vunpack.c.l.b16 %v178
      %v280 = vunpack.c.h.b16 %v178
      %v281 = vunpack.c.l.b16 %v179
      %v282 = vunpack.c.h.b16 %v179
      %v283 = vunpack.c.l.b16 %v180
      %v284 = vunpack.c.h.b16 %v180
      %v285 = vunpack.c.l.b16 %v181
      %v286 = vunpack.c.h.b16 %v181
      %v287 = vunpack.c.l.b16 %v182
      %v288 = vunpack.c.h.b16 %v182
      %v289 = vunpack.c.l.b16 %v183
      %v290 = vunpack.c.h.b16 %v183
      %v291 = vunpack.c.l.b16 %v184
      %v292 = vunpack.c.h.b16 %v184
      %v293 = vunpack.c.l.b16 %v185
      %v294 = vunpack.c.h.b16 %v185
      %v295 = vunpack.c.l.b16 %v186
      %v296 = vunpack.c.h.b16 %v186
      %v297 = vunpack.c.l.b16 %v187
      %v298 = vunpack.c.h.b16 %v187
      %v299 = vunpack.c.l.b16 %v188
      %v300 = vunpack.c.h.b16 %v188
      %v301 = vunpack.c.l.b16 %v189
      %v302 = vunpack.c.h.b16 %v189
      %v303 = vunpack.c.l.b16 %v190
      %v304 = vunpack.c.h.b16 %v190
      %v305 = vunpack.c.l.b16 %v191
      %v306 = vunpack.c.h.b16 %v191
      %v307 = vunpack.c.l.b16 %v192
      %v308 = vunpack.c.h.b16 %v192
      %v309 = vunpack.c.l.b16 %v193
      %v310 = vunpack.c.h.b16 %v193
      %v311 = vunpack.c.l.b16 %v194
      %v312 = vunpack.c.h.b16 %v194
      %v313 = vunpack.c.l.b16 %v195
      %v314 = vunpack.c.h.b16 %v195
      %v315 = vunpack.c.l.b16 %v196
      %v316 = vunpack.c.h.b16 %v196
      %v317 = vunpack.c.l.b16 %v197
      %v318 = vunpack.c.h.b16 %v197
      %v319 = vunpack.c.l.b16 %v198
      %v320 = vunpack.c.h.b16 %v198
      %v321 = vunpack.c.l.b16 %v199
      %v322 = vunpack.c.h.b16 %v199
      %v323 = vunpack.c.l.b16 %v200
      %v324 = vunpack.c.h.b16 %v200
      %v325 = vunpack.c.l.b16 %v201
      %v326 = vunpack.c.h.b16 %v201
      %v327 = vunpack.c.l.b16 %v202
      %v328 = vunpack.c.h.b16 %v202
      %v329 = vunpack.c.l.b16 %v203
      %v330 = vunpack.c.h.b16 %v203
      %v331 = vunpack.c.l.b16 %v204
      %v332 = vunpack.c.h.b16 %v204
      %v333 = vunpack.c.l.b16 %v205
      %v334 = vunpack.c.h.b16 %v205
      %v335 = vunpack.c.l.b16 %v206
      %v336 = vunpack.c.h.b16 %v206
      %v337 = vunpack.c.l.b16 %v207
      %v338 = vunpack.c.h.b16 %v207
      %v339 = vunpack.c.l.b16 %v208
      %v340 = vunpack.c.h.b16 %v208
      %v341 = vpack.c.b16 %v279, %v277
      %v342 = vpack.c.b16 %v280, %v278
      %v343 = vpack.c.b16 %v283, %v281
      %v344 = vpack.c.b16 %v284, %v282
      %v345 = vpack.c.b16 %v287, %v285
      %v346 = vpack.c.b16 %v288, %v286
      %v347 = vpack.c.b16 %v291, %v289
      %v348 = vpack.c.b16 %v292, %v290
      %v349 = vpack.c.b16 %v295, %v293
      %v350 = vpack.c.b16 %v296, %v294
      %v351 = vpack.c.b16 %v299, %v297
      %v352 = vpack.c.b16 %v300, %v298
      %v353 = vpack.c.b16 %v303, %v301
      %v354 = vpack.c.b16 %v304, %v302
      %v355 = vpack.c.b16 %v307, %v305
      %v356 = vpack.c.b16 %v308, %v306
      %v357 = vpack.c.b16 %v311, %v309
      %v358 = vpack.c.b16 %v312, %v310
      %v359 = vpack.c.b16 %v315, %v313
      %v360 = vpack.c.b16 %v316, %v314
      %v361 = vpack.c.b16 %v319, %v317
      %v362 = vpack.c.b16 %v320, %v318
      %v363 = vpack.c.b16 %v323, %v321
      %v364 = vpack.c.b16 %v324, %v322
      %v365 = vpack.c.b16 %v327, %v325
      %v366 = vpack.c.b16 %v328, %v326
      %v367 = vpack.c.b16 %v331, %v329
      %v368 = vpack.c.b16 %v332, %v330
      %v369 = vpack.c.b16 %v335, %v333
      %v370 = vpack.c.b16 %v336, %v334
      %v371 = vpack.c.b16 %v339, %v337
      %v372 = vpack.c.b16 %v340, %v338
      %v437 = vunpack.c.l.b16 %v209
      %v438 = vunpack.c.l.b16 %v210
      %v439 = vunpack.c.l.b16 %v211
      %v440 = vunpack.c.l.b16 %v212
      %v441 = vunpack.c.l.b16 %v213
      %v442 = vunpack.c.l.b16 %v214
      %v443 = vunpack.c.l.b16 %v215
      %v444 = vunpack.c.l.b16 %v216
      %v445 = vunpack.c.l.b16 %v217
      %v446 = vunpack.c.l.b16 %v218
      %v447 = vunpack.c.l.b16 %v219
      %v448 = vunpack.c.l.b16 %v220
      %v449 = vunpack.c.l.b16 %v221
      %v450 = vunpack.c.l.b16 %v222
      %v451 = vunpack.c.l.b16 %v223
      %v452 = vunpack.c.l.b16 %v224
      %v453 = vunpack.c.l.b16 %v225
      %v454 = vunpack.c.l.b16 %v226
      %v455 = vunpack.c.l.b16 %v227
      %v456 = vunpack.c.l.b16 %v228
      %v457 = vunpack.c.l.b16 %v229
      %v458 = vunpack.c.l.b16 %v230
      %v459 = vunpack.c.l.b16 %v231
      %v460 = vunpack.c.l.b16 %v232
      %v461 = vunpack.c.l.b16 %v233
      %v462 = vunpack.c.l.b16 %v234
      %v463 = vunpack.c.l.b16 %v235
      %v464 = vunpack.c.l.b16 %v236
      %v465 = vunpack.c.l.b16 %v237
      %v466 = vunpack.c.l.b16 %v238
      %v467 = vunpack.c.l.b16 %v239
      %v468 = vunpack.c.l.b16 %v240
      %v469 = vpack.c.b16 %v438, %v437
      %v470 = vpack.c.b16 %v440, %v439
      %v471 = vpack.c.b16 %v442, %v441
      %v472 = vpack.c.b16 %v444, %v443
      %v473 = vpack.c.b16 %v446, %v445
      %v474 = vpack.c.b16 %v448, %v447
      %v475 = vpack.c.b16 %v450, %v449
      %v476 = vpack.c.b16 %v452, %v451
      %v477 = vpack.c.b16 %v454, %v453
      %v478 = vpack.c.b16 %v456, %v455
      %v479 = vpack.c.b16 %v458, %v457
      %v480 = vpack.c.b16 %v460, %v459
      %v481 = vpack.c.b16 %v462, %v461
      %v482 = vpack.c.b16 %v464, %v463
      %v483 = vpack.c.b16 %v466, %v465
      %v484 = vpack.c.b16 %v468, %v467
      %501 = vmatpush.bf16.msra.mxu0 %v476
      %502 = vmatpush.bf16.msra.mxu0 %v475
      %503 = vmatpush.bf16.msra.mxu0 %v474
      %504 = vmatpush.bf16.msra.mxu0 %v473
      %505 = vmatpush.bf16.msra.mxu0 %v472
      %506 = vmatpush.bf16.msra.mxu0 %v471
      %507 = vmatpush.bf16.msra.mxu0 %v470
      %508 = vmatpush.bf16.msra.mxu0 %v469
      %509 = vmatmul.bf16.gmra.mxu0 %v341
      %v510 = vpop.f32.mrf.mxu0
      %v511 = vadd.f32 %v243, %v510
      %v512 = vpop.f32.mrf.mxu0
      %v513 = vadd.f32 %v243, %v512
      %514 = vmatmul.bf16.gmra.mxu0 %v343
      %v515 = vpop.f32.mrf.mxu0
      %v516 = vadd.f32 %v243, %v515
      %v517 = vpop.f32.mrf.mxu0
      %v518 = vadd.f32 %v243, %v517
      %519 = vmatmul.bf16.gmra.mxu0 %v345
      %v520 = vpop.f32.mrf.mxu0
      %v521 = vadd.f32 %v243, %v520
      %v522 = vpop.f32.mrf.mxu0
      %v523 = vadd.f32 %v243, %v522
      %524 = vmatmul.bf16.gmra.mxu0 %v347
      %v525 = vpop.f32.mrf.mxu0
      %v526 = vadd.f32 %v243, %v525
      %v527 = vpop.f32.mrf.mxu0
      %v528 = vadd.f32 %v243, %v527
      %529 = vmatmul.bf16.gmra.mxu0 %v349
      %v530 = vpop.f32.mrf.mxu0
      %v531 = vadd.f32 %v243, %v530
      %v532 = vpop.f32.mrf.mxu0
      %v533 = vadd.f32 %v243, %v532
      %534 = vmatmul.bf16.gmra.mxu0 %v351
      %v535 = vpop.f32.mrf.mxu0
      %v536 = vadd.f32 %v243, %v535
      %v537 = vpop.f32.mrf.mxu0
      %v538 = vadd.f32 %v243, %v537
      %539 = vmatmul.bf16.gmra.mxu0 %v353
      %v540 = vpop.f32.mrf.mxu0
      %v541 = vadd.f32 %v243, %v540
      %v542 = vpop.f32.mrf.mxu0
      %v543 = vadd.f32 %v243, %v542
      %544 = vmatmul.bf16.gmra.mxu0 %v355
      %v545 = vpop.f32.mrf.mxu0
      %v546 = vadd.f32 %v243, %v545
      %v547 = vpop.f32.mrf.mxu0
      %v548 = vadd.f32 %v243, %v547
      %549 = vmatmul.bf16.gmra.mxu0 %v357
      %v550 = vpop.f32.mrf.mxu0
      %v551 = vadd.f32 %v243, %v550
      %v552 = vpop.f32.mrf.mxu0
      %v553 = vadd.f32 %v243, %v552
      %554 = vmatmul.bf16.gmra.mxu0 %v359
      %v555 = vpop.f32.mrf.mxu0
      %v556 = vadd.f32 %v243, %v555
      %v557 = vpop.f32.mrf.mxu0
      %v558 = vadd.f32 %v243, %v557
      %559 = vmatmul.bf16.gmra.mxu0 %v361
      %v560 = vpop.f32.mrf.mxu0
      %v561 = vadd.f32 %v243, %v560
      %v562 = vpop.f32.mrf.mxu0
      %v563 = vadd.f32 %v243, %v562
      %564 = vmatmul.bf16.gmra.mxu0 %v363
      %v565 = vpop.f32.mrf.mxu0
      %v566 = vadd.f32 %v243, %v565
      %v567 = vpop.f32.mrf.mxu0
      %v568 = vadd.f32 %v243, %v567
      %569 = vmatmul.bf16.gmra.mxu0 %v365
      %v570 = vpop.f32.mrf.mxu0
      %v571 = vadd.f32 %v243, %v570
      %v572 = vpop.f32.mrf.mxu0
      %v573 = vadd.f32 %v243, %v572
      %574 = vmatmul.bf16.gmra.mxu0 %v367
      %v575 = vpop.f32.mrf.mxu0
      %v576 = vadd.f32 %v243, %v575
      %v577 = vpop.f32.mrf.mxu0
      %v578 = vadd.f32 %v243, %v577
      %579 = vmatmul.bf16.gmra.mxu0 %v369
      %v580 = vpop.f32.mrf.mxu0
      %v581 = vadd.f32 %v243, %v580
      %v582 = vpop.f32.mrf.mxu0
      %v583 = vadd.f32 %v243, %v582
      %584 = vmatmul.bf16.gmra.mxu0 %v371
      %v585 = vpop.f32.mrf.mxu0
      %v586 = vadd.f32 %v243, %v585
      %v587 = vpop.f32.mrf.mxu0
      %v588 = vadd.f32 %v243, %v587
      %589 = vdwg.mxu0
      %590 = vmatpush.bf16.msra.mxu0 %v484
      %591 = vmatpush.bf16.msra.mxu0 %v483
      %592 = vmatpush.bf16.msra.mxu0 %v482
      %593 = vmatpush.bf16.msra.mxu0 %v481
      %594 = vmatpush.bf16.msra.mxu0 %v480
      %595 = vmatpush.bf16.msra.mxu0 %v479
      %596 = vmatpush.bf16.msra.mxu0 %v478
      %597 = vmatpush.bf16.msra.mxu0 %v477
      %598 = vmatmul.bf16.gmra.mxu0 %v342
      %v599 = vpop.f32.mrf.mxu0
      %v600 = vadd.f32 %v511, %v599
      %v601 = vpop.f32.mrf.mxu0
      %v602 = vadd.f32 %v513, %v601
      %603 = vmatmul.bf16.gmra.mxu0 %v344
      %v604 = vpop.f32.mrf.mxu0
      %v605 = vadd.f32 %v516, %v604
      %v606 = vpop.f32.mrf.mxu0
      %v607 = vadd.f32 %v518, %v606
      %608 = vmatmul.bf16.gmra.mxu0 %v346
      %v609 = vpop.f32.mrf.mxu0
      %v610 = vadd.f32 %v521, %v609
      %v611 = vpop.f32.mrf.mxu0
      %v612 = vadd.f32 %v523, %v611
      %613 = vmatmul.bf16.gmra.mxu0 %v348
      %v614 = vpop.f32.mrf.mxu0
      %v615 = vadd.f32 %v526, %v614
      %v616 = vpop.f32.mrf.mxu0
      %v617 = vadd.f32 %v528, %v616
      %618 = vmatmul.bf16.gmra.mxu0 %v350
      %v619 = vpop.f32.mrf.mxu0
      %v620 = vadd.f32 %v531, %v619
      %v621 = vpop.f32.mrf.mxu0
      %v622 = vadd.f32 %v533, %v621
      %623 = vmatmul.bf16.gmra.mxu0 %v352
      %v624 = vpop.f32.mrf.mxu0
      %v625 = vadd.f32 %v536, %v624
      %v626 = vpop.f32.mrf.mxu0
      %v627 = vadd.f32 %v538, %v626
      %628 = vmatmul.bf16.gmra.mxu0 %v354
      %v629 = vpop.f32.mrf.mxu0
      %v630 = vadd.f32 %v541, %v629
      %v631 = vpop.f32.mrf.mxu0
      %v632 = vadd.f32 %v543, %v631
      %633 = vmatmul.bf16.gmra.mxu0 %v356
      %v634 = vpop.f32.mrf.mxu0
      %v635 = vadd.f32 %v546, %v634
      %v636 = vpop.f32.mrf.mxu0
      %v637 = vadd.f32 %v548, %v636
      %638 = vmatmul.bf16.gmra.mxu0 %v358
      %v639 = vpop.f32.mrf.mxu0
      %v640 = vadd.f32 %v551, %v639
      %v641 = vpop.f32.mrf.mxu0
      %v642 = vadd.f32 %v553, %v641
      %643 = vmatmul.bf16.gmra.mxu0 %v360
      %v644 = vpop.f32.mrf.mxu0
      %v645 = vadd.f32 %v556, %v644
      %v646 = vpop.f32.mrf.mxu0
      %v647 = vadd.f32 %v558, %v646
      %648 = vmatmul.bf16.gmra.mxu0 %v362
      %v649 = vpop.f32.mrf.mxu0
      %v650 = vadd.f32 %v561, %v649
      %v651 = vpop.f32.mrf.mxu0
      %v652 = vadd.f32 %v563, %v651
      %653 = vmatmul.bf16.gmra.mxu0 %v364
      %v654 = vpop.f32.mrf.mxu0
      %v655 = vadd.f32 %v566, %v654
      %v656 = vpop.f32.mrf.mxu0
      %v657 = vadd.f32 %v568, %v656
      %658 = vmatmul.bf16.gmra.mxu0 %v366
      %v659 = vpop.f32.mrf.mxu0
      %v660 = vadd.f32 %v571, %v659
      %v661 = vpop.f32.mrf.mxu0
      %v662 = vadd.f32 %v573, %v661
      %663 = vmatmul.bf16.gmra.mxu0 %v368
      %v664 = vpop.f32.mrf.mxu0
      %v665 = vadd.f32 %v576, %v664
      %v666 = vpop.f32.mrf.mxu0
      %v667 = vadd.f32 %v578, %v666
      %668 = vmatmul.bf16.gmra.mxu0 %v370
      %v669 = vpop.f32.mrf.mxu0
      %v670 = vadd.f32 %v581, %v669
      %v671 = vpop.f32.mrf.mxu0
      %v672 = vadd.f32 %v583, %v671
      %673 = vmatmul.bf16.gmra.mxu0 %v372
      %v674 = vpop.f32.mrf.mxu0
      %v675 = vadd.f32 %v586, %v674
      %v676 = vpop.f32.mrf.mxu0
      %v677 = vadd.f32 %v588, %v676
      %678 = vdwg.mxu0
      %v679 = vmax.f32 %v600, 0.0
      %v680 = vmax.f32 %v602, 0.0
      %v681 = vmax.f32 %v605, 0.0
      %v682 = vmax.f32 %v607, 0.0
      %v683 = vmax.f32 %v610, 0.0
      %v684 = vmax.f32 %v612, 0.0
      %v685 = vmax.f32 %v615, 0.0
      %v686 = vmax.f32 %v617, 0.0
      %v687 = vmax.f32 %v620, 0.0
      %v688 = vmax.f32 %v622, 0.0
      %v689 = vmax.f32 %v625, 0.0
      %v690 = vmax.f32 %v627, 0.0
      %v691 = vmax.f32 %v630, 0.0
      %v692 = vmax.f32 %v632, 0.0
      %v693 = vmax.f32 %v635, 0.0
      %v694 = vmax.f32 %v637, 0.0
      %v695 = vmax.f32 %v640, 0.0
      %v696 = vmax.f32 %v642, 0.0
      %v697 = vmax.f32 %v645, 0.0
      %v698 = vmax.f32 %v647, 0.0
      %v699 = vmax.f32 %v650, 0.0
      %v700 = vmax.f32 %v652, 0.0
      %v701 = vmax.f32 %v655, 0.0
      %v702 = vmax.f32 %v657, 0.0
      %v703 = vmax.f32 %v660, 0.0
      %v704 = vmax.f32 %v662, 0.0
      %v705 = vmax.f32 %v665, 0.0
      %v706 = vmax.f32 %v667, 0.0
      %v707 = vmax.f32 %v670, 0.0
      %v708 = vmax.f32 %v672, 0.0
      %v709 = vmax.f32 %v675, 0.0
      %v710 = vmax.f32 %v677, 0.0
      %711 = vst [vmem:[%s175] sm:$0xff] %v679
      %712 = vst [vmem:[%s175 + $0x8] sm:$0xff] %v680
      %713 = vst [vmem:[%s175 + $0x10] sm:$0xff] %v681
      %714 = vst [vmem:[%s175 + $0x18] sm:$0xff] %v682
      %715 = vst [vmem:[%s175 + $0x20] sm:$0xff] %v683
      %716 = vst [vmem:[%s175 + $0x28] sm:$0xff] %v684
      %717 = vst [vmem:[%s175 + $0x30] sm:$0xff] %v685
      %718 = vst [vmem:[%s175 + $0x38] sm:$0xff] %v686
      %719 = vst [vmem:[%s175 + $0x40] sm:$0xff] %v687
      %720 = vst [vmem:[%s175 + $0x48] sm:$0xff] %v688
      %721 = vst [vmem:[%s175 + $0x50] sm:$0xff] %v689
      %722 = vst [vmem:[%s175 + $0x58] sm:$0xff] %v690
      %723 = vst [vmem:[%s175 + $0x60] sm:$0xff] %v691
      %724 = vst [vmem:[%s175 + $0x68] sm:$0xff] %v692
      %725 = vst [vmem:[%s175 + $0x70] sm:$0xff] %v693
      %726 = vst [vmem:[%s175 + $0x78] sm:$0xff] %v694
      %727 = vst [vmem:[%s175 + $0x80] sm:$0xff] %v695
      %728 = vst [vmem:[%s175 + $0x88] sm:$0xff] %v696
      %729 = vst [vmem:[%s175 + $0x90] sm:$0xff] %v697
      %730 = vst [vmem:[%s175 + $0x98] sm:$0xff] %v698
      %731 = vst [vmem:[%s175 + $0xa0] sm:$0xff] %v699
      %732 = vst [vmem:[%s175 + $0xa8] sm:$0xff] %v700
      %733 = vst [vmem:[%s175 + $0xb0] sm:$0xff] %v701
      %734 = vst [vmem:[%s175 + $0xb8] sm:$0xff] %v702
      %735 = vst [vmem:[%s175 + $0xc0] sm:$0xff] %v703
      %736 = vst [vmem:[%s175 + $0xc8] sm:$0xff] %v704
      %737 = vst [vmem:[%s175 + $0xd0] sm:$0xff] %v705
      %738 = vst [vmem:[%s175 + $0xd8] sm:$0xff] %v706
      %739 = vst [vmem:[%s175 + $0xe0] sm:$0xff] %v707
      %740 = vst [vmem:[%s175 + $0xe8] sm:$0xff] %v708
      %741 = vst [vmem:[%s175 + $0xf0] sm:$0xff] %v709
      %742 = vst [vmem:[%s175 + $0xf8] sm:$0xff] %v710
      %s743 = smul.u32 32, %s14
      %p744 = scmp.lt.s32.totalorder %s743, 63
      %s745 = scalar_select %p744, %s743, 63
      %s746 = smul.addr %s745, 8
      %s747 = scalar_lea.vmem %s3, %s746
      // Predicated region
      $region33: #{conv_update_forward.8} parent=31 // pred_check
        %p748 = pneg %p100
      $region34: #{conv_update_forward.8} parent=31 // pred_check_branch
        %750 = sbr.rel (%p748) target = $region36
      $region35: #{conv_update_forward.8} parent=31 // pred_region
        %s751 = smul.u32 32, %s14
      $region36: #{conv_update_forward.8} parent=31 // pred_fallthru
        _
    $region32: #{conv_update_forward.8} parent=5 // pred_fallthru
      _
    %p752 = scmp.le.s32.totalorder 2, %s9
    // Predicated region
    $region37: #{conv_update_forward.8} parent=5 // pred_check
      %p753 = pneg %p752
    $region38: #{conv_update_forward.8} parent=5 // pred_check_branch
      %755 = sbr.rel (%p753) target = $region40
    $region39: #{conv_update_forward.8} parent=5 // pred_region
      %s756 = ssub.s32 %s9, 2
      // Predicated region
      $region41: #{conv_update_forward.8} parent=39 // pred_check
        %p757 = pneg %p106
      $region42: #{conv_update_forward.8} parent=39 // pred_check_branch
        %759 = sbr.rel (%p757) target = $region44
      $region43: #{conv_update_forward.8} parent=39 // pred_region
        %s760 = smul.u32 32, %s15
        %p761 = scmp.lt.s32.totalorder %s760, 63
        %s762 = scalar_select %p761, %s760, 63
        %s763 = smul.addr %s762, 8
        %s764 = scalar_lea.vmem %s3, %s763
      $region44: #{conv_update_forward.8} parent=39 // pred_fallthru
        _
    $region40: #{conv_update_forward.8} parent=5 // pred_fallthru
      _
  $region6: #{conv_update_forward.8} parent=0 // loop_footer
    %s13 = sadd.s32 1, %s9
  $region7: #{conv_update_forward.8} parent=0 // loop_footer_branch
    %8 = sbr.rel target = $region3
  $region8: #{conv_update_forward.8} parent=0 // loop_exit
    _

// kernel: conv_update_forward.9
$region0: #{conv_update_forward.9}
  #allocation0 [shape = 'u32[]', space=smem, size = 0x4, offset = 0x4, fixed_abs, tag = 'smem constant byte address 0x4 - core index']
  #allocation1 [shape = 'u32[72,128]{1,0:T(1,128)}', space=vmem, size = 0x9000, scoped, tag = 'internal scratch']
  #allocation2 [shape = 'f32[1]{0:T(128)S(6)}', space=smem, size = 0x200, scoped, tag = 'scoped memory for conv_update_forward.9']
  %s0 = inlined_call_operand.<no memory space> [shape: f32[1], index: 0, kind: input, shape index: {}]
  %s1 = inlined_call_operand.vmem [shape: f32[40,128], index: 1, kind: input, shape index: {}]
  %s2 = inlined_call_operand.vmem [shape: f32[40,128], index: 2, kind: input, shape index: {}]
  %s3 = inlined_call_operand.vmem [shape: f32[40,128], index: 3, kind: output, shape index: {}]
  %s4 = sld [smem:[#allocation0]]
  $region45: #{conv_update_forward.9} parent=0
    _
  %s6 = ssub.s32 1, %s4
  %s7 = scalar_select 0, %s6, %s4
  %8 = sst [smem:[#allocation2]] %s0
  loop: start=0, step=1, limit=7
  $region2: #{conv_update_forward.9} parent=0 // loop_pre_header
    _
  $region3: #{conv_update_forward.9} parent=0 // loop_header
    %s10 = sphi 0, %s14
    %p11 = scmp.ge.s32.totalorder %s10, 7
    %s18 = sphi 0, %s18
    %s20 = sphi 0, %s18
    %s21 = sphi 0, %s20
    %s35 = sphi 0, %s21
    %s41 = sphi 0, %s43
    %s44 = sphi 0, %s41
    %s45 = sphi 0, %s44
    %s61 = sphi 0, %s45
    %s67 = sphi 0, %s69
    %s70 = sphi 0, %s67
    %s71 = sphi 0, %s70
    %s87 = sphi 0, %s71
    %s93 = sphi 0, %s95
    %s96 = sphi 0, %s93
    %s97 = sphi 0, %s96
    %s113 = sphi 0, %s97
  $region4: #{conv_update_forward.9} parent=0 // loop_header_branch
    %13 = sbr.rel (%p11) target = $region8
  $region5: #{conv_update_forward.9} parent=0 // loop_body
    %s15 = ssub.s32 %s10, 1
    %s16 = ssub.s32 %s10, 2
    %s17 = sadd.s32 %s10, 1
    %s19 = sadd.s32 %s18, 1
    %p22 = scmp.eq.s32.totalorder %s10, 4
    %p23 = scmp.ne.s32.totalorder %s18, %s20
    %p24 = scmp.eq.s32.totalorder %s10, 0
    %p25 = por %p23, %p24
    %p26 = scmp.ne.s32.totalorder %s18, %s20
    %p27 = scmp.eq.s32.totalorder %s15, 4
    %p28 = por %p26, %p27
    %p29 = scmp.ne.s32.totalorder %s20, %s21
    %p30 = scmp.eq.s32.totalorder %s15, 0
    %p31 = por %p29, %p30
    %p32 = scmp.ne.s32.totalorder %s20, %s21
    %p33 = scmp.eq.s32.totalorder %s16, 4
    %p34 = por %p32, %p33
    %p36 = scmp.ne.s32.totalorder %s21, %s35
    %p37 = scmp.eq.s32.totalorder %s16, 0
    %p38 = por %p36, %p37
    %s39 = ssub.s32 %s10, %s17
    %p40 = scmp.eq.s32.totalorder %s39, 0
    %s42 = sadd.s32 %s41, 1
    %s43 = scalar_select %p40, %s41, %s42
    %p46 = pneg %p40
    %p47 = scmp.eq.s32.totalorder %s10, 4
    %p48 = por %p46, %p47
    %p49 = scmp.ne.s32.totalorder %s41, %s44
    %p50 = scmp.eq.s32.totalorder %s10, 0
    %p51 = por %p49, %p50
    %p52 = scmp.ne.s32.totalorder %s41, %s44
    %p53 = scmp.eq.s32.totalorder %s15, 4
    %p54 = por %p52, %p53
    %p55 = scmp.ne.s32.totalorder %s44, %s45
    %p56 = scmp.eq.s32.totalorder %s15, 0
    %p57 = por %p55, %p56
    %p58 = scmp.ne.s32.totalorder %s44, %s45
    %p59 = scmp.eq.s32.totalorder %s16, 4
    %p60 = por %p58, %p59
    %p62 = scmp.ne.s32.totalorder %s45, %s61
    %p63 = scmp.eq.s32.totalorder %s16, 0
    %p64 = por %p62, %p63
    %s65 = ssub.s32 %s10, %s17
    %p66 = scmp.eq.s32.totalorder %s65, 0
    %s68 = sadd.s32 %s67, 1
    %s69 = scalar_select %p66, %s67, %s68
    %p72 = pneg %p66
    %p73 = scmp.eq.s32.totalorder %s10, 4
    %p74 = por %p72, %p73
    %p75 = scmp.ne.s32.totalorder %s67, %s70
    %p76 = scmp.eq.s32.totalorder %s10, 0
    %p77 = por %p75, %p76
    %p78 = scmp.ne.s32.totalorder %s67, %s70
    %p79 = scmp.eq.s32.totalorder %s15, 4
    %p80 = por %p78, %p79
    %p81 = scmp.ne.s32.totalorder %s70, %s71
    %p82 = scmp.eq.s32.totalorder %s15, 0
    %p83 = por %p81, %p82
    %p84 = scmp.ne.s32.totalorder %s70, %s71
    %p85 = scmp.eq.s32.totalorder %s16, 4
    %p86 = por %p84, %p85
    %p88 = scmp.ne.s32.totalorder %s71, %s87
    %p89 = scmp.eq.s32.totalorder %s16, 0
    %p90 = por %p88, %p89
    %s91 = ssub.s32 %s10, %s17
    %p92 = scmp.eq.s32.totalorder %s91, 0
    %s94 = sadd.s32 %s93, 1
    %s95 = scalar_select %p92, %s93, %s94
    %p98 = pneg %p92
    %p99 = scmp.eq.s32.totalorder %s10, 4
    %p100 = por %p98, %p99
    %p101 = scmp.ne.s32.totalorder %s93, %s96
    %p102 = scmp.eq.s32.totalorder %s10, 0
    %p103 = por %p101, %p102
    %p104 = scmp.ne.s32.totalorder %s93, %s96
    %p105 = scmp.eq.s32.totalorder %s15, 4
    %p106 = por %p104, %p105
    %p107 = scmp.ne.s32.totalorder %s96, %s97
    %p108 = scmp.eq.s32.totalorder %s15, 0
    %p109 = por %p107, %p108
    %p110 = scmp.ne.s32.totalorder %s96, %s97
    %p111 = scmp.eq.s32.totalorder %s16, 4
    %p112 = por %p110, %p111
    %p114 = scmp.ne.s32.totalorder %s97, %s113
    %p115 = scmp.eq.s32.totalorder %s16, 0
    %p116 = por %p114, %p115
    %p117 = scmp.le.s32.totalorder 1, %s10
    %p118 = scmp.lt.s32.totalorder %s10, 6
    %p119 = pnand %p117, %p118
    %p120 = pneg %p119
    // Predicated region
    $region9: #{conv_update_forward.9} parent=5 // pred_check
      _
    $region10: #{conv_update_forward.9} parent=5 // pred_check_branch
      %122 = sbr.rel (%p119) target = $region12
    $region11: #{conv_update_forward.9} parent=5 // pred_region
      %s123 = ssub.s32 %s10, 1
      // Predicated region
      $region13: #{conv_update_forward.9} parent=11 // pred_check
        %p124 = pneg %p31
      $region14: #{conv_update_forward.9} parent=11 // pred_check_branch
        %126 = sbr.rel (%p124) target = $region16
      $region15: #{conv_update_forward.9} parent=11 // pred_region
        _
      $region16: #{conv_update_forward.9} parent=11 // pred_fallthru
        _
    $region12: #{conv_update_forward.9} parent=5 // pred_fallthru
      _
    %p127 = scmp.lt.s32.totalorder %s10, 5
    // Predicated region
    $region17: #{conv_update_forward.9} parent=5 // pred_check
      %p128 = pneg %p127
    $region18: #{conv_update_forward.9} parent=5 // pred_check_branch
      %130 = sbr.rel (%p128) target = $region20
    $region19: #{conv_update_forward.9} parent=5 // pred_region
      // Predicated region
      $region21: #{conv_update_forward.9} parent=19 // pred_check
        %p131 = pneg %p51
      $region22: #{conv_update_forward.9} parent=19 // pred_check_branch
        %133 = sbr.rel (%p131) target = $region24
      $region23: #{conv_update_forward.9} parent=19 // pred_region
        %p134 = scmp.lt.s32.totalorder %s10, 4
        %s135 = scalar_select %p134, %s10, 4
        %s136 = smul.addr %s135, 8
        %s137 = scalar_lea.vmem %s1, %s136
      $region24: #{conv_update_forward.9} parent=19 // pred_fallthru
        _
      // Predicated region
      $region25: #{conv_update_forward.9} parent=19 // pred_check
        %p138 = pneg %p77
      $region26: #{conv_update_forward.9} parent=19 // pred_check_branch
        %140 = sbr.rel (%p138) target = $region28
      $region27: #{conv_update_forward.9} parent=19 // pred_region
        %p141 = scmp.lt.s32.totalorder %s10, 4
        %s142 = scalar_select %p141, %s10, 4
        %s143 = smul.addr %s142, 8
        %s144 = scalar_lea.vmem %s2, %s143
      $region28: #{conv_update_forward.9} parent=19 // pred_fallthru
        _
    $region20: #{conv_update_forward.9} parent=5 // pred_fallthru
      _
    %p145 = scmp.le.s32.totalorder 1, %s10
    %p146 = scmp.lt.s32.totalorder %s10, 6
    %p147 = pnand %p145, %p146
    %p148 = pneg %p147
    // Predicated region
    $region29: #{conv_update_forward.9} parent=5 // pred_check
      _
    $region30: #{conv_update_forward.9} parent=5 // pred_check_branch
      %150 = sbr.rel (%p147) target = $region32
    $region31: #{conv_update_forward.9} parent=5 // pred_region
      %s151 = ssub.s32 %s10, 1
      %p152 = pneg %p31
      %p153 = pneg %p28
      %p154 = scmp.lt.s32.totalorder %s15, 4
      %s155 = scalar_select %p154, %s15, 4
      %s156 = smul.addr %s155, 8
      %s157 = scalar_lea.vmem %s1, %s156
      %p158 = pneg %p57
      %p159 = pneg %p54
      %p160 = scmp.lt.s32.totalorder %s15, 4
      %s161 = scalar_select %p160, %s15, 4
      %s162 = smul.addr %s161, 8
      %s163 = scalar_lea.vmem %s2, %s162
      %p164 = pneg %p83
      %p165 = pneg %p80
      %p166 = pneg %p109
      %p167 = pneg %p106
      %p168 = scmp.lt.s32.totalorder %s15, 4
      %s169 = scalar_select %p168, %s15, 4
      %s170 = smul.addr %s169, 8
      %s171 = scalar_lea.vmem %s3, %s170
      %p172 = scmp.lt.s32.totalorder %s15, 4
      %s173 = scalar_select %p172, %s15, 4
      %s174 = smul.addr %s173, 8
      %s175 = scalar_lea.vmem %s1, %s174
      %p176 = scmp.lt.s32.totalorder %s15, 4
      %s177 = scalar_select %p176, %s15, 4
      %s178 = smul.addr %s177, 8
      %s179 = scalar_lea.vmem %s2, %s178
      %p180 = scmp.lt.s32.totalorder %s15, 4
      %s181 = scalar_select %p180, %s15, 4
      %s182 = smul.addr %s181, 8
      %s183 = scalar_lea.vmem %s3, %s182
      %s184 = sld [smem:[#allocation2]]
      %v185 = vld [vmem:[%s175] sm:$0xff]
      %v186 = vstv %s184
      %v187 = vmul.f32 %v186, %v185
      %v188 = vld [vmem:[%s179] sm:$0xff]
      %v189 = vadd.f32 %v187, %v188
      %v190 = vmax.f32 %v189, 0.0
      %191 = vst [vmem:[%s183] sm:$0xff] %v190
      %p192 = scmp.lt.s32.totalorder %s15, 4
      %s193 = scalar_select %p192, %s15, 4
      %s194 = smul.addr %s193, 8
      %s195 = scalar_lea.vmem %s3, %s194
      // Predicated region
      $region33: #{conv_update_forward.9} parent=31 // pred_check
        %p196 = pneg %p106
      $region34: #{conv_update_forward.9} parent=31 // pred_check_branch
        %198 = sbr.rel (%p196) target = $region36
      $region35: #{conv_update_forward.9} parent=31 // pred_region
        _
      $region36: #{conv_update_forward.9} parent=31 // pred_fallthru
        _
    $region32: #{conv_update_forward.9} parent=5 // pred_fallthru
      _
    %p199 = scmp.le.s32.totalorder 2, %s10
    // Predicated region
    $region37: #{conv_update_forward.9} parent=5 // pred_check
      %p200 = pneg %p199
    $region38: #{conv_update_forward.9} parent=5 // pred_check_branch
      %202 = sbr.rel (%p200) target = $region40
    $region39: #{conv_update_forward.9} parent=5 // pred_region
      %s203 = ssub.s32 %s10, 2
      // Predicated region
      $region41: #{conv_update_forward.9} parent=39 // pred_check
        %p204 = pneg %p112
      $region42: #{conv_update_forward.9} parent=39 // pred_check_branch
        %206 = sbr.rel (%p204) target = $region44
      $region43: #{conv_update_forward.9} parent=39 // pred_region
        %p207 = scmp.lt.s32.totalorder %s16, 4
        %s208 = scalar_select %p207, %s16, 4
        %s209 = smul.addr %s208, 8
        %s210 = scalar_lea.vmem %s3, %s209
      $region44: #{conv_update_forward.9} parent=39 // pred_fallthru
        _
    $region40: #{conv_update_forward.9} parent=5 // pred_fallthru
      _
  $region6: #{conv_update_forward.9} parent=0 // loop_footer
    %s14 = sadd.s32 1, %s10
  $region7: #{conv_update_forward.9} parent=0 // loop_footer_branch
    %9 = sbr.rel target = $region3
  $region8: #{conv_update_forward.9} parent=0 // loop_exit
    _

</llo_original>
